<compile_context>
chip_gen: v5e
topology: v5e:2x2
jax: 0.10.0
libtpu: 0.0.40
codegen_flags: <defaults>
</compile_context>

<pallas_src>
import functools

import jax
import jax.numpy as jnp
import numpy as np
from jax.experimental import pallas as pl
from jax.experimental.pallas import tpu as pltpu


# ------------------- fused projection + LSTM + decoder kernel -----------------
def _fused_lstm_decoder_kernel(x_ref, wih_ref, bias_ref, whh_ref, conv_ref,
                               dbias_ref, out_ref, gates_ref, *, D, T, B,
                               unroll):
    """x_ref:     (T*B, D)   bf16  time-major flattened input.
       wih_ref:   (D, 4D)    bf16  W_ih^T, gate order (i, f, o, g).
       bias_ref:  (1, 4D)    f32   b_ih + b_hh, same gate order.
       whh_ref:   (D, 4D)    bf16  W_hh^T, same gate order.
       conv_ref:  (D, D)     bf16  decoder 3x3 conv lowered to a matrix.
       dbias_ref: (1, D)     f32   decoder bias broadcast over spatial dims.
       out_ref:   (B, D)     f32   lane-dense decoder output.
       gates_ref: (T*B, 4D)  f32   VMEM scratch for projected gates."""
    # Time-parallel input projection: one big MXU matmul over all T*B rows.
    gates_ref[...] = (
        jnp.dot(x_ref[...], wih_ref[...], preferred_element_type=jnp.float32)
        + bias_ref[...])

    def step(t, carry):
        h, c = carry
        row0 = pl.multiple_of(t * B, 8)       # sublane-aligned slice start
        # Only the recurrent matmul + gate math sit on the serial path.
        gates = gates_ref[pl.ds(row0, B), :] + jnp.dot(
            h.astype(jnp.bfloat16), whh_ref[...],
            preferred_element_type=jnp.float32)
        sig = jax.nn.sigmoid(gates[:, :3 * D])      # i, f, o in one EUP pass
        g = jnp.tanh(gates[:, 3 * D:])
        i_g = sig[:, :D]
        f_g = sig[:, D:2 * D]
        o_g = sig[:, 2 * D:3 * D]
        c_new = f_g * c + i_g * g
        h_new = o_g * jnp.tanh(c_new)
        return h_new, c_new

    h0 = jnp.zeros((B, D), jnp.float32)
    c0 = jnp.zeros((B, D), jnp.float32)
    h_last, _ = jax.lax.fori_loop(0, T, step, (h0, c0), unroll=unroll)

    # Fused decoder: per-channel 3x3 "same" conv as one lane-dense MXU matmul.
    out_ref[...] = (jnp.dot(h_last.astype(jnp.bfloat16), conv_ref[...],
                            preferred_element_type=jnp.float32)
                    + dbias_ref[...])


def _fused_forward(x_flat, prepared, *, D, T, B_pad):
    unroll = True if T <= 8 else 8   # cap unroll when T grows (vreg pressure)
    kernel = functools.partial(_fused_lstm_decoder_kernel,
                               D=D, T=T, B=B_pad, unroll=unroll)
    return pl.pallas_call(
        kernel,
        out_shape=jax.ShapeDtypeStruct((B_pad, D), jnp.float32),
        in_specs=[
            pl.BlockSpec(memory_space=pltpu.MemorySpace.VMEM),  # x (T*B, D)
            pl.BlockSpec(memory_space=pltpu.MemorySpace.VMEM),  # W_ih^T
            pl.BlockSpec(memory_space=pltpu.MemorySpace.VMEM),  # bias
            pl.BlockSpec(memory_space=pltpu.MemorySpace.VMEM),  # W_hh^T
            pl.BlockSpec(memory_space=pltpu.MemorySpace.VMEM),  # conv matrix
            pl.BlockSpec(memory_space=pltpu.MemorySpace.VMEM),  # dec bias
        ],
        out_specs=pl.BlockSpec(memory_space=pltpu.MemorySpace.VMEM),
        scratch_shapes=[pltpu.VMEM((T * B_pad, 4 * D), jnp.float32)],
    )(x_flat, prepared["w_ih_t"], prepared["bias"],
      prepared["w_hh_t"], prepared["conv_mat"], prepared["dec_bias"])


# --------------- decoder (per-channel 3x3 conv) as a (D, D) matmul ------------
def _build_decoder_matmul_np(dec_w, dec_b, C, H, W):
    """Lower Conv2d(1,1,3,padding=1) per channel to a block-diagonal (D, D)
    matrix (numpy, computed once at prepare time)."""
    dec_w = np.asarray(dec_w, np.float32)
    dec_b = np.asarray(dec_b, np.float32)
    D = C * H * W
    conv = np.zeros((D, D), np.float32)
    for c in range(C):
        base = c * H * W
        for kh in range(3):
            for kw in range(3):
                w = dec_w[c, kh, kw]
                for oh in range(H):
                    ih = oh + kh - 1
                    if not (0 <= ih < H):
                        continue
                    for ow in range(W):
                        iw = ow + kw - 1
                        if 0 <= iw < W:
                            conv[base + ih * W + iw, base + oh * W + ow] += w
    bias = np.repeat(dec_b, H * W).reshape(1, D).astype(np.float32)
    return conv, bias


# ------------------- one-time parameter preparation ---------------------------
def prepare_params(params, *, channel_num, height, width):
    """Permute gates (i,f,g,o) -> (i,f,o,g), transpose weights, lower the
    decoder conv to a matrix, and cast MXU operands to bf16. Call once."""
    D = channel_num * height * width
    perm = np.concatenate([np.arange(0, 2 * D),       # i, f
                           np.arange(3 * D, 4 * D),   # o
                           np.arange(2 * D, 3 * D)])  # g
    w_ih = np.asarray(params["w_ih"], np.float32)[perm]          # (4D, D)
    w_hh = np.asarray(params["w_hh"], np.float32)[perm]          # (4D, D)
    bias = (np.asarray(params["b_ih"], np.float32)
            + np.asarray(params["b_hh"], np.float32))[perm]      # (4D,)
    conv_mat, dec_bias = _build_decoder_matmul_np(
        params["dec_w"], params["dec_b"], channel_num, height, width)
    return {
        "w_ih_t": jnp.asarray(w_ih.T, jnp.bfloat16),             # (D, 4D)
        "w_hh_t": jnp.asarray(w_hh.T, jnp.bfloat16),             # (D, 4D)
        "bias": jnp.asarray(bias.reshape(1, 4 * D), jnp.float32),
        "conv_mat": jnp.asarray(conv_mat, jnp.bfloat16),         # (D, D)
        "dec_bias": jnp.asarray(dec_bias, jnp.float32),          # (1, D)
    }


# ------------------------------ full forward ----------------------------------
@functools.partial(jax.jit, static_argnames=("channel_num", "height", "width"))
def model_temporal_lstm_forward(x, prepared, *, channel_num, height, width):
    B, T = x.shape[0], x.shape[1]
    D = channel_num * height * width
    B_pad = max(8, -(-B // 8) * 8)   # fill a full sublane group

    # (B,T,C,H,W) -> time-major flattened (T*B_pad, D), bf16 for the MXU feed.
    x_tm = jnp.transpose(x.reshape(B, T, D).astype(jnp.float32), (1, 0, 2))
    if B_pad != B:
        x_tm = jnp.pad(x_tm, ((0, 0), (0, B_pad - B), (0, 0)))
    x_flat = x_tm.reshape(T * B_pad, D).astype(jnp.bfloat16)

    out = _fused_forward(x_flat, prepared, D=D, T=T, B_pad=B_pad)  # (B_pad, D)
    return out[:B].reshape(B, channel_num, height, width)


# ------------------------------ reference -------------------------------------
def _reference_forward(x, params, *, channel_num, height, width):
    B, T = x.shape[0], x.shape[1]
    D = channel_num * height * width
    xs = x.reshape(B, T, D).astype(jnp.float32)
    h = jnp.zeros((B, D), jnp.float32)
    c = jnp.zeros((B, D), jnp.float32)
    for t in range(T):
        gates = xs[:, t] @ params["w_ih"].T + h @ params["w_hh"].T \
            + params["b_ih"] + params["b_hh"]
        i = jax.nn.sigmoid(gates[:, :D])
        f = jax.nn.sigmoid(gates[:, D:2 * D])
        g = jnp.tanh(gates[:, 2 * D:3 * D])
        o = jax.nn.sigmoid(gates[:, 3 * D:])
        c = f * c + i * g
        h = o * jnp.tanh(c)
    lstm_out = h.reshape(B, channel_num, height, width)
    xp = jnp.pad(lstm_out, ((0, 0), (0, 0), (1, 1), (1, 1)))
    outs = []
    for ci in range(channel_num):
        acc = jnp.zeros((B, height, width), jnp.float32)
        for dh in range(3):
            for dw in range(3):
                acc = acc + xp[:, ci, dh:dh + height, dw:dw + width] \
                    * params["dec_w"][ci, dh, dw]
        outs.append(acc + params["dec_b"][ci])
    return jnp.stack(outs, axis=1)


# --------------------------------- main ----------------------------------------
if __name__ == "__main__":
    B, T, C, H, W = 2, 6, 4, 8, 8
    D = C * H * W

    key = jax.random.PRNGKey(0)
    ks = jax.random.split(key, 8)
    x = jax.random.normal(ks[0], (B, T, C, H, W), jnp.float32)

    scale = 1.0 / np.sqrt(D)
    params = {
        "w_ih": jax.random.uniform(ks[1], (4 * D, D), jnp.float32, -scale, scale),
        "w_hh": jax.random.uniform(ks[2], (4 * D, D), jnp.float32, -scale, scale),
        "b_ih": jax.random.uniform(ks[3], (4 * D,), jnp.float32, -scale, scale),
        "b_hh": jax.random.uniform(ks[4], (4 * D,), jnp.float32, -scale, scale),
        "dec_w": jax.random.normal(ks[5], (C, 3, 3), jnp.float32) * (1.0 / 3.0),
        "dec_b": jax.random.normal(ks[6], (C,), jnp.float32) * 0.1,
    }

    prepared = prepare_params(params, channel_num=C, height=H, width=W)

    out = model_temporal_lstm_forward(
        x, prepared, channel_num=C, height=H, width=W
    )
    out = jax.block_until_ready(out)
    assert out.shape == (B, C, H, W), out.shape

    ref = jax.block_until_ready(
        _reference_forward(x, params, channel_num=C, height=H, width=W)
    )
    # Tolerance reflects bf16 MXU operands (f32 accumulation / gate math).
    np.testing.assert_allclose(np.asarray(out), np.asarray(ref),
                               rtol=2e-2, atol=2e-2)

    print("KERNEL_OK")
</pallas_src>

<mosaic_0001>
module attributes {stable_mosaic.version = 11 : i64} {
  func.func @_fused_lstm_decoder_kernel(%arg0: memref<48x256xbf16, #tpu.memory_space<vmem>>, %arg1: memref<256x1024xbf16, #tpu.memory_space<vmem>>, %arg2: memref<1x1024xf32, #tpu.memory_space<vmem>>, %arg3: memref<256x1024xbf16, #tpu.memory_space<vmem>>, %arg4: memref<256x256xbf16, #tpu.memory_space<vmem>>, %arg5: memref<1x256xf32, #tpu.memory_space<vmem>>, %arg6: memref<8x256xf32, #tpu.memory_space<vmem>>, %arg7: memref<48x1024xf32, #tpu.memory_space<vmem>>) attributes {dimension_semantics = [], scalar_prefetch = 0 : i64, scratch_operands = 1 : i64, tpu.core_type = #tpu.core_type<tc>} {
    %c0 = arith.constant 0 : index
    %c0_0 = arith.constant 0 : index
    %0 = vector.load %arg0[%c0, %c0_0] : memref<48x256xbf16, #tpu.memory_space<vmem>>, vector<48x256xbf16>
    %c0_1 = arith.constant 0 : index
    %c0_2 = arith.constant 0 : index
    %1 = vector.load %arg1[%c0_1, %c0_2] : memref<256x1024xbf16, #tpu.memory_space<vmem>>, vector<256x1024xbf16>
    %cst = arith.constant dense<0.000000e+00> : vector<48x1024xf32>
    %2 = tpu.matmul %0, %1, %cst {dimension_numbers = #tpu.dot_dimension_numbers<[1], [0], [0], [1], [0, 0, 1, 1], [], []>} : vector<48x256xbf16>, vector<256x1024xbf16>, vector<48x1024xf32> -> vector<48x1024xf32>
    %c0_3 = arith.constant 0 : index
    %c0_4 = arith.constant 0 : index
    %3 = vector.load %arg2[%c0_3, %c0_4] : memref<1x1024xf32, #tpu.memory_space<vmem>>, vector<1x1024xf32>
    %4 = vector.broadcast %3 : vector<1x1024xf32> to vector<48x1024xf32>
    %5 = arith.addf %2, %4 : vector<48x1024xf32>
    %c0_5 = arith.constant 0 : index
    %c0_6 = arith.constant 0 : index
    %6 = vector.load %arg7[%c0_5, %c0_6] : memref<48x1024xf32, #tpu.memory_space<vmem>>, vector<48x1024xf32>
    tpu.vector_store %arg7[%c0_5, %c0_6], %5 {strides = array<i32>} : memref<48x1024xf32, #tpu.memory_space<vmem>>, vector<48x1024xf32>,
    %cst_7 = arith.constant 0.000000e+00 : f32
    %7 = vector.broadcast %cst_7 : f32 to vector<8x256xf32>
    %cst_8 = arith.constant 0.000000e+00 : f32
    %8 = vector.broadcast %cst_8 : f32 to vector<8x256xf32>
    %c0_i32 = arith.constant 0 : i32
    %c8_i32 = arith.constant 8 : i32
    %9 = arith.muli %c0_i32, %c8_i32 : i32
    %10 = tpu.assume_multiple %9, 8 : i32
    %11 = arith.index_cast %10 : i32 to index
    %c0_9 = arith.constant 0 : index
    %12 = vector.load %arg7[%11, %c0_9] : memref<48x1024xf32, #tpu.memory_space<vmem>>, vector<8x1024xf32>
    %13 = arith.truncf %7 : vector<8x256xf32> to vector<8x256xbf16>
    %c0_10 = arith.constant 0 : index
    %c0_11 = arith.constant 0 : index
    %14 = vector.load %arg3[%c0_10, %c0_11] : memref<256x1024xbf16, #tpu.memory_space<vmem>>, vector<256x1024xbf16>
    %cst_12 = arith.constant dense<0.000000e+00> : vector<8x1024xf32>
    %15 = tpu.matmul %13, %14, %cst_12 {dimension_numbers = #tpu.dot_dimension_numbers<[1], [0], [0], [1], [0, 0, 1, 1], [], []>} : vector<8x256xbf16>, vector<256x1024xbf16>, vector<8x1024xf32> -> vector<8x1024xf32>
    %16 = arith.addf %12, %15 : vector<8x1024xf32>
    %17 = vector.extract_strided_slice %16 {offsets = [0, 0], sizes = [8, 768], strides = [1, 1]} : vector<8x1024xf32> to vector<8x768xf32>
    %18 = arith.negf %17 : vector<8x768xf32>
    %19 = math.exp %18 : vector<8x768xf32>
    %cst_13 = arith.constant 1.000000e+00 : f32
    %20 = vector.broadcast %cst_13 : f32 to vector<8x768xf32>
    %21 = arith.addf %20, %19 : vector<8x768xf32>
    %22 = arith.divf %20, %21 : vector<8x768xf32>
    %23 = vector.extract_strided_slice %16 {offsets = [0, 768], sizes = [8, 256], strides = [1, 1]} : vector<8x1024xf32> to vector<8x256xf32>
    %24 = math.tanh %23 : vector<8x256xf32>
    %25 = vector.extract_strided_slice %22 {offsets = [0, 0], sizes = [8, 256], strides = [1, 1]} : vector<8x768xf32> to vector<8x256xf32>
    %26 = vector.extract_strided_slice %22 {offsets = [0, 256], sizes = [8, 256], strides = [1, 1]} : vector<8x768xf32> to vector<8x256xf32>
    %27 = vector.extract_strided_slice %22 {offsets = [0, 512], sizes = [8, 256], strides = [1, 1]} : vector<8x768xf32> to vector<8x256xf32>
    %28 = arith.mulf %26, %8 : vector<8x256xf32>
    %29 = arith.mulf %25, %24 : vector<8x256xf32>
    %30 = arith.addf %28, %29 : vector<8x256xf32>
    %31 = math.tanh %30 : vector<8x256xf32>
    %32 = arith.mulf %27, %31 : vector<8x256xf32>
    %c1_i32 = arith.constant 1 : i32
    %c8_i32_14 = arith.constant 8 : i32
    %33 = arith.muli %c1_i32, %c8_i32_14 : i32
    %34 = tpu.assume_multiple %33, 8 : i32
    %35 = arith.index_cast %34 : i32 to index
    %c0_15 = arith.constant 0 : index
    %36 = vector.load %arg7[%35, %c0_15] : memref<48x1024xf32, #tpu.memory_space<vmem>>, vector<8x1024xf32>
    %37 = arith.truncf %32 : vector<8x256xf32> to vector<8x256xbf16>
    %c0_16 = arith.constant 0 : index
    %c0_17 = arith.constant 0 : index
    %38 = vector.load %arg3[%c0_16, %c0_17] : memref<256x1024xbf16, #tpu.memory_space<vmem>>, vector<256x1024xbf16>
    %cst_18 = arith.constant dense<0.000000e+00> : vector<8x1024xf32>
    %39 = tpu.matmul %37, %38, %cst_18 {dimension_numbers = #tpu.dot_dimension_numbers<[1], [0], [0], [1], [0, 0, 1, 1], [], []>} : vector<8x256xbf16>, vector<256x1024xbf16>, vector<8x1024xf32> -> vector<8x1024xf32>
    %40 = arith.addf %36, %39 : vector<8x1024xf32>
    %41 = vector.extract_strided_slice %40 {offsets = [0, 0], sizes = [8, 768], strides = [1, 1]} : vector<8x1024xf32> to vector<8x768xf32>
    %42 = arith.negf %41 : vector<8x768xf32>
    %43 = math.exp %42 : vector<8x768xf32>
    %cst_19 = arith.constant 1.000000e+00 : f32
    %44 = vector.broadcast %cst_19 : f32 to vector<8x768xf32>
    %45 = arith.addf %44, %43 : vector<8x768xf32>
    %46 = arith.divf %44, %45 : vector<8x768xf32>
    %47 = vector.extract_strided_slice %40 {offsets = [0, 768], sizes = [8, 256], strides = [1, 1]} : vector<8x1024xf32> to vector<8x256xf32>
    %48 = math.tanh %47 : vector<8x256xf32>
    %49 = vector.extract_strided_slice %46 {offsets = [0, 0], sizes = [8, 256], strides = [1, 1]} : vector<8x768xf32> to vector<8x256xf32>
    %50 = vector.extract_strided_slice %46 {offsets = [0, 256], sizes = [8, 256], strides = [1, 1]} : vector<8x768xf32> to vector<8x256xf32>
    %51 = vector.extract_strided_slice %46 {offsets = [0, 512], sizes = [8, 256], strides = [1, 1]} : vector<8x768xf32> to vector<8x256xf32>
    %52 = arith.mulf %50, %30 : vector<8x256xf32>
    %53 = arith.mulf %49, %48 : vector<8x256xf32>
    %54 = arith.addf %52, %53 : vector<8x256xf32>
    %55 = math.tanh %54 : vector<8x256xf32>
    %56 = arith.mulf %51, %55 : vector<8x256xf32>
    %c2_i32 = arith.constant 2 : i32
    %c8_i32_20 = arith.constant 8 : i32
    %57 = arith.muli %c2_i32, %c8_i32_20 : i32
    %58 = tpu.assume_multiple %57, 8 : i32
    %59 = arith.index_cast %58 : i32 to index
    %c0_21 = arith.constant 0 : index
    %60 = vector.load %arg7[%59, %c0_21] : memref<48x1024xf32, #tpu.memory_space<vmem>>, vector<8x1024xf32>
    %61 = arith.truncf %56 : vector<8x256xf32> to vector<8x256xbf16>
    %c0_22 = arith.constant 0 : index
    %c0_23 = arith.constant 0 : index
    %62 = vector.load %arg3[%c0_22, %c0_23] : memref<256x1024xbf16, #tpu.memory_space<vmem>>, vector<256x1024xbf16>
    %cst_24 = arith.constant dense<0.000000e+00> : vector<8x1024xf32>
    %63 = tpu.matmul %61, %62, %cst_24 {dimension_numbers = #tpu.dot_dimension_numbers<[1], [0], [0], [1], [0, 0, 1, 1], [], []>} : vector<8x256xbf16>, vector<256x1024xbf16>, vector<8x1024xf32> -> vector<8x1024xf32>
    %64 = arith.addf %60, %63 : vector<8x1024xf32>
    %65 = vector.extract_strided_slice %64 {offsets = [0, 0], sizes = [8, 768], strides = [1, 1]} : vector<8x1024xf32> to vector<8x768xf32>
    %66 = arith.negf %65 : vector<8x768xf32>
    %67 = math.exp %66 : vector<8x768xf32>
    %cst_25 = arith.constant 1.000000e+00 : f32
    %68 = vector.broadcast %cst_25 : f32 to vector<8x768xf32>
    %69 = arith.addf %68, %67 : vector<8x768xf32>
    %70 = arith.divf %68, %69 : vector<8x768xf32>
    %71 = vector.extract_strided_slice %64 {offsets = [0, 768], sizes = [8, 256], strides = [1, 1]} : vector<8x1024xf32> to vector<8x256xf32>
    %72 = math.tanh %71 : vector<8x256xf32>
    %73 = vector.extract_strided_slice %70 {offsets = [0, 0], sizes = [8, 256], strides = [1, 1]} : vector<8x768xf32> to vector<8x256xf32>
    %74 = vector.extract_strided_slice %70 {offsets = [0, 256], sizes = [8, 256], strides = [1, 1]} : vector<8x768xf32> to vector<8x256xf32>
    %75 = vector.extract_strided_slice %70 {offsets = [0, 512], sizes = [8, 256], strides = [1, 1]} : vector<8x768xf32> to vector<8x256xf32>
    %76 = arith.mulf %74, %54 : vector<8x256xf32>
    %77 = arith.mulf %73, %72 : vector<8x256xf32>
    %78 = arith.addf %76, %77 : vector<8x256xf32>
    %79 = math.tanh %78 : vector<8x256xf32>
    %80 = arith.mulf %75, %79 : vector<8x256xf32>
    %c3_i32 = arith.constant 3 : i32
    %c8_i32_26 = arith.constant 8 : i32
    %81 = arith.muli %c3_i32, %c8_i32_26 : i32
    %82 = tpu.assume_multiple %81, 8 : i32
    %83 = arith.index_cast %82 : i32 to index
    %c0_27 = arith.constant 0 : index
    %84 = vector.load %arg7[%83, %c0_27] : memref<48x1024xf32, #tpu.memory_space<vmem>>, vector<8x1024xf32>
    %85 = arith.truncf %80 : vector<8x256xf32> to vector<8x256xbf16>
    %c0_28 = arith.constant 0 : index
    %c0_29 = arith.constant 0 : index
    %86 = vector.load %arg3[%c0_28, %c0_29] : memref<256x1024xbf16, #tpu.memory_space<vmem>>, vector<256x1024xbf16>
    %cst_30 = arith.constant dense<0.000000e+00> : vector<8x1024xf32>
    %87 = tpu.matmul %85, %86, %cst_30 {dimension_numbers = #tpu.dot_dimension_numbers<[1], [0], [0], [1], [0, 0, 1, 1], [], []>} : vector<8x256xbf16>, vector<256x1024xbf16>, vector<8x1024xf32> -> vector<8x1024xf32>
    %88 = arith.addf %84, %87 : vector<8x1024xf32>
    %89 = vector.extract_strided_slice %88 {offsets = [0, 0], sizes = [8, 768], strides = [1, 1]} : vector<8x1024xf32> to vector<8x768xf32>
    %90 = arith.negf %89 : vector<8x768xf32>
    %91 = math.exp %90 : vector<8x768xf32>
    %cst_31 = arith.constant 1.000000e+00 : f32
    %92 = vector.broadcast %cst_31 : f32 to vector<8x768xf32>
    %93 = arith.addf %92, %91 : vector<8x768xf32>
    %94 = arith.divf %92, %93 : vector<8x768xf32>
    %95 = vector.extract_strided_slice %88 {offsets = [0, 768], sizes = [8, 256], strides = [1, 1]} : vector<8x1024xf32> to vector<8x256xf32>
    %96 = math.tanh %95 : vector<8x256xf32>
    %97 = vector.extract_strided_slice %94 {offsets = [0, 0], sizes = [8, 256], strides = [1, 1]} : vector<8x768xf32> to vector<8x256xf32>
    %98 = vector.extract_strided_slice %94 {offsets = [0, 256], sizes = [8, 256], strides = [1, 1]} : vector<8x768xf32> to vector<8x256xf32>
    %99 = vector.extract_strided_slice %94 {offsets = [0, 512], sizes = [8, 256], strides = [1, 1]} : vector<8x768xf32> to vector<8x256xf32>
    %100 = arith.mulf %98, %78 : vector<8x256xf32>
    %101 = arith.mulf %97, %96 : vector<8x256xf32>
    %102 = arith.addf %100, %101 : vector<8x256xf32>
    %103 = math.tanh %102 : vector<8x256xf32>
    %104 = arith.mulf %99, %103 : vector<8x256xf32>
    %c4_i32 = arith.constant 4 : i32
    %c8_i32_32 = arith.constant 8 : i32
    %105 = arith.muli %c4_i32, %c8_i32_32 : i32
    %106 = tpu.assume_multiple %105, 8 : i32
    %107 = arith.index_cast %106 : i32 to index
    %c0_33 = arith.constant 0 : index
    %108 = vector.load %arg7[%107, %c0_33] : memref<48x1024xf32, #tpu.memory_space<vmem>>, vector<8x1024xf32>
    %109 = arith.truncf %104 : vector<8x256xf32> to vector<8x256xbf16>
    %c0_34 = arith.constant 0 : index
    %c0_35 = arith.constant 0 : index
    %110 = vector.load %arg3[%c0_34, %c0_35] : memref<256x1024xbf16, #tpu.memory_space<vmem>>, vector<256x1024xbf16>
    %cst_36 = arith.constant dense<0.000000e+00> : vector<8x1024xf32>
    %111 = tpu.matmul %109, %110, %cst_36 {dimension_numbers = #tpu.dot_dimension_numbers<[1], [0], [0], [1], [0, 0, 1, 1], [], []>} : vector<8x256xbf16>, vector<256x1024xbf16>, vector<8x1024xf32> -> vector<8x1024xf32>
    %112 = arith.addf %108, %111 : vector<8x1024xf32>
    %113 = vector.extract_strided_slice %112 {offsets = [0, 0], sizes = [8, 768], strides = [1, 1]} : vector<8x1024xf32> to vector<8x768xf32>
    %114 = arith.negf %113 : vector<8x768xf32>
    %115 = math.exp %114 : vector<8x768xf32>
    %cst_37 = arith.constant 1.000000e+00 : f32
    %116 = vector.broadcast %cst_37 : f32 to vector<8x768xf32>
    %117 = arith.addf %116, %115 : vector<8x768xf32>
    %118 = arith.divf %116, %117 : vector<8x768xf32>
    %119 = vector.extract_strided_slice %112 {offsets = [0, 768], sizes = [8, 256], strides = [1, 1]} : vector<8x1024xf32> to vector<8x256xf32>
    %120 = math.tanh %119 : vector<8x256xf32>
    %121 = vector.extract_strided_slice %118 {offsets = [0, 0], sizes = [8, 256], strides = [1, 1]} : vector<8x768xf32> to vector<8x256xf32>
    %122 = vector.extract_strided_slice %118 {offsets = [0, 256], sizes = [8, 256], strides = [1, 1]} : vector<8x768xf32> to vector<8x256xf32>
    %123 = vector.extract_strided_slice %118 {offsets = [0, 512], sizes = [8, 256], strides = [1, 1]} : vector<8x768xf32> to vector<8x256xf32>
    %124 = arith.mulf %122, %102 : vector<8x256xf32>
    %125 = arith.mulf %121, %120 : vector<8x256xf32>
    %126 = arith.addf %124, %125 : vector<8x256xf32>
    %127 = math.tanh %126 : vector<8x256xf32>
    %128 = arith.mulf %123, %127 : vector<8x256xf32>
    %c5_i32 = arith.constant 5 : i32
    %c8_i32_38 = arith.constant 8 : i32
    %129 = arith.muli %c5_i32, %c8_i32_38 : i32
    %130 = tpu.assume_multiple %129, 8 : i32
    %131 = arith.index_cast %130 : i32 to index
    %c0_39 = arith.constant 0 : index
    %132 = vector.load %arg7[%131, %c0_39] : memref<48x1024xf32, #tpu.memory_space<vmem>>, vector<8x1024xf32>
    %133 = arith.truncf %128 : vector<8x256xf32> to vector<8x256xbf16>
    %c0_40 = arith.constant 0 : index
    %c0_41 = arith.constant 0 : index
    %134 = vector.load %arg3[%c0_40, %c0_41] : memref<256x1024xbf16, #tpu.memory_space<vmem>>, vector<256x1024xbf16>
    %cst_42 = arith.constant dense<0.000000e+00> : vector<8x1024xf32>
    %135 = tpu.matmul %133, %134, %cst_42 {dimension_numbers = #tpu.dot_dimension_numbers<[1], [0], [0], [1], [0, 0, 1, 1], [], []>} : vector<8x256xbf16>, vector<256x1024xbf16>, vector<8x1024xf32> -> vector<8x1024xf32>
    %136 = arith.addf %132, %135 : vector<8x1024xf32>
    %137 = vector.extract_strided_slice %136 {offsets = [0, 0], sizes = [8, 768], strides = [1, 1]} : vector<8x1024xf32> to vector<8x768xf32>
    %138 = arith.negf %137 : vector<8x768xf32>
    %139 = math.exp %138 : vector<8x768xf32>
    %cst_43 = arith.constant 1.000000e+00 : f32
    %140 = vector.broadcast %cst_43 : f32 to vector<8x768xf32>
    %141 = arith.addf %140, %139 : vector<8x768xf32>
    %142 = arith.divf %140, %141 : vector<8x768xf32>
    %143 = vector.extract_strided_slice %136 {offsets = [0, 768], sizes = [8, 256], strides = [1, 1]} : vector<8x1024xf32> to vector<8x256xf32>
    %144 = math.tanh %143 : vector<8x256xf32>
    %145 = vector.extract_strided_slice %142 {offsets = [0, 0], sizes = [8, 256], strides = [1, 1]} : vector<8x768xf32> to vector<8x256xf32>
    %146 = vector.extract_strided_slice %142 {offsets = [0, 256], sizes = [8, 256], strides = [1, 1]} : vector<8x768xf32> to vector<8x256xf32>
    %147 = vector.extract_strided_slice %142 {offsets = [0, 512], sizes = [8, 256], strides = [1, 1]} : vector<8x768xf32> to vector<8x256xf32>
    %148 = arith.mulf %146, %126 : vector<8x256xf32>
    %149 = arith.mulf %145, %144 : vector<8x256xf32>
    %150 = arith.addf %148, %149 : vector<8x256xf32>
    %151 = math.tanh %150 : vector<8x256xf32>
    %152 = arith.mulf %147, %151 : vector<8x256xf32>
    %c6_i32 = arith.constant 6 : i32
    %153 = arith.truncf %152 : vector<8x256xf32> to vector<8x256xbf16>
    %c0_44 = arith.constant 0 : index
    %c0_45 = arith.constant 0 : index
    %154 = vector.load %arg4[%c0_44, %c0_45] : memref<256x256xbf16, #tpu.memory_space<vmem>>, vector<256x256xbf16>
    %cst_46 = arith.constant dense<0.000000e+00> : vector<8x256xf32>
    %155 = tpu.matmul %153, %154, %cst_46 {dimension_numbers = #tpu.dot_dimension_numbers<[1], [0], [0], [1], [0, 0, 1, 1], [], []>} : vector<8x256xbf16>, vector<256x256xbf16>, vector<8x256xf32> -> vector<8x256xf32>
    %c0_47 = arith.constant 0 : index
    %c0_48 = arith.constant 0 : index
    %156 = vector.load %arg5[%c0_47, %c0_48] : memref<1x256xf32, #tpu.memory_space<vmem>>, vector<1x256xf32>
    %157 = vector.broadcast %156 : vector<1x256xf32> to vector<8x256xf32>
    %158 = arith.addf %155, %157 : vector<8x256xf32>
    %c0_49 = arith.constant 0 : index
    %c0_50 = arith.constant 0 : index
    %159 = vector.load %arg6[%c0_49, %c0_50] : memref<8x256xf32, #tpu.memory_space<vmem>>, vector<8x256xf32>
    tpu.vector_store %arg6[%c0_49, %c0_50], %158 {strides = array<i32>} : memref<8x256xf32, #tpu.memory_space<vmem>>, vector<8x256xf32>,
    return
  }
}

</mosaic_0001>

<llo_original>
// kernel: model_temporal_lstm_forward.1
$region0: #{model_temporal_lstm_forward.1}
  #allocation0 [shape = 'u32[]', space=smem, size = 0x4, offset = 0x4, fixed_abs, tag = 'smem constant byte address 0x4 - core index']
  #allocation1 [shape = 'u32[72,128]{1,0:T(1,128)}', space=vmem, size = 0x9000, scoped, tag = 'internal scratch']
  #allocation2 [shape = 'f32[48,1024]{1,0:T(8,128)}', space=vmem, size = 0x30000, scoped, tag = 'scratch operand']
  %s0 = inlined_call_operand.vmem [shape: bf16[48,256], index: 0, kind: input, shape index: {}]
  %s1 = inlined_call_operand.hbm [shape: bf16[256,1024], index: 1, kind: input, shape index: {}]
  %s2 = inlined_call_operand.vmem [shape: f32[1,1024], index: 2, kind: input, shape index: {}]
  %s3 = inlined_call_operand.hbm [shape: bf16[256,1024], index: 3, kind: input, shape index: {}]
  %s4 = inlined_call_operand.vmem [shape: bf16[256,256], index: 4, kind: input, shape index: {}]
  %s5 = inlined_call_operand.vmem [shape: f32[1,256], index: 5, kind: input, shape index: {}]
  %s6 = inlined_call_operand.vmem [shape: f32[8,256], index: 6, kind: output, shape index: {}]
  %s7 = sld [smem:[#allocation0]]
  $region42: #{model_temporal_lstm_forward.1} parent=0
    _
  %s9 = ssub.s32 1, %s7
  %s10 = scalar_select 0, %s9, %s7
  $region1: #{model_temporal_lstm_forward.1} parent=0
    #allocation3 [shape = 'u8[524288]{0}', space=vmem, size = 0x80000, scoped, tag = 'input window, operand 1, single buffered']
    #allocation4 [shape = 's32[1]{0}', space=sflag, size = 0x4, scoped, tag = 'scoped memory for model_temporal_lstm_forward.1']
    #allocation5 [shape = 'u8[524288]{0}', space=vmem, size = 0x80000, scoped, tag = 'input window, operand 3, single buffered']
    #allocation6 [shape = 's32[1]{0}', space=sflag, size = 0x4, scoped, tag = 'scoped memory for model_temporal_lstm_forward.1']
    %11 = vsyncpa [#allocation4], 0
    %12 = vsyncpa [#allocation6], 0
    // Predicated region
    $region2: #{model_temporal_lstm_forward.1} parent=1 // pred_check
      _
    $region3: #{model_temporal_lstm_forward.1} parent=1 // pred_check_branch
      %14 = sbr.rel (0) target = $region5
    $region4: #{model_temporal_lstm_forward.1} parent=1 // pred_region
      _
    $region5: #{model_temporal_lstm_forward.1} parent=1 // pred_fallthru
      _
    // Predicated region
    $region6: #{model_temporal_lstm_forward.1} parent=1 // pred_check
      _
    $region7: #{model_temporal_lstm_forward.1} parent=1 // pred_check_branch
      %16 = sbr.rel (0) target = $region9
    $region8: #{model_temporal_lstm_forward.1} parent=1 // pred_region
      %18 = vsyncadd [#allocation4], 0
      %s19 = sshll.u32 %s1, 4
      %s20 = int_to_ptr.hbm [resolvable:$true] %s19
      %s21 = sshll.u32 [#allocation3], 4
      %s22 = int_to_ptr.vmem [resolvable:$true] %s21
      %27 = dma.hbm_to_vmem [thread:$0]  %s20, 16384, %s22, [#allocation4], 512, 512, 32
    $region9: #{model_temporal_lstm_forward.1} parent=1 // pred_fallthru
      _
    // Predicated region
    $region10: #{model_temporal_lstm_forward.1} parent=1 // pred_check
      _
    $region11: #{model_temporal_lstm_forward.1} parent=1 // pred_check_branch
      %29 = sbr.rel (0) target = $region13
    $region12: #{model_temporal_lstm_forward.1} parent=1 // pred_region
      _
    $region13: #{model_temporal_lstm_forward.1} parent=1 // pred_fallthru
      _
    // Predicated region
    $region14: #{model_temporal_lstm_forward.1} parent=1 // pred_check
      _
    $region15: #{model_temporal_lstm_forward.1} parent=1 // pred_check_branch
      %31 = sbr.rel (0) target = $region17
    $region16: #{model_temporal_lstm_forward.1} parent=1 // pred_region
      %33 = vsyncadd [#allocation6], 0
      %s34 = sshll.u32 %s3, 4
      %s35 = int_to_ptr.hbm [resolvable:$true] %s34
      %s36 = sshll.u32 [#allocation5], 4
      %s37 = int_to_ptr.vmem [resolvable:$true] %s36
      %42 = dma.hbm_to_vmem [thread:$0]  %s35, 16384, %s37, [#allocation6], 512, 512, 32
    $region17: #{model_temporal_lstm_forward.1} parent=1 // pred_fallthru
      _
    // Predicated region
    $region18: #{model_temporal_lstm_forward.1} parent=1 // pred_check
      _
    $region19: #{model_temporal_lstm_forward.1} parent=1 // pred_check_branch
      %44 = sbr.rel (0) target = $region21
    $region20: #{model_temporal_lstm_forward.1} parent=1 // pred_region
      _
    $region21: #{model_temporal_lstm_forward.1} parent=1 // pred_fallthru
      _
    // Predicated region
    $region22: #{model_temporal_lstm_forward.1} parent=1 // pred_check
      _
    $region23: #{model_temporal_lstm_forward.1} parent=1 // pred_check_branch
      %46 = sbr.rel (0) target = $region25
    $region24: #{model_temporal_lstm_forward.1} parent=1 // pred_region
      _
    $region25: #{model_temporal_lstm_forward.1} parent=1 // pred_fallthru
      _
    // Predicated region
    $region26: #{model_temporal_lstm_forward.1} parent=1 // pred_check
      _
    $region27: #{model_temporal_lstm_forward.1} parent=1 // pred_check_branch
      %48 = sbr.rel (0) target = $region29
    $region28: #{model_temporal_lstm_forward.1} parent=1 // pred_region
      %50 = dma.done [#allocation4], 16384
    $region29: #{model_temporal_lstm_forward.1} parent=1 // pred_fallthru
      _
    // Predicated region
    $region30: #{model_temporal_lstm_forward.1} parent=1 // pred_check
      _
    $region31: #{model_temporal_lstm_forward.1} parent=1 // pred_check_branch
      %52 = sbr.rel (0) target = $region33
    $region32: #{model_temporal_lstm_forward.1} parent=1 // pred_region
      %54 = dma.done [#allocation6], 16384
    $region33: #{model_temporal_lstm_forward.1} parent=1 // pred_fallthru
      _
    %v56 = vld [vmem:[%s0] sm:$0xff]
    %v57 = vld [vmem:[%s0 + $0x8] sm:$0xff]
    %v58 = vld [vmem:[%s0 + $0x10] sm:$0xff]
    %v59 = vld [vmem:[%s0 + $0x18] sm:$0xff]
    %v60 = vld [vmem:[%s0 + $0x20] sm:$0xff]
    %v61 = vld [vmem:[%s0 + $0x28] sm:$0xff]
    %v62 = vld [vmem:[#allocation3] sm:$0xff]
    %v63 = vld [vmem:[#allocation3 + $0x8] sm:$0xff]
    %v64 = vld [vmem:[#allocation3 + $0x10] sm:$0xff]
    %v65 = vld [vmem:[#allocation3 + $0x18] sm:$0xff]
    %v66 = vld [vmem:[#allocation3 + $0x20] sm:$0xff]
    %v67 = vld [vmem:[#allocation3 + $0x28] sm:$0xff]
    %v68 = vld [vmem:[#allocation3 + $0x30] sm:$0xff]
    %v69 = vld [vmem:[#allocation3 + $0x38] sm:$0xff]
    %v70 = vld [vmem:[#allocation3 + $0x40] sm:$0xff]
    %v71 = vld [vmem:[#allocation3 + $0x48] sm:$0xff]
    %v72 = vld [vmem:[#allocation3 + $0x50] sm:$0xff]
    %v73 = vld [vmem:[#allocation3 + $0x58] sm:$0xff]
    %v74 = vld [vmem:[#allocation3 + $0x60] sm:$0xff]
    %v75 = vld [vmem:[#allocation3 + $0x68] sm:$0xff]
    %v76 = vld [vmem:[#allocation3 + $0x70] sm:$0xff]
    %v77 = vld [vmem:[#allocation3 + $0x78] sm:$0xff]
    %v78 = vld [vmem:[#allocation3 + $0x80] sm:$0xff]
    %v79 = vld [vmem:[#allocation3 + $0x88] sm:$0xff]
    %v80 = vld [vmem:[#allocation3 + $0x90] sm:$0xff]
    %v81 = vld [vmem:[#allocation3 + $0x98] sm:$0xff]
    %v82 = vld [vmem:[#allocation3 + $0xa0] sm:$0xff]
    %v83 = vld [vmem:[#allocation3 + $0xa8] sm:$0xff]
    %v84 = vld [vmem:[#allocation3 + $0xb0] sm:$0xff]
    %v85 = vld [vmem:[#allocation3 + $0xb8] sm:$0xff]
    %v86 = vld [vmem:[#allocation3 + $0xc0] sm:$0xff]
    %v87 = vld [vmem:[#allocation3 + $0xc8] sm:$0xff]
    %v88 = vld [vmem:[#allocation3 + $0xd0] sm:$0xff]
    %v89 = vld [vmem:[#allocation3 + $0xd8] sm:$0xff]
    %v90 = vld [vmem:[#allocation3 + $0xe0] sm:$0xff]
    %v91 = vld [vmem:[#allocation3 + $0xe8] sm:$0xff]
    %v92 = vld [vmem:[#allocation3 + $0xf0] sm:$0xff]
    %v93 = vld [vmem:[#allocation3 + $0xf8] sm:$0xff]
    %v94 = vld [vmem:[#allocation3 + $0x100] sm:$0xff]
    %v95 = vld [vmem:[#allocation3 + $0x108] sm:$0xff]
    %v96 = vld [vmem:[#allocation3 + $0x110] sm:$0xff]
    %v97 = vld [vmem:[#allocation3 + $0x118] sm:$0xff]
    %v98 = vld [vmem:[#allocation3 + $0x120] sm:$0xff]
    %v99 = vld [vmem:[#allocation3 + $0x128] sm:$0xff]
    %v100 = vld [vmem:[#allocation3 + $0x130] sm:$0xff]
    %v101 = vld [vmem:[#allocation3 + $0x138] sm:$0xff]
    %v102 = vld [vmem:[#allocation3 + $0x140] sm:$0xff]
    %v103 = vld [vmem:[#allocation3 + $0x148] sm:$0xff]
    %v104 = vld [vmem:[#allocation3 + $0x150] sm:$0xff]
    %v105 = vld [vmem:[#allocation3 + $0x158] sm:$0xff]
    %v106 = vld [vmem:[#allocation3 + $0x160] sm:$0xff]
    %v107 = vld [vmem:[#allocation3 + $0x168] sm:$0xff]
    %v108 = vld [vmem:[#allocation3 + $0x170] sm:$0xff]
    %v109 = vld [vmem:[#allocation3 + $0x178] sm:$0xff]
    %v110 = vld [vmem:[#allocation3 + $0x180] sm:$0xff]
    %v111 = vld [vmem:[#allocation3 + $0x188] sm:$0xff]
    %v112 = vld [vmem:[#allocation3 + $0x190] sm:$0xff]
    %v113 = vld [vmem:[#allocation3 + $0x198] sm:$0xff]
    %v114 = vld [vmem:[#allocation3 + $0x1a0] sm:$0xff]
    %v115 = vld [vmem:[#allocation3 + $0x1a8] sm:$0xff]
    %v116 = vld [vmem:[#allocation3 + $0x1b0] sm:$0xff]
    %v117 = vld [vmem:[#allocation3 + $0x1b8] sm:$0xff]
    %v118 = vld [vmem:[#allocation3 + $0x1c0] sm:$0xff]
    %v119 = vld [vmem:[#allocation3 + $0x1c8] sm:$0xff]
    %v120 = vld [vmem:[#allocation3 + $0x1d0] sm:$0xff]
    %v121 = vld [vmem:[#allocation3 + $0x1d8] sm:$0xff]
    %v122 = vld [vmem:[#allocation3 + $0x1e0] sm:$0xff]
    %v123 = vld [vmem:[#allocation3 + $0x1e8] sm:$0xff]
    %v124 = vld [vmem:[#allocation3 + $0x1f0] sm:$0xff]
    %v125 = vld [vmem:[#allocation3 + $0x1f8] sm:$0xff]
    %v126 = vld [vmem:[#allocation3 + $0x200] sm:$0xff]
    %v127 = vld [vmem:[#allocation3 + $0x208] sm:$0xff]
    %v128 = vld [vmem:[#allocation3 + $0x210] sm:$0xff]
    %v129 = vld [vmem:[#allocation3 + $0x218] sm:$0xff]
    %v130 = vld [vmem:[#allocation3 + $0x220] sm:$0xff]
    %v131 = vld [vmem:[#allocation3 + $0x228] sm:$0xff]
    %v132 = vld [vmem:[#allocation3 + $0x230] sm:$0xff]
    %v133 = vld [vmem:[#allocation3 + $0x238] sm:$0xff]
    %v134 = vld [vmem:[#allocation3 + $0x240] sm:$0xff]
    %v135 = vld [vmem:[#allocation3 + $0x248] sm:$0xff]
    %v136 = vld [vmem:[#allocation3 + $0x250] sm:$0xff]
    %v137 = vld [vmem:[#allocation3 + $0x258] sm:$0xff]
    %v138 = vld [vmem:[#allocation3 + $0x260] sm:$0xff]
    %v139 = vld [vmem:[#allocation3 + $0x268] sm:$0xff]
    %v140 = vld [vmem:[#allocation3 + $0x270] sm:$0xff]
    %v141 = vld [vmem:[#allocation3 + $0x278] sm:$0xff]
    %v142 = vld [vmem:[#allocation3 + $0x280] sm:$0xff]
    %v143 = vld [vmem:[#allocation3 + $0x288] sm:$0xff]
    %v144 = vld [vmem:[#allocation3 + $0x290] sm:$0xff]
    %v145 = vld [vmem:[#allocation3 + $0x298] sm:$0xff]
    %v146 = vld [vmem:[#allocation3 + $0x2a0] sm:$0xff]
    %v147 = vld [vmem:[#allocation3 + $0x2a8] sm:$0xff]
    %v148 = vld [vmem:[#allocation3 + $0x2b0] sm:$0xff]
    %v149 = vld [vmem:[#allocation3 + $0x2b8] sm:$0xff]
    %v150 = vld [vmem:[#allocation3 + $0x2c0] sm:$0xff]
    %v151 = vld [vmem:[#allocation3 + $0x2c8] sm:$0xff]
    %v152 = vld [vmem:[#allocation3 + $0x2d0] sm:$0xff]
    %v153 = vld [vmem:[#allocation3 + $0x2d8] sm:$0xff]
    %v154 = vld [vmem:[#allocation3 + $0x2e0] sm:$0xff]
    %v155 = vld [vmem:[#allocation3 + $0x2e8] sm:$0xff]
    %v156 = vld [vmem:[#allocation3 + $0x2f0] sm:$0xff]
    %v157 = vld [vmem:[#allocation3 + $0x2f8] sm:$0xff]
    %v158 = vld [vmem:[#allocation3 + $0x300] sm:$0xff]
    %v159 = vld [vmem:[#allocation3 + $0x308] sm:$0xff]
    %v160 = vld [vmem:[#allocation3 + $0x310] sm:$0xff]
    %v161 = vld [vmem:[#allocation3 + $0x318] sm:$0xff]
    %v162 = vld [vmem:[#allocation3 + $0x320] sm:$0xff]
    %v163 = vld [vmem:[#allocation3 + $0x328] sm:$0xff]
    %v164 = vld [vmem:[#allocation3 + $0x330] sm:$0xff]
    %v165 = vld [vmem:[#allocation3 + $0x338] sm:$0xff]
    %v166 = vld [vmem:[#allocation3 + $0x340] sm:$0xff]
    %v167 = vld [vmem:[#allocation3 + $0x348] sm:$0xff]
    %v168 = vld [vmem:[#allocation3 + $0x350] sm:$0xff]
    %v169 = vld [vmem:[#allocation3 + $0x358] sm:$0xff]
    %v170 = vld [vmem:[#allocation3 + $0x360] sm:$0xff]
    %v171 = vld [vmem:[#allocation3 + $0x368] sm:$0xff]
    %v172 = vld [vmem:[#allocation3 + $0x370] sm:$0xff]
    %v173 = vld [vmem:[#allocation3 + $0x378] sm:$0xff]
    %v174 = vld [vmem:[#allocation3 + $0x380] sm:$0xff]
    %v175 = vld [vmem:[#allocation3 + $0x388] sm:$0xff]
    %v176 = vld [vmem:[#allocation3 + $0x390] sm:$0xff]
    %v177 = vld [vmem:[#allocation3 + $0x398] sm:$0xff]
    %v178 = vld [vmem:[#allocation3 + $0x3a0] sm:$0xff]
    %v179 = vld [vmem:[#allocation3 + $0x3a8] sm:$0xff]
    %v180 = vld [vmem:[#allocation3 + $0x3b0] sm:$0xff]
    %v181 = vld [vmem:[#allocation3 + $0x3b8] sm:$0xff]
    %v182 = vld [vmem:[#allocation3 + $0x3c0] sm:$0xff]
    %v183 = vld [vmem:[#allocation3 + $0x3c8] sm:$0xff]
    %v184 = vld [vmem:[#allocation3 + $0x3d0] sm:$0xff]
    %v185 = vld [vmem:[#allocation3 + $0x3d8] sm:$0xff]
    %v186 = vld [vmem:[#allocation3 + $0x3e0] sm:$0xff]
    %v187 = vld [vmem:[#allocation3 + $0x3e8] sm:$0xff]
    %v188 = vld [vmem:[#allocation3 + $0x3f0] sm:$0xff]
    %v189 = vld [vmem:[#allocation3 + $0x3f8] sm:$0xff]
    %v190 = vld [vmem:[%s2] sm:$0xff]
    %v192 = vperm.slane %v190, 0
    %v193 = vperm.slane %v190, 1
    %v194 = vperm.slane %v190, 2
    %v195 = vperm.slane %v190, 3
    %v196 = vperm.slane %v190, 4
    %v197 = vperm.slane %v190, 5
    %v198 = vperm.slane %v190, 6
    %v199 = vperm.slane %v190, 7
    %v214 = vunpack.c.l.b16 %v56
    %v215 = vunpack.c.h.b16 %v56
    %v216 = vunpack.c.l.b16 %v57
    %v217 = vunpack.c.h.b16 %v57
    %v218 = vunpack.c.l.b16 %v58
    %v219 = vunpack.c.h.b16 %v58
    %v220 = vunpack.c.l.b16 %v59
    %v221 = vunpack.c.h.b16 %v59
    %v222 = vunpack.c.l.b16 %v60
    %v223 = vunpack.c.h.b16 %v60
    %v224 = vunpack.c.l.b16 %v61
    %v225 = vunpack.c.h.b16 %v61
    %v226 = vpack.c.b16 %v216, %v214
    %v227 = vpack.c.b16 %v217, %v215
    %v228 = vpack.c.b16 %v220, %v218
    %v229 = vpack.c.b16 %v221, %v219
    %v230 = vpack.c.b16 %v224, %v222
    %v231 = vpack.c.b16 %v225, %v223
    %v366 = vunpack.c.l.b16 %v62
    %v367 = vunpack.c.h.b16 %v62
    %v368 = vunpack.c.l.b16 %v63
    %v369 = vunpack.c.h.b16 %v63
    %v370 = vunpack.c.l.b16 %v64
    %v371 = vunpack.c.h.b16 %v64
    %v372 = vunpack.c.l.b16 %v65
    %v373 = vunpack.c.h.b16 %v65
    %v374 = vunpack.c.l.b16 %v66
    %v375 = vunpack.c.h.b16 %v66
    %v376 = vunpack.c.l.b16 %v67
    %v377 = vunpack.c.h.b16 %v67
    %v378 = vunpack.c.l.b16 %v68
    %v379 = vunpack.c.h.b16 %v68
    %v380 = vunpack.c.l.b16 %v69
    %v381 = vunpack.c.h.b16 %v69
    %v382 = vunpack.c.l.b16 %v70
    %v383 = vunpack.c.h.b16 %v70
    %v384 = vunpack.c.l.b16 %v71
    %v385 = vunpack.c.h.b16 %v71
    %v386 = vunpack.c.l.b16 %v72
    %v387 = vunpack.c.h.b16 %v72
    %v388 = vunpack.c.l.b16 %v73
    %v389 = vunpack.c.h.b16 %v73
    %v390 = vunpack.c.l.b16 %v74
    %v391 = vunpack.c.h.b16 %v74
    %v392 = vunpack.c.l.b16 %v75
    %v393 = vunpack.c.h.b16 %v75
    %v394 = vunpack.c.l.b16 %v76
    %v395 = vunpack.c.h.b16 %v76
    %v396 = vunpack.c.l.b16 %v77
    %v397 = vunpack.c.h.b16 %v77
    %v398 = vunpack.c.l.b16 %v78
    %v399 = vunpack.c.h.b16 %v78
    %v400 = vunpack.c.l.b16 %v79
    %v401 = vunpack.c.h.b16 %v79
    %v402 = vunpack.c.l.b16 %v80
    %v403 = vunpack.c.h.b16 %v80
    %v404 = vunpack.c.l.b16 %v81
    %v405 = vunpack.c.h.b16 %v81
    %v406 = vunpack.c.l.b16 %v82
    %v407 = vunpack.c.h.b16 %v82
    %v408 = vunpack.c.l.b16 %v83
    %v409 = vunpack.c.h.b16 %v83
    %v410 = vunpack.c.l.b16 %v84
    %v411 = vunpack.c.h.b16 %v84
    %v412 = vunpack.c.l.b16 %v85
    %v413 = vunpack.c.h.b16 %v85
    %v414 = vunpack.c.l.b16 %v86
    %v415 = vunpack.c.h.b16 %v86
    %v416 = vunpack.c.l.b16 %v87
    %v417 = vunpack.c.h.b16 %v87
    %v418 = vunpack.c.l.b16 %v88
    %v419 = vunpack.c.h.b16 %v88
    %v420 = vunpack.c.l.b16 %v89
    %v421 = vunpack.c.h.b16 %v89
    %v422 = vunpack.c.l.b16 %v90
    %v423 = vunpack.c.h.b16 %v90
    %v424 = vunpack.c.l.b16 %v91
    %v425 = vunpack.c.h.b16 %v91
    %v426 = vunpack.c.l.b16 %v92
    %v427 = vunpack.c.h.b16 %v92
    %v428 = vunpack.c.l.b16 %v93
    %v429 = vunpack.c.h.b16 %v93
    %v430 = vunpack.c.l.b16 %v94
    %v431 = vunpack.c.h.b16 %v94
    %v432 = vunpack.c.l.b16 %v95
    %v433 = vunpack.c.h.b16 %v95
    %v434 = vunpack.c.l.b16 %v96
    %v435 = vunpack.c.h.b16 %v96
    %v436 = vunpack.c.l.b16 %v97
    %v437 = vunpack.c.h.b16 %v97
    %v438 = vunpack.c.l.b16 %v98
    %v439 = vunpack.c.h.b16 %v98
    %v440 = vunpack.c.l.b16 %v99
    %v441 = vunpack.c.h.b16 %v99
    %v442 = vunpack.c.l.b16 %v100
    %v443 = vunpack.c.h.b16 %v100
    %v444 = vunpack.c.l.b16 %v101
    %v445 = vunpack.c.h.b16 %v101
    %v446 = vunpack.c.l.b16 %v102
    %v447 = vunpack.c.h.b16 %v102
    %v448 = vunpack.c.l.b16 %v103
    %v449 = vunpack.c.h.b16 %v103
    %v450 = vunpack.c.l.b16 %v104
    %v451 = vunpack.c.h.b16 %v104
    %v452 = vunpack.c.l.b16 %v105
    %v453 = vunpack.c.h.b16 %v105
    %v454 = vunpack.c.l.b16 %v106
    %v455 = vunpack.c.h.b16 %v106
    %v456 = vunpack.c.l.b16 %v107
    %v457 = vunpack.c.h.b16 %v107
    %v458 = vunpack.c.l.b16 %v108
    %v459 = vunpack.c.h.b16 %v108
    %v460 = vunpack.c.l.b16 %v109
    %v461 = vunpack.c.h.b16 %v109
    %v462 = vunpack.c.l.b16 %v110
    %v463 = vunpack.c.h.b16 %v110
    %v464 = vunpack.c.l.b16 %v111
    %v465 = vunpack.c.h.b16 %v111
    %v466 = vunpack.c.l.b16 %v112
    %v467 = vunpack.c.h.b16 %v112
    %v468 = vunpack.c.l.b16 %v113
    %v469 = vunpack.c.h.b16 %v113
    %v470 = vunpack.c.l.b16 %v114
    %v471 = vunpack.c.h.b16 %v114
    %v472 = vunpack.c.l.b16 %v115
    %v473 = vunpack.c.h.b16 %v115
    %v474 = vunpack.c.l.b16 %v116
    %v475 = vunpack.c.h.b16 %v116
    %v476 = vunpack.c.l.b16 %v117
    %v477 = vunpack.c.h.b16 %v117
    %v478 = vunpack.c.l.b16 %v118
    %v479 = vunpack.c.h.b16 %v118
    %v480 = vunpack.c.l.b16 %v119
    %v481 = vunpack.c.h.b16 %v119
    %v482 = vunpack.c.l.b16 %v120
    %v483 = vunpack.c.h.b16 %v120
    %v484 = vunpack.c.l.b16 %v121
    %v485 = vunpack.c.h.b16 %v121
    %v486 = vunpack.c.l.b16 %v122
    %v487 = vunpack.c.h.b16 %v122
    %v488 = vunpack.c.l.b16 %v123
    %v489 = vunpack.c.h.b16 %v123
    %v490 = vunpack.c.l.b16 %v124
    %v491 = vunpack.c.h.b16 %v124
    %v492 = vunpack.c.l.b16 %v125
    %v493 = vunpack.c.h.b16 %v125
    %v494 = vunpack.c.l.b16 %v126
    %v495 = vunpack.c.h.b16 %v126
    %v496 = vunpack.c.l.b16 %v127
    %v497 = vunpack.c.h.b16 %v127
    %v498 = vunpack.c.l.b16 %v128
    %v499 = vunpack.c.h.b16 %v128
    %v500 = vunpack.c.l.b16 %v129
    %v501 = vunpack.c.h.b16 %v129
    %v502 = vunpack.c.l.b16 %v130
    %v503 = vunpack.c.h.b16 %v130
    %v504 = vunpack.c.l.b16 %v131
    %v505 = vunpack.c.h.b16 %v131
    %v506 = vunpack.c.l.b16 %v132
    %v507 = vunpack.c.h.b16 %v132
    %v508 = vunpack.c.l.b16 %v133
    %v509 = vunpack.c.h.b16 %v133
    %v510 = vunpack.c.l.b16 %v134
    %v511 = vunpack.c.h.b16 %v134
    %v512 = vunpack.c.l.b16 %v135
    %v513 = vunpack.c.h.b16 %v135
    %v514 = vunpack.c.l.b16 %v136
    %v515 = vunpack.c.h.b16 %v136
    %v516 = vunpack.c.l.b16 %v137
    %v517 = vunpack.c.h.b16 %v137
    %v518 = vunpack.c.l.b16 %v138
    %v519 = vunpack.c.h.b16 %v138
    %v520 = vunpack.c.l.b16 %v139
    %v521 = vunpack.c.h.b16 %v139
    %v522 = vunpack.c.l.b16 %v140
    %v523 = vunpack.c.h.b16 %v140
    %v524 = vunpack.c.l.b16 %v141
    %v525 = vunpack.c.h.b16 %v141
    %v526 = vunpack.c.l.b16 %v142
    %v527 = vunpack.c.h.b16 %v142
    %v528 = vunpack.c.l.b16 %v143
    %v529 = vunpack.c.h.b16 %v143
    %v530 = vunpack.c.l.b16 %v144
    %v531 = vunpack.c.h.b16 %v144
    %v532 = vunpack.c.l.b16 %v145
    %v533 = vunpack.c.h.b16 %v145
    %v534 = vunpack.c.l.b16 %v146
    %v535 = vunpack.c.h.b16 %v146
    %v536 = vunpack.c.l.b16 %v147
    %v537 = vunpack.c.h.b16 %v147
    %v538 = vunpack.c.l.b16 %v148
    %v539 = vunpack.c.h.b16 %v148
    %v540 = vunpack.c.l.b16 %v149
    %v541 = vunpack.c.h.b16 %v149
    %v542 = vunpack.c.l.b16 %v150
    %v543 = vunpack.c.h.b16 %v150
    %v544 = vunpack.c.l.b16 %v151
    %v545 = vunpack.c.h.b16 %v151
    %v546 = vunpack.c.l.b16 %v152
    %v547 = vunpack.c.h.b16 %v152
    %v548 = vunpack.c.l.b16 %v153
    %v549 = vunpack.c.h.b16 %v153
    %v550 = vunpack.c.l.b16 %v154
    %v551 = vunpack.c.h.b16 %v154
    %v552 = vunpack.c.l.b16 %v155
    %v553 = vunpack.c.h.b16 %v155
    %v554 = vunpack.c.l.b16 %v156
    %v555 = vunpack.c.h.b16 %v156
    %v556 = vunpack.c.l.b16 %v157
    %v557 = vunpack.c.h.b16 %v157
    %v558 = vunpack.c.l.b16 %v158
    %v559 = vunpack.c.h.b16 %v158
    %v560 = vunpack.c.l.b16 %v159
    %v561 = vunpack.c.h.b16 %v159
    %v562 = vunpack.c.l.b16 %v160
    %v563 = vunpack.c.h.b16 %v160
    %v564 = vunpack.c.l.b16 %v161
    %v565 = vunpack.c.h.b16 %v161
    %v566 = vunpack.c.l.b16 %v162
    %v567 = vunpack.c.h.b16 %v162
    %v568 = vunpack.c.l.b16 %v163
    %v569 = vunpack.c.h.b16 %v163
    %v570 = vunpack.c.l.b16 %v164
    %v571 = vunpack.c.h.b16 %v164
    %v572 = vunpack.c.l.b16 %v165
    %v573 = vunpack.c.h.b16 %v165
    %v574 = vunpack.c.l.b16 %v166
    %v575 = vunpack.c.h.b16 %v166
    %v576 = vunpack.c.l.b16 %v167
    %v577 = vunpack.c.h.b16 %v167
    %v578 = vunpack.c.l.b16 %v168
    %v579 = vunpack.c.h.b16 %v168
    %v580 = vunpack.c.l.b16 %v169
    %v581 = vunpack.c.h.b16 %v169
    %v582 = vunpack.c.l.b16 %v170
    %v583 = vunpack.c.h.b16 %v170
    %v584 = vunpack.c.l.b16 %v171
    %v585 = vunpack.c.h.b16 %v171
    %v586 = vunpack.c.l.b16 %v172
    %v587 = vunpack.c.h.b16 %v172
    %v588 = vunpack.c.l.b16 %v173
    %v589 = vunpack.c.h.b16 %v173
    %v590 = vunpack.c.l.b16 %v174
    %v591 = vunpack.c.h.b16 %v174
    %v592 = vunpack.c.l.b16 %v175
    %v593 = vunpack.c.h.b16 %v175
    %v594 = vunpack.c.l.b16 %v176
    %v595 = vunpack.c.h.b16 %v176
    %v596 = vunpack.c.l.b16 %v177
    %v597 = vunpack.c.h.b16 %v177
    %v598 = vunpack.c.l.b16 %v178
    %v599 = vunpack.c.h.b16 %v178
    %v600 = vunpack.c.l.b16 %v179
    %v601 = vunpack.c.h.b16 %v179
    %v602 = vunpack.c.l.b16 %v180
    %v603 = vunpack.c.h.b16 %v180
    %v604 = vunpack.c.l.b16 %v181
    %v605 = vunpack.c.h.b16 %v181
    %v606 = vunpack.c.l.b16 %v182
    %v607 = vunpack.c.h.b16 %v182
    %v608 = vunpack.c.l.b16 %v183
    %v609 = vunpack.c.h.b16 %v183
    %v610 = vunpack.c.l.b16 %v184
    %v611 = vunpack.c.h.b16 %v184
    %v612 = vunpack.c.l.b16 %v185
    %v613 = vunpack.c.h.b16 %v185
    %v614 = vunpack.c.l.b16 %v186
    %v615 = vunpack.c.h.b16 %v186
    %v616 = vunpack.c.l.b16 %v187
    %v617 = vunpack.c.h.b16 %v187
    %v618 = vunpack.c.l.b16 %v188
    %v619 = vunpack.c.h.b16 %v188
    %v620 = vunpack.c.l.b16 %v189
    %v621 = vunpack.c.h.b16 %v189
    %v622 = vpack.c.b16 %v374, %v366
    %v623 = vpack.c.b16 %v375, %v367
    %v624 = vpack.c.b16 %v376, %v368
    %v625 = vpack.c.b16 %v377, %v369
    %v626 = vpack.c.b16 %v378, %v370
    %v627 = vpack.c.b16 %v379, %v371
    %v628 = vpack.c.b16 %v380, %v372
    %v629 = vpack.c.b16 %v381, %v373
    %v630 = vpack.c.b16 %v390, %v382
    %v631 = vpack.c.b16 %v391, %v383
    %v632 = vpack.c.b16 %v392, %v384
    %v633 = vpack.c.b16 %v393, %v385
    %v634 = vpack.c.b16 %v394, %v386
    %v635 = vpack.c.b16 %v395, %v387
    %v636 = vpack.c.b16 %v396, %v388
    %v637 = vpack.c.b16 %v397, %v389
    %v638 = vpack.c.b16 %v406, %v398
    %v639 = vpack.c.b16 %v407, %v399
    %v640 = vpack.c.b16 %v408, %v400
    %v641 = vpack.c.b16 %v409, %v401
    %v642 = vpack.c.b16 %v410, %v402
    %v643 = vpack.c.b16 %v411, %v403
    %v644 = vpack.c.b16 %v412, %v404
    %v645 = vpack.c.b16 %v413, %v405
    %v646 = vpack.c.b16 %v422, %v414
    %v647 = vpack.c.b16 %v423, %v415
    %v648 = vpack.c.b16 %v424, %v416
    %v649 = vpack.c.b16 %v425, %v417
    %v650 = vpack.c.b16 %v426, %v418
    %v651 = vpack.c.b16 %v427, %v419
    %v652 = vpack.c.b16 %v428, %v420
    %v653 = vpack.c.b16 %v429, %v421
    %v654 = vpack.c.b16 %v438, %v430
    %v655 = vpack.c.b16 %v439, %v431
    %v656 = vpack.c.b16 %v440, %v432
    %v657 = vpack.c.b16 %v441, %v433
    %v658 = vpack.c.b16 %v442, %v434
    %v659 = vpack.c.b16 %v443, %v435
    %v660 = vpack.c.b16 %v444, %v436
    %v661 = vpack.c.b16 %v445, %v437
    %v662 = vpack.c.b16 %v454, %v446
    %v663 = vpack.c.b16 %v455, %v447
    %v664 = vpack.c.b16 %v456, %v448
    %v665 = vpack.c.b16 %v457, %v449
    %v666 = vpack.c.b16 %v458, %v450
    %v667 = vpack.c.b16 %v459, %v451
    %v668 = vpack.c.b16 %v460, %v452
    %v669 = vpack.c.b16 %v461, %v453
    %v670 = vpack.c.b16 %v470, %v462
    %v671 = vpack.c.b16 %v471, %v463
    %v672 = vpack.c.b16 %v472, %v464
    %v673 = vpack.c.b16 %v473, %v465
    %v674 = vpack.c.b16 %v474, %v466
    %v675 = vpack.c.b16 %v475, %v467
    %v676 = vpack.c.b16 %v476, %v468
    %v677 = vpack.c.b16 %v477, %v469
    %v678 = vpack.c.b16 %v486, %v478
    %v679 = vpack.c.b16 %v487, %v479
    %v680 = vpack.c.b16 %v488, %v480
    %v681 = vpack.c.b16 %v489, %v481
    %v682 = vpack.c.b16 %v490, %v482
    %v683 = vpack.c.b16 %v491, %v483
    %v684 = vpack.c.b16 %v492, %v484
    %v685 = vpack.c.b16 %v493, %v485
    %v686 = vpack.c.b16 %v502, %v494
    %v687 = vpack.c.b16 %v503, %v495
    %v688 = vpack.c.b16 %v504, %v496
    %v689 = vpack.c.b16 %v505, %v497
    %v690 = vpack.c.b16 %v506, %v498
    %v691 = vpack.c.b16 %v507, %v499
    %v692 = vpack.c.b16 %v508, %v500
    %v693 = vpack.c.b16 %v509, %v501
    %v694 = vpack.c.b16 %v518, %v510
    %v695 = vpack.c.b16 %v519, %v511
    %v696 = vpack.c.b16 %v520, %v512
    %v697 = vpack.c.b16 %v521, %v513
    %v698 = vpack.c.b16 %v522, %v514
    %v699 = vpack.c.b16 %v523, %v515
    %v700 = vpack.c.b16 %v524, %v516
    %v701 = vpack.c.b16 %v525, %v517
    %v702 = vpack.c.b16 %v534, %v526
    %v703 = vpack.c.b16 %v535, %v527
    %v704 = vpack.c.b16 %v536, %v528
    %v705 = vpack.c.b16 %v537, %v529
    %v706 = vpack.c.b16 %v538, %v530
    %v707 = vpack.c.b16 %v539, %v531
    %v708 = vpack.c.b16 %v540, %v532
    %v709 = vpack.c.b16 %v541, %v533
    %v710 = vpack.c.b16 %v550, %v542
    %v711 = vpack.c.b16 %v551, %v543
    %v712 = vpack.c.b16 %v552, %v544
    %v713 = vpack.c.b16 %v553, %v545
    %v714 = vpack.c.b16 %v554, %v546
    %v715 = vpack.c.b16 %v555, %v547
    %v716 = vpack.c.b16 %v556, %v548
    %v717 = vpack.c.b16 %v557, %v549
    %v718 = vpack.c.b16 %v566, %v558
    %v719 = vpack.c.b16 %v567, %v559
    %v720 = vpack.c.b16 %v568, %v560
    %v721 = vpack.c.b16 %v569, %v561
    %v722 = vpack.c.b16 %v570, %v562
    %v723 = vpack.c.b16 %v571, %v563
    %v724 = vpack.c.b16 %v572, %v564
    %v725 = vpack.c.b16 %v573, %v565
    %v726 = vpack.c.b16 %v582, %v574
    %v727 = vpack.c.b16 %v583, %v575
    %v728 = vpack.c.b16 %v584, %v576
    %v729 = vpack.c.b16 %v585, %v577
    %v730 = vpack.c.b16 %v586, %v578
    %v731 = vpack.c.b16 %v587, %v579
    %v732 = vpack.c.b16 %v588, %v580
    %v733 = vpack.c.b16 %v589, %v581
    %v734 = vpack.c.b16 %v598, %v590
    %v735 = vpack.c.b16 %v599, %v591
    %v736 = vpack.c.b16 %v600, %v592
    %v737 = vpack.c.b16 %v601, %v593
    %v738 = vpack.c.b16 %v602, %v594
    %v739 = vpack.c.b16 %v603, %v595
    %v740 = vpack.c.b16 %v604, %v596
    %v741 = vpack.c.b16 %v605, %v597
    %v742 = vpack.c.b16 %v614, %v606
    %v743 = vpack.c.b16 %v615, %v607
    %v744 = vpack.c.b16 %v616, %v608
    %v745 = vpack.c.b16 %v617, %v609
    %v746 = vpack.c.b16 %v618, %v610
    %v747 = vpack.c.b16 %v619, %v611
    %v748 = vpack.c.b16 %v620, %v612
    %v749 = vpack.c.b16 %v621, %v613
    %878 = vmatpush.bf16.msra.mxu0 %v678
    %879 = vmatpush.bf16.msra.mxu0 %v670
    %880 = vmatpush.bf16.msra.mxu0 %v662
    %881 = vmatpush.bf16.msra.mxu0 %v654
    %882 = vmatpush.bf16.msra.mxu0 %v646
    %883 = vmatpush.bf16.msra.mxu0 %v638
    %884 = vmatpush.bf16.msra.mxu0 %v630
    %885 = vmatpush.bf16.msra.mxu0 %v622
    %886 = vmatmul.bf16.gmra.mxu0 %v226
    %v887 = vpop.f32.mrf.mxu0
    %v888 = vadd.f32 %v192, %v887
    %v889 = vpop.f32.mrf.mxu0
    %v890 = vadd.f32 %v192, %v889
    %891 = vmatmul.bf16.gmra.mxu0 %v228
    %v892 = vpop.f32.mrf.mxu0
    %v893 = vadd.f32 %v192, %v892
    %v894 = vpop.f32.mrf.mxu0
    %v895 = vadd.f32 %v192, %v894
    %896 = vmatmul.bf16.gmra.mxu0 %v230
    %v897 = vpop.f32.mrf.mxu0
    %v898 = vadd.f32 %v192, %v897
    %v899 = vpop.f32.mrf.mxu0
    %v900 = vadd.f32 %v192, %v899
    %901 = vdwg.mxu0
    %902 = vmatpush.bf16.msra.mxu0 %v742
    %903 = vmatpush.bf16.msra.mxu0 %v734
    %904 = vmatpush.bf16.msra.mxu0 %v726
    %905 = vmatpush.bf16.msra.mxu0 %v718
    %906 = vmatpush.bf16.msra.mxu0 %v710
    %907 = vmatpush.bf16.msra.mxu0 %v702
    %908 = vmatpush.bf16.msra.mxu0 %v694
    %909 = vmatpush.bf16.msra.mxu0 %v686
    %910 = vmatmul.bf16.gmra.mxu0 %v227
    %v911 = vpop.f32.mrf.mxu0
    %v912 = vadd.f32 %v888, %v911
    %v913 = vpop.f32.mrf.mxu0
    %v914 = vadd.f32 %v890, %v913
    %915 = vmatmul.bf16.gmra.mxu0 %v229
    %v916 = vpop.f32.mrf.mxu0
    %v917 = vadd.f32 %v893, %v916
    %v918 = vpop.f32.mrf.mxu0
    %v919 = vadd.f32 %v895, %v918
    %920 = vmatmul.bf16.gmra.mxu0 %v231
    %v921 = vpop.f32.mrf.mxu0
    %v922 = vadd.f32 %v898, %v921
    %v923 = vpop.f32.mrf.mxu0
    %v924 = vadd.f32 %v900, %v923
    %925 = vdwg.mxu0
    %926 = vmatpush.bf16.msra.mxu0 %v679
    %927 = vmatpush.bf16.msra.mxu0 %v671
    %928 = vmatpush.bf16.msra.mxu0 %v663
    %929 = vmatpush.bf16.msra.mxu0 %v655
    %930 = vmatpush.bf16.msra.mxu0 %v647
    %931 = vmatpush.bf16.msra.mxu0 %v639
    %932 = vmatpush.bf16.msra.mxu0 %v631
    %933 = vmatpush.bf16.msra.mxu0 %v623
    %934 = vmatmul.bf16.gmra.mxu0 %v226
    %v935 = vpop.f32.mrf.mxu0
    %v936 = vadd.f32 %v193, %v935
    %v937 = vpop.f32.mrf.mxu0
    %v938 = vadd.f32 %v193, %v937
    %939 = vmatmul.bf16.gmra.mxu0 %v228
    %v940 = vpop.f32.mrf.mxu0
    %v941 = vadd.f32 %v193, %v940
    %v942 = vpop.f32.mrf.mxu0
    %v943 = vadd.f32 %v193, %v942
    %944 = vmatmul.bf16.gmra.mxu0 %v230
    %v945 = vpop.f32.mrf.mxu0
    %v946 = vadd.f32 %v193, %v945
    %v947 = vpop.f32.mrf.mxu0
    %v948 = vadd.f32 %v193, %v947
    %949 = vdwg.mxu0
    %950 = vmatpush.bf16.msra.mxu0 %v743
    %951 = vmatpush.bf16.msra.mxu0 %v735
    %952 = vmatpush.bf16.msra.mxu0 %v727
    %953 = vmatpush.bf16.msra.mxu0 %v719
    %954 = vmatpush.bf16.msra.mxu0 %v711
    %955 = vmatpush.bf16.msra.mxu0 %v703
    %956 = vmatpush.bf16.msra.mxu0 %v695
    %957 = vmatpush.bf16.msra.mxu0 %v687
    %958 = vmatmul.bf16.gmra.mxu0 %v227
    %v959 = vpop.f32.mrf.mxu0
    %v960 = vadd.f32 %v936, %v959
    %v961 = vpop.f32.mrf.mxu0
    %v962 = vadd.f32 %v938, %v961
    %963 = vmatmul.bf16.gmra.mxu0 %v229
    %v964 = vpop.f32.mrf.mxu0
    %v965 = vadd.f32 %v941, %v964
    %v966 = vpop.f32.mrf.mxu0
    %v967 = vadd.f32 %v943, %v966
    %968 = vmatmul.bf16.gmra.mxu0 %v231
    %v969 = vpop.f32.mrf.mxu0
    %v970 = vadd.f32 %v946, %v969
    %v971 = vpop.f32.mrf.mxu0
    %v972 = vadd.f32 %v948, %v971
    %973 = vdwg.mxu0
    %974 = vmatpush.bf16.msra.mxu0 %v680
    %975 = vmatpush.bf16.msra.mxu0 %v672
    %976 = vmatpush.bf16.msra.mxu0 %v664
    %977 = vmatpush.bf16.msra.mxu0 %v656
    %978 = vmatpush.bf16.msra.mxu0 %v648
    %979 = vmatpush.bf16.msra.mxu0 %v640
    %980 = vmatpush.bf16.msra.mxu0 %v632
    %981 = vmatpush.bf16.msra.mxu0 %v624
    %982 = vmatmul.bf16.gmra.mxu0 %v226
    %v983 = vpop.f32.mrf.mxu0
    %v984 = vadd.f32 %v194, %v983
    %v985 = vpop.f32.mrf.mxu0
    %v986 = vadd.f32 %v194, %v985
    %987 = vmatmul.bf16.gmra.mxu0 %v228
    %v988 = vpop.f32.mrf.mxu0
    %v989 = vadd.f32 %v194, %v988
    %v990 = vpop.f32.mrf.mxu0
    %v991 = vadd.f32 %v194, %v990
    %992 = vmatmul.bf16.gmra.mxu0 %v230
    %v993 = vpop.f32.mrf.mxu0
    %v994 = vadd.f32 %v194, %v993
    %v995 = vpop.f32.mrf.mxu0
    %v996 = vadd.f32 %v194, %v995
    %997 = vdwg.mxu0
    %998 = vmatpush.bf16.msra.mxu0 %v744
    %999 = vmatpush.bf16.msra.mxu0 %v736
    %1000 = vmatpush.bf16.msra.mxu0 %v728
    %1001 = vmatpush.bf16.msra.mxu0 %v720
    %1002 = vmatpush.bf16.msra.mxu0 %v712
    %1003 = vmatpush.bf16.msra.mxu0 %v704
    %1004 = vmatpush.bf16.msra.mxu0 %v696
    %1005 = vmatpush.bf16.msra.mxu0 %v688
    %1006 = vmatmul.bf16.gmra.mxu0 %v227
    %v1007 = vpop.f32.mrf.mxu0
    %v1008 = vadd.f32 %v984, %v1007
    %v1009 = vpop.f32.mrf.mxu0
    %v1010 = vadd.f32 %v986, %v1009
    %1011 = vmatmul.bf16.gmra.mxu0 %v229
    %v1012 = vpop.f32.mrf.mxu0
    %v1013 = vadd.f32 %v989, %v1012
    %v1014 = vpop.f32.mrf.mxu0
    %v1015 = vadd.f32 %v991, %v1014
    %1016 = vmatmul.bf16.gmra.mxu0 %v231
    %v1017 = vpop.f32.mrf.mxu0
    %v1018 = vadd.f32 %v994, %v1017
    %v1019 = vpop.f32.mrf.mxu0
    %v1020 = vadd.f32 %v996, %v1019
    %1021 = vdwg.mxu0
    %1022 = vmatpush.bf16.msra.mxu0 %v681
    %1023 = vmatpush.bf16.msra.mxu0 %v673
    %1024 = vmatpush.bf16.msra.mxu0 %v665
    %1025 = vmatpush.bf16.msra.mxu0 %v657
    %1026 = vmatpush.bf16.msra.mxu0 %v649
    %1027 = vmatpush.bf16.msra.mxu0 %v641
    %1028 = vmatpush.bf16.msra.mxu0 %v633
    %1029 = vmatpush.bf16.msra.mxu0 %v625
    %1030 = vmatmul.bf16.gmra.mxu0 %v226
    %v1031 = vpop.f32.mrf.mxu0
    %v1032 = vadd.f32 %v195, %v1031
    %v1033 = vpop.f32.mrf.mxu0
    %v1034 = vadd.f32 %v195, %v1033
    %1035 = vmatmul.bf16.gmra.mxu0 %v228
    %v1036 = vpop.f32.mrf.mxu0
    %v1037 = vadd.f32 %v195, %v1036
    %v1038 = vpop.f32.mrf.mxu0
    %v1039 = vadd.f32 %v195, %v1038
    %1040 = vmatmul.bf16.gmra.mxu0 %v230
    %v1041 = vpop.f32.mrf.mxu0
    %v1042 = vadd.f32 %v195, %v1041
    %v1043 = vpop.f32.mrf.mxu0
    %v1044 = vadd.f32 %v195, %v1043
    %1045 = vdwg.mxu0
    %1046 = vmatpush.bf16.msra.mxu0 %v745
    %1047 = vmatpush.bf16.msra.mxu0 %v737
    %1048 = vmatpush.bf16.msra.mxu0 %v729
    %1049 = vmatpush.bf16.msra.mxu0 %v721
    %1050 = vmatpush.bf16.msra.mxu0 %v713
    %1051 = vmatpush.bf16.msra.mxu0 %v705
    %1052 = vmatpush.bf16.msra.mxu0 %v697
    %1053 = vmatpush.bf16.msra.mxu0 %v689
    %1054 = vmatmul.bf16.gmra.mxu0 %v227
    %v1055 = vpop.f32.mrf.mxu0
    %v1056 = vadd.f32 %v1032, %v1055
    %v1057 = vpop.f32.mrf.mxu0
    %v1058 = vadd.f32 %v1034, %v1057
    %1059 = vmatmul.bf16.gmra.mxu0 %v229
    %v1060 = vpop.f32.mrf.mxu0
    %v1061 = vadd.f32 %v1037, %v1060
    %v1062 = vpop.f32.mrf.mxu0
    %v1063 = vadd.f32 %v1039, %v1062
    %1064 = vmatmul.bf16.gmra.mxu0 %v231
    %v1065 = vpop.f32.mrf.mxu0
    %v1066 = vadd.f32 %v1042, %v1065
    %v1067 = vpop.f32.mrf.mxu0
    %v1068 = vadd.f32 %v1044, %v1067
    %1069 = vdwg.mxu0
    %1070 = vmatpush.bf16.msra.mxu0 %v682
    %1071 = vmatpush.bf16.msra.mxu0 %v674
    %1072 = vmatpush.bf16.msra.mxu0 %v666
    %1073 = vmatpush.bf16.msra.mxu0 %v658
    %1074 = vmatpush.bf16.msra.mxu0 %v650
    %1075 = vmatpush.bf16.msra.mxu0 %v642
    %1076 = vmatpush.bf16.msra.mxu0 %v634
    %1077 = vmatpush.bf16.msra.mxu0 %v626
    %1078 = vmatmul.bf16.gmra.mxu0 %v226
    %v1079 = vpop.f32.mrf.mxu0
    %v1080 = vadd.f32 %v196, %v1079
    %v1081 = vpop.f32.mrf.mxu0
    %v1082 = vadd.f32 %v196, %v1081
    %1083 = vmatmul.bf16.gmra.mxu0 %v228
    %v1084 = vpop.f32.mrf.mxu0
    %v1085 = vadd.f32 %v196, %v1084
    %v1086 = vpop.f32.mrf.mxu0
    %v1087 = vadd.f32 %v196, %v1086
    %1088 = vmatmul.bf16.gmra.mxu0 %v230
    %v1089 = vpop.f32.mrf.mxu0
    %v1090 = vadd.f32 %v196, %v1089
    %v1091 = vpop.f32.mrf.mxu0
    %v1092 = vadd.f32 %v196, %v1091
    %1093 = vdwg.mxu0
    %1094 = vmatpush.bf16.msra.mxu0 %v746
    %1095 = vmatpush.bf16.msra.mxu0 %v738
    %1096 = vmatpush.bf16.msra.mxu0 %v730
    %1097 = vmatpush.bf16.msra.mxu0 %v722
    %1098 = vmatpush.bf16.msra.mxu0 %v714
    %1099 = vmatpush.bf16.msra.mxu0 %v706
    %1100 = vmatpush.bf16.msra.mxu0 %v698
    %1101 = vmatpush.bf16.msra.mxu0 %v690
    %1102 = vmatmul.bf16.gmra.mxu0 %v227
    %v1103 = vpop.f32.mrf.mxu0
    %v1104 = vadd.f32 %v1080, %v1103
    %v1105 = vpop.f32.mrf.mxu0
    %v1106 = vadd.f32 %v1082, %v1105
    %1107 = vmatmul.bf16.gmra.mxu0 %v229
    %v1108 = vpop.f32.mrf.mxu0
    %v1109 = vadd.f32 %v1085, %v1108
    %v1110 = vpop.f32.mrf.mxu0
    %v1111 = vadd.f32 %v1087, %v1110
    %1112 = vmatmul.bf16.gmra.mxu0 %v231
    %v1113 = vpop.f32.mrf.mxu0
    %v1114 = vadd.f32 %v1090, %v1113
    %v1115 = vpop.f32.mrf.mxu0
    %v1116 = vadd.f32 %v1092, %v1115
    %1117 = vdwg.mxu0
    %1118 = vmatpush.bf16.msra.mxu0 %v683
    %1119 = vmatpush.bf16.msra.mxu0 %v675
    %1120 = vmatpush.bf16.msra.mxu0 %v667
    %1121 = vmatpush.bf16.msra.mxu0 %v659
    %1122 = vmatpush.bf16.msra.mxu0 %v651
    %1123 = vmatpush.bf16.msra.mxu0 %v643
    %1124 = vmatpush.bf16.msra.mxu0 %v635
    %1125 = vmatpush.bf16.msra.mxu0 %v627
    %1126 = vmatmul.bf16.gmra.mxu0 %v226
    %v1127 = vpop.f32.mrf.mxu0
    %v1128 = vadd.f32 %v197, %v1127
    %v1129 = vpop.f32.mrf.mxu0
    %v1130 = vadd.f32 %v197, %v1129
    %1131 = vmatmul.bf16.gmra.mxu0 %v228
    %v1132 = vpop.f32.mrf.mxu0
    %v1133 = vadd.f32 %v197, %v1132
    %v1134 = vpop.f32.mrf.mxu0
    %v1135 = vadd.f32 %v197, %v1134
    %1136 = vmatmul.bf16.gmra.mxu0 %v230
    %v1137 = vpop.f32.mrf.mxu0
    %v1138 = vadd.f32 %v197, %v1137
    %v1139 = vpop.f32.mrf.mxu0
    %v1140 = vadd.f32 %v197, %v1139
    %1141 = vdwg.mxu0
    %1142 = vmatpush.bf16.msra.mxu0 %v747
    %1143 = vmatpush.bf16.msra.mxu0 %v739
    %1144 = vmatpush.bf16.msra.mxu0 %v731
    %1145 = vmatpush.bf16.msra.mxu0 %v723
    %1146 = vmatpush.bf16.msra.mxu0 %v715
    %1147 = vmatpush.bf16.msra.mxu0 %v707
    %1148 = vmatpush.bf16.msra.mxu0 %v699
    %1149 = vmatpush.bf16.msra.mxu0 %v691
    %1150 = vmatmul.bf16.gmra.mxu0 %v227
    %v1151 = vpop.f32.mrf.mxu0
    %v1152 = vadd.f32 %v1128, %v1151
    %v1153 = vpop.f32.mrf.mxu0
    %v1154 = vadd.f32 %v1130, %v1153
    %1155 = vmatmul.bf16.gmra.mxu0 %v229
    %v1156 = vpop.f32.mrf.mxu0
    %v1157 = vadd.f32 %v1133, %v1156
    %v1158 = vpop.f32.mrf.mxu0
    %v1159 = vadd.f32 %v1135, %v1158
    %1160 = vmatmul.bf16.gmra.mxu0 %v231
    %v1161 = vpop.f32.mrf.mxu0
    %v1162 = vadd.f32 %v1138, %v1161
    %v1163 = vpop.f32.mrf.mxu0
    %v1164 = vadd.f32 %v1140, %v1163
    %1165 = vdwg.mxu0
    %1166 = vmatpush.bf16.msra.mxu0 %v684
    %1167 = vmatpush.bf16.msra.mxu0 %v676
    %1168 = vmatpush.bf16.msra.mxu0 %v668
    %1169 = vmatpush.bf16.msra.mxu0 %v660
    %1170 = vmatpush.bf16.msra.mxu0 %v652
    %1171 = vmatpush.bf16.msra.mxu0 %v644
    %1172 = vmatpush.bf16.msra.mxu0 %v636
    %1173 = vmatpush.bf16.msra.mxu0 %v628
    %1174 = vmatmul.bf16.gmra.mxu0 %v226
    %v1175 = vpop.f32.mrf.mxu0
    %v1176 = vadd.f32 %v198, %v1175
    %v1177 = vpop.f32.mrf.mxu0
    %v1178 = vadd.f32 %v198, %v1177
    %1179 = vmatmul.bf16.gmra.mxu0 %v228
    %v1180 = vpop.f32.mrf.mxu0
    %v1181 = vadd.f32 %v198, %v1180
    %v1182 = vpop.f32.mrf.mxu0
    %v1183 = vadd.f32 %v198, %v1182
    %1184 = vmatmul.bf16.gmra.mxu0 %v230
    %v1185 = vpop.f32.mrf.mxu0
    %v1186 = vadd.f32 %v198, %v1185
    %v1187 = vpop.f32.mrf.mxu0
    %v1188 = vadd.f32 %v198, %v1187
    %1189 = vdwg.mxu0
    %1190 = vmatpush.bf16.msra.mxu0 %v748
    %1191 = vmatpush.bf16.msra.mxu0 %v740
    %1192 = vmatpush.bf16.msra.mxu0 %v732
    %1193 = vmatpush.bf16.msra.mxu0 %v724
    %1194 = vmatpush.bf16.msra.mxu0 %v716
    %1195 = vmatpush.bf16.msra.mxu0 %v708
    %1196 = vmatpush.bf16.msra.mxu0 %v700
    %1197 = vmatpush.bf16.msra.mxu0 %v692
    %1198 = vmatmul.bf16.gmra.mxu0 %v227
    %v1199 = vpop.f32.mrf.mxu0
    %v1200 = vadd.f32 %v1176, %v1199
    %v1201 = vpop.f32.mrf.mxu0
    %v1202 = vadd.f32 %v1178, %v1201
    %1203 = vmatmul.bf16.gmra.mxu0 %v229
    %v1204 = vpop.f32.mrf.mxu0
    %v1205 = vadd.f32 %v1181, %v1204
    %v1206 = vpop.f32.mrf.mxu0
    %v1207 = vadd.f32 %v1183, %v1206
    %1208 = vmatmul.bf16.gmra.mxu0 %v231
    %v1209 = vpop.f32.mrf.mxu0
    %v1210 = vadd.f32 %v1186, %v1209
    %v1211 = vpop.f32.mrf.mxu0
    %v1212 = vadd.f32 %v1188, %v1211
    %1213 = vdwg.mxu0
    %1214 = vmatpush.bf16.msra.mxu0 %v685
    %1215 = vmatpush.bf16.msra.mxu0 %v677
    %1216 = vmatpush.bf16.msra.mxu0 %v669
    %1217 = vmatpush.bf16.msra.mxu0 %v661
    %1218 = vmatpush.bf16.msra.mxu0 %v653
    %1219 = vmatpush.bf16.msra.mxu0 %v645
    %1220 = vmatpush.bf16.msra.mxu0 %v637
    %1221 = vmatpush.bf16.msra.mxu0 %v629
    %1222 = vmatmul.bf16.gmra.mxu0 %v226
    %v1223 = vpop.f32.mrf.mxu0
    %v1224 = vadd.f32 %v199, %v1223
    %v1225 = vpop.f32.mrf.mxu0
    %v1226 = vadd.f32 %v199, %v1225
    %1227 = vmatmul.bf16.gmra.mxu0 %v228
    %v1228 = vpop.f32.mrf.mxu0
    %v1229 = vadd.f32 %v199, %v1228
    %v1230 = vpop.f32.mrf.mxu0
    %v1231 = vadd.f32 %v199, %v1230
    %1232 = vmatmul.bf16.gmra.mxu0 %v230
    %v1233 = vpop.f32.mrf.mxu0
    %v1234 = vadd.f32 %v199, %v1233
    %v1235 = vpop.f32.mrf.mxu0
    %v1236 = vadd.f32 %v199, %v1235
    %1237 = vdwg.mxu0
    %1238 = vmatpush.bf16.msra.mxu0 %v749
    %1239 = vmatpush.bf16.msra.mxu0 %v741
    %1240 = vmatpush.bf16.msra.mxu0 %v733
    %1241 = vmatpush.bf16.msra.mxu0 %v725
    %1242 = vmatpush.bf16.msra.mxu0 %v717
    %1243 = vmatpush.bf16.msra.mxu0 %v709
    %1244 = vmatpush.bf16.msra.mxu0 %v701
    %1245 = vmatpush.bf16.msra.mxu0 %v693
    %1246 = vmatmul.bf16.gmra.mxu0 %v227
    %v1247 = vpop.f32.mrf.mxu0
    %v1248 = vadd.f32 %v1224, %v1247
    %v1249 = vpop.f32.mrf.mxu0
    %v1250 = vadd.f32 %v1226, %v1249
    %1251 = vmatmul.bf16.gmra.mxu0 %v229
    %v1252 = vpop.f32.mrf.mxu0
    %v1253 = vadd.f32 %v1229, %v1252
    %v1254 = vpop.f32.mrf.mxu0
    %v1255 = vadd.f32 %v1231, %v1254
    %1256 = vmatmul.bf16.gmra.mxu0 %v231
    %v1257 = vpop.f32.mrf.mxu0
    %v1258 = vadd.f32 %v1234, %v1257
    %v1259 = vpop.f32.mrf.mxu0
    %v1260 = vadd.f32 %v1236, %v1259
    %1261 = vdwg.mxu0
    %1262 = vst [vmem:[#allocation2] sm:$0xff] %v912
    %1263 = vst [vmem:[#allocation2 + $0x8] sm:$0xff] %v960
    %1264 = vst [vmem:[#allocation2 + $0x10] sm:$0xff] %v1008
    %1265 = vst [vmem:[#allocation2 + $0x18] sm:$0xff] %v1056
    %1266 = vst [vmem:[#allocation2 + $0x20] sm:$0xff] %v1104
    %1267 = vst [vmem:[#allocation2 + $0x28] sm:$0xff] %v1152
    %1268 = vst [vmem:[#allocation2 + $0x30] sm:$0xff] %v1200
    %1269 = vst [vmem:[#allocation2 + $0x38] sm:$0xff] %v1248
    %1270 = vst [vmem:[#allocation2 + $0x40] sm:$0xff] %v914
    %1271 = vst [vmem:[#allocation2 + $0x48] sm:$0xff] %v962
    %1272 = vst [vmem:[#allocation2 + $0x50] sm:$0xff] %v1010
    %1273 = vst [vmem:[#allocation2 + $0x58] sm:$0xff] %v1058
    %1274 = vst [vmem:[#allocation2 + $0x60] sm:$0xff] %v1106
    %1275 = vst [vmem:[#allocation2 + $0x68] sm:$0xff] %v1154
    %1276 = vst [vmem:[#allocation2 + $0x70] sm:$0xff] %v1202
    %1277 = vst [vmem:[#allocation2 + $0x78] sm:$0xff] %v1250
    %1278 = vst [vmem:[#allocation2 + $0x80] sm:$0xff] %v917
    %1279 = vst [vmem:[#allocation2 + $0x88] sm:$0xff] %v965
    %1280 = vst [vmem:[#allocation2 + $0x90] sm:$0xff] %v1013
    %1281 = vst [vmem:[#allocation2 + $0x98] sm:$0xff] %v1061
    %1282 = vst [vmem:[#allocation2 + $0xa0] sm:$0xff] %v1109
    %1283 = vst [vmem:[#allocation2 + $0xa8] sm:$0xff] %v1157
    %1284 = vst [vmem:[#allocation2 + $0xb0] sm:$0xff] %v1205
    %1285 = vst [vmem:[#allocation2 + $0xb8] sm:$0xff] %v1253
    %1286 = vst [vmem:[#allocation2 + $0xc0] sm:$0xff] %v919
    %1287 = vst [vmem:[#allocation2 + $0xc8] sm:$0xff] %v967
    %1288 = vst [vmem:[#allocation2 + $0xd0] sm:$0xff] %v1015
    %1289 = vst [vmem:[#allocation2 + $0xd8] sm:$0xff] %v1063
    %1290 = vst [vmem:[#allocation2 + $0xe0] sm:$0xff] %v1111
    %1291 = vst [vmem:[#allocation2 + $0xe8] sm:$0xff] %v1159
    %1292 = vst [vmem:[#allocation2 + $0xf0] sm:$0xff] %v1207
    %1293 = vst [vmem:[#allocation2 + $0xf8] sm:$0xff] %v1255
    %1294 = vst [vmem:[#allocation2 + $0x100] sm:$0xff] %v922
    %1295 = vst [vmem:[#allocation2 + $0x108] sm:$0xff] %v970
    %1296 = vst [vmem:[#allocation2 + $0x110] sm:$0xff] %v1018
    %1297 = vst [vmem:[#allocation2 + $0x118] sm:$0xff] %v1066
    %1298 = vst [vmem:[#allocation2 + $0x120] sm:$0xff] %v1114
    %1299 = vst [vmem:[#allocation2 + $0x128] sm:$0xff] %v1162
    %1300 = vst [vmem:[#allocation2 + $0x130] sm:$0xff] %v1210
    %1301 = vst [vmem:[#allocation2 + $0x138] sm:$0xff] %v1258
    %1302 = vst [vmem:[#allocation2 + $0x140] sm:$0xff] %v924
    %1303 = vst [vmem:[#allocation2 + $0x148] sm:$0xff] %v972
    %1304 = vst [vmem:[#allocation2 + $0x150] sm:$0xff] %v1020
    %1305 = vst [vmem:[#allocation2 + $0x158] sm:$0xff] %v1068
    %1306 = vst [vmem:[#allocation2 + $0x160] sm:$0xff] %v1116
    %1307 = vst [vmem:[#allocation2 + $0x168] sm:$0xff] %v1164
    %1308 = vst [vmem:[#allocation2 + $0x170] sm:$0xff] %v1212
    %1309 = vst [vmem:[#allocation2 + $0x178] sm:$0xff] %v1260
    %s1310 = smul.u32 0, 8
    %s1311 = smul.addr %s1310, 8
    %s1312 = scalar_lea.vmem [#allocation2], %s1311
    %v1313 = vld [vmem:[%s1312] sm:$0xff]
    %v1314 = vld [vmem:[%s1312 + $0x8] sm:$0xff]
    %v1315 = vld [vmem:[%s1312 + $0x10] sm:$0xff]
    %v1316 = vld [vmem:[%s1312 + $0x18] sm:$0xff]
    %v1317 = vld [vmem:[%s1312 + $0x20] sm:$0xff]
    %v1318 = vld [vmem:[%s1312 + $0x28] sm:$0xff]
    %v1319 = vld [vmem:[%s1312 + $0x30] sm:$0xff]
    %v1320 = vld [vmem:[%s1312 + $0x38] sm:$0xff]
    %v1321 = vld [vmem:[#allocation5] sm:$0xff]
    %v1322 = vld [vmem:[#allocation5 + $0x8] sm:$0xff]
    %v1323 = vld [vmem:[#allocation5 + $0x10] sm:$0xff]
    %v1324 = vld [vmem:[#allocation5 + $0x18] sm:$0xff]
    %v1325 = vld [vmem:[#allocation5 + $0x20] sm:$0xff]
    %v1326 = vld [vmem:[#allocation5 + $0x28] sm:$0xff]
    %v1327 = vld [vmem:[#allocation5 + $0x30] sm:$0xff]
    %v1328 = vld [vmem:[#allocation5 + $0x38] sm:$0xff]
    %v1329 = vld [vmem:[#allocation5 + $0x40] sm:$0xff]
    %v1330 = vld [vmem:[#allocation5 + $0x48] sm:$0xff]
    %v1331 = vld [vmem:[#allocation5 + $0x50] sm:$0xff]
    %v1332 = vld [vmem:[#allocation5 + $0x58] sm:$0xff]
    %v1333 = vld [vmem:[#allocation5 + $0x60] sm:$0xff]
    %v1334 = vld [vmem:[#allocation5 + $0x68] sm:$0xff]
    %v1335 = vld [vmem:[#allocation5 + $0x70] sm:$0xff]
    %v1336 = vld [vmem:[#allocation5 + $0x78] sm:$0xff]
    %v1337 = vld [vmem:[#allocation5 + $0x80] sm:$0xff]
    %v1338 = vld [vmem:[#allocation5 + $0x88] sm:$0xff]
    %v1339 = vld [vmem:[#allocation5 + $0x90] sm:$0xff]
    %v1340 = vld [vmem:[#allocation5 + $0x98] sm:$0xff]
    %v1341 = vld [vmem:[#allocation5 + $0xa0] sm:$0xff]
    %v1342 = vld [vmem:[#allocation5 + $0xa8] sm:$0xff]
    %v1343 = vld [vmem:[#allocation5 + $0xb0] sm:$0xff]
    %v1344 = vld [vmem:[#allocation5 + $0xb8] sm:$0xff]
    %v1345 = vld [vmem:[#allocation5 + $0xc0] sm:$0xff]
    %v1346 = vld [vmem:[#allocation5 + $0xc8] sm:$0xff]
    %v1347 = vld [vmem:[#allocation5 + $0xd0] sm:$0xff]
    %v1348 = vld [vmem:[#allocation5 + $0xd8] sm:$0xff]
    %v1349 = vld [vmem:[#allocation5 + $0xe0] sm:$0xff]
    %v1350 = vld [vmem:[#allocation5 + $0xe8] sm:$0xff]
    %v1351 = vld [vmem:[#allocation5 + $0xf0] sm:$0xff]
    %v1352 = vld [vmem:[#allocation5 + $0xf8] sm:$0xff]
    %v1353 = vld [vmem:[#allocation5 + $0x100] sm:$0xff]
    %v1354 = vld [vmem:[#allocation5 + $0x108] sm:$0xff]
    %v1355 = vld [vmem:[#allocation5 + $0x110] sm:$0xff]
    %v1356 = vld [vmem:[#allocation5 + $0x118] sm:$0xff]
    %v1357 = vld [vmem:[#allocation5 + $0x120] sm:$0xff]
    %v1358 = vld [vmem:[#allocation5 + $0x128] sm:$0xff]
    %v1359 = vld [vmem:[#allocation5 + $0x130] sm:$0xff]
    %v1360 = vld [vmem:[#allocation5 + $0x138] sm:$0xff]
    %v1361 = vld [vmem:[#allocation5 + $0x140] sm:$0xff]
    %v1362 = vld [vmem:[#allocation5 + $0x148] sm:$0xff]
    %v1363 = vld [vmem:[#allocation5 + $0x150] sm:$0xff]
    %v1364 = vld [vmem:[#allocation5 + $0x158] sm:$0xff]
    %v1365 = vld [vmem:[#allocation5 + $0x160] sm:$0xff]
    %v1366 = vld [vmem:[#allocation5 + $0x168] sm:$0xff]
    %v1367 = vld [vmem:[#allocation5 + $0x170] sm:$0xff]
    %v1368 = vld [vmem:[#allocation5 + $0x178] sm:$0xff]
    %v1369 = vld [vmem:[#allocation5 + $0x180] sm:$0xff]
    %v1370 = vld [vmem:[#allocation5 + $0x188] sm:$0xff]
    %v1371 = vld [vmem:[#allocation5 + $0x190] sm:$0xff]
    %v1372 = vld [vmem:[#allocation5 + $0x198] sm:$0xff]
    %v1373 = vld [vmem:[#allocation5 + $0x1a0] sm:$0xff]
    %v1374 = vld [vmem:[#allocation5 + $0x1a8] sm:$0xff]
    %v1375 = vld [vmem:[#allocation5 + $0x1b0] sm:$0xff]
    %v1376 = vld [vmem:[#allocation5 + $0x1b8] sm:$0xff]
    %v1377 = vld [vmem:[#allocation5 + $0x1c0] sm:$0xff]
    %v1378 = vld [vmem:[#allocation5 + $0x1c8] sm:$0xff]
    %v1379 = vld [vmem:[#allocation5 + $0x1d0] sm:$0xff]
    %v1380 = vld [vmem:[#allocation5 + $0x1d8] sm:$0xff]
    %v1381 = vld [vmem:[#allocation5 + $0x1e0] sm:$0xff]
    %v1382 = vld [vmem:[#allocation5 + $0x1e8] sm:$0xff]
    %v1383 = vld [vmem:[#allocation5 + $0x1f0] sm:$0xff]
    %v1384 = vld [vmem:[#allocation5 + $0x1f8] sm:$0xff]
    %v1385 = vld [vmem:[#allocation5 + $0x200] sm:$0xff]
    %v1386 = vld [vmem:[#allocation5 + $0x208] sm:$0xff]
    %v1387 = vld [vmem:[#allocation5 + $0x210] sm:$0xff]
    %v1388 = vld [vmem:[#allocation5 + $0x218] sm:$0xff]
    %v1389 = vld [vmem:[#allocation5 + $0x220] sm:$0xff]
    %v1390 = vld [vmem:[#allocation5 + $0x228] sm:$0xff]
    %v1391 = vld [vmem:[#allocation5 + $0x230] sm:$0xff]
    %v1392 = vld [vmem:[#allocation5 + $0x238] sm:$0xff]
    %v1393 = vld [vmem:[#allocation5 + $0x240] sm:$0xff]
    %v1394 = vld [vmem:[#allocation5 + $0x248] sm:$0xff]
    %v1395 = vld [vmem:[#allocation5 + $0x250] sm:$0xff]
    %v1396 = vld [vmem:[#allocation5 + $0x258] sm:$0xff]
    %v1397 = vld [vmem:[#allocation5 + $0x260] sm:$0xff]
    %v1398 = vld [vmem:[#allocation5 + $0x268] sm:$0xff]
    %v1399 = vld [vmem:[#allocation5 + $0x270] sm:$0xff]
    %v1400 = vld [vmem:[#allocation5 + $0x278] sm:$0xff]
    %v1401 = vld [vmem:[#allocation5 + $0x280] sm:$0xff]
    %v1402 = vld [vmem:[#allocation5 + $0x288] sm:$0xff]
    %v1403 = vld [vmem:[#allocation5 + $0x290] sm:$0xff]
    %v1404 = vld [vmem:[#allocation5 + $0x298] sm:$0xff]
    %v1405 = vld [vmem:[#allocation5 + $0x2a0] sm:$0xff]
    %v1406 = vld [vmem:[#allocation5 + $0x2a8] sm:$0xff]
    %v1407 = vld [vmem:[#allocation5 + $0x2b0] sm:$0xff]
    %v1408 = vld [vmem:[#allocation5 + $0x2b8] sm:$0xff]
    %v1409 = vld [vmem:[#allocation5 + $0x2c0] sm:$0xff]
    %v1410 = vld [vmem:[#allocation5 + $0x2c8] sm:$0xff]
    %v1411 = vld [vmem:[#allocation5 + $0x2d0] sm:$0xff]
    %v1412 = vld [vmem:[#allocation5 + $0x2d8] sm:$0xff]
    %v1413 = vld [vmem:[#allocation5 + $0x2e0] sm:$0xff]
    %v1414 = vld [vmem:[#allocation5 + $0x2e8] sm:$0xff]
    %v1415 = vld [vmem:[#allocation5 + $0x2f0] sm:$0xff]
    %v1416 = vld [vmem:[#allocation5 + $0x2f8] sm:$0xff]
    %v1417 = vld [vmem:[#allocation5 + $0x300] sm:$0xff]
    %v1418 = vld [vmem:[#allocation5 + $0x308] sm:$0xff]
    %v1419 = vld [vmem:[#allocation5 + $0x310] sm:$0xff]
    %v1420 = vld [vmem:[#allocation5 + $0x318] sm:$0xff]
    %v1421 = vld [vmem:[#allocation5 + $0x320] sm:$0xff]
    %v1422 = vld [vmem:[#allocation5 + $0x328] sm:$0xff]
    %v1423 = vld [vmem:[#allocation5 + $0x330] sm:$0xff]
    %v1424 = vld [vmem:[#allocation5 + $0x338] sm:$0xff]
    %v1425 = vld [vmem:[#allocation5 + $0x340] sm:$0xff]
    %v1426 = vld [vmem:[#allocation5 + $0x348] sm:$0xff]
    %v1427 = vld [vmem:[#allocation5 + $0x350] sm:$0xff]
    %v1428 = vld [vmem:[#allocation5 + $0x358] sm:$0xff]
    %v1429 = vld [vmem:[#allocation5 + $0x360] sm:$0xff]
    %v1430 = vld [vmem:[#allocation5 + $0x368] sm:$0xff]
    %v1431 = vld [vmem:[#allocation5 + $0x370] sm:$0xff]
    %v1432 = vld [vmem:[#allocation5 + $0x378] sm:$0xff]
    %v1433 = vld [vmem:[#allocation5 + $0x380] sm:$0xff]
    %v1434 = vld [vmem:[#allocation5 + $0x388] sm:$0xff]
    %v1435 = vld [vmem:[#allocation5 + $0x390] sm:$0xff]
    %v1436 = vld [vmem:[#allocation5 + $0x398] sm:$0xff]
    %v1437 = vld [vmem:[#allocation5 + $0x3a0] sm:$0xff]
    %v1438 = vld [vmem:[#allocation5 + $0x3a8] sm:$0xff]
    %v1439 = vld [vmem:[#allocation5 + $0x3b0] sm:$0xff]
    %v1440 = vld [vmem:[#allocation5 + $0x3b8] sm:$0xff]
    %v1441 = vld [vmem:[#allocation5 + $0x3c0] sm:$0xff]
    %v1442 = vld [vmem:[#allocation5 + $0x3c8] sm:$0xff]
    %v1443 = vld [vmem:[#allocation5 + $0x3d0] sm:$0xff]
    %v1444 = vld [vmem:[#allocation5 + $0x3d8] sm:$0xff]
    %v1445 = vld [vmem:[#allocation5 + $0x3e0] sm:$0xff]
    %v1446 = vld [vmem:[#allocation5 + $0x3e8] sm:$0xff]
    %v1447 = vld [vmem:[#allocation5 + $0x3f0] sm:$0xff]
    %v1448 = vld [vmem:[#allocation5 + $0x3f8] sm:$0xff]
    %v1577 = vunpack.c.l.b16 %v1321
    %v1578 = vunpack.c.h.b16 %v1321
    %v1579 = vunpack.c.l.b16 %v1322
    %v1580 = vunpack.c.h.b16 %v1322
    %v1581 = vunpack.c.l.b16 %v1323
    %v1582 = vunpack.c.h.b16 %v1323
    %v1583 = vunpack.c.l.b16 %v1324
    %v1584 = vunpack.c.h.b16 %v1324
    %v1585 = vunpack.c.l.b16 %v1325
    %v1586 = vunpack.c.h.b16 %v1325
    %v1587 = vunpack.c.l.b16 %v1326
    %v1588 = vunpack.c.h.b16 %v1326
    %v1589 = vunpack.c.l.b16 %v1327
    %v1590 = vunpack.c.h.b16 %v1327
    %v1591 = vunpack.c.l.b16 %v1328
    %v1592 = vunpack.c.h.b16 %v1328
    %v1593 = vunpack.c.l.b16 %v1329
    %v1594 = vunpack.c.h.b16 %v1329
    %v1595 = vunpack.c.l.b16 %v1330
    %v1596 = vunpack.c.h.b16 %v1330
    %v1597 = vunpack.c.l.b16 %v1331
    %v1598 = vunpack.c.h.b16 %v1331
    %v1599 = vunpack.c.l.b16 %v1332
    %v1600 = vunpack.c.h.b16 %v1332
    %v1601 = vunpack.c.l.b16 %v1333
    %v1602 = vunpack.c.h.b16 %v1333
    %v1603 = vunpack.c.l.b16 %v1334
    %v1604 = vunpack.c.h.b16 %v1334
    %v1605 = vunpack.c.l.b16 %v1335
    %v1606 = vunpack.c.h.b16 %v1335
    %v1607 = vunpack.c.l.b16 %v1336
    %v1608 = vunpack.c.h.b16 %v1336
    %v1609 = vunpack.c.l.b16 %v1337
    %v1610 = vunpack.c.h.b16 %v1337
    %v1611 = vunpack.c.l.b16 %v1338
    %v1612 = vunpack.c.h.b16 %v1338
    %v1613 = vunpack.c.l.b16 %v1339
    %v1614 = vunpack.c.h.b16 %v1339
    %v1615 = vunpack.c.l.b16 %v1340
    %v1616 = vunpack.c.h.b16 %v1340
    %v1617 = vunpack.c.l.b16 %v1341
    %v1618 = vunpack.c.h.b16 %v1341
    %v1619 = vunpack.c.l.b16 %v1342
    %v1620 = vunpack.c.h.b16 %v1342
    %v1621 = vunpack.c.l.b16 %v1343
    %v1622 = vunpack.c.h.b16 %v1343
    %v1623 = vunpack.c.l.b16 %v1344
    %v1624 = vunpack.c.h.b16 %v1344
    %v1625 = vunpack.c.l.b16 %v1345
    %v1626 = vunpack.c.h.b16 %v1345
    %v1627 = vunpack.c.l.b16 %v1346
    %v1628 = vunpack.c.h.b16 %v1346
    %v1629 = vunpack.c.l.b16 %v1347
    %v1630 = vunpack.c.h.b16 %v1347
    %v1631 = vunpack.c.l.b16 %v1348
    %v1632 = vunpack.c.h.b16 %v1348
    %v1633 = vunpack.c.l.b16 %v1349
    %v1634 = vunpack.c.h.b16 %v1349
    %v1635 = vunpack.c.l.b16 %v1350
    %v1636 = vunpack.c.h.b16 %v1350
    %v1637 = vunpack.c.l.b16 %v1351
    %v1638 = vunpack.c.h.b16 %v1351
    %v1639 = vunpack.c.l.b16 %v1352
    %v1640 = vunpack.c.h.b16 %v1352
    %v1641 = vunpack.c.l.b16 %v1353
    %v1642 = vunpack.c.h.b16 %v1353
    %v1643 = vunpack.c.l.b16 %v1354
    %v1644 = vunpack.c.h.b16 %v1354
    %v1645 = vunpack.c.l.b16 %v1355
    %v1646 = vunpack.c.h.b16 %v1355
    %v1647 = vunpack.c.l.b16 %v1356
    %v1648 = vunpack.c.h.b16 %v1356
    %v1649 = vunpack.c.l.b16 %v1357
    %v1650 = vunpack.c.h.b16 %v1357
    %v1651 = vunpack.c.l.b16 %v1358
    %v1652 = vunpack.c.h.b16 %v1358
    %v1653 = vunpack.c.l.b16 %v1359
    %v1654 = vunpack.c.h.b16 %v1359
    %v1655 = vunpack.c.l.b16 %v1360
    %v1656 = vunpack.c.h.b16 %v1360
    %v1657 = vunpack.c.l.b16 %v1361
    %v1658 = vunpack.c.h.b16 %v1361
    %v1659 = vunpack.c.l.b16 %v1362
    %v1660 = vunpack.c.h.b16 %v1362
    %v1661 = vunpack.c.l.b16 %v1363
    %v1662 = vunpack.c.h.b16 %v1363
    %v1663 = vunpack.c.l.b16 %v1364
    %v1664 = vunpack.c.h.b16 %v1364
    %v1665 = vunpack.c.l.b16 %v1365
    %v1666 = vunpack.c.h.b16 %v1365
    %v1667 = vunpack.c.l.b16 %v1366
    %v1668 = vunpack.c.h.b16 %v1366
    %v1669 = vunpack.c.l.b16 %v1367
    %v1670 = vunpack.c.h.b16 %v1367
    %v1671 = vunpack.c.l.b16 %v1368
    %v1672 = vunpack.c.h.b16 %v1368
    %v1673 = vunpack.c.l.b16 %v1369
    %v1674 = vunpack.c.h.b16 %v1369
    %v1675 = vunpack.c.l.b16 %v1370
    %v1676 = vunpack.c.h.b16 %v1370
    %v1677 = vunpack.c.l.b16 %v1371
    %v1678 = vunpack.c.h.b16 %v1371
    %v1679 = vunpack.c.l.b16 %v1372
    %v1680 = vunpack.c.h.b16 %v1372
    %v1681 = vunpack.c.l.b16 %v1373
    %v1682 = vunpack.c.h.b16 %v1373
    %v1683 = vunpack.c.l.b16 %v1374
    %v1684 = vunpack.c.h.b16 %v1374
    %v1685 = vunpack.c.l.b16 %v1375
    %v1686 = vunpack.c.h.b16 %v1375
    %v1687 = vunpack.c.l.b16 %v1376
    %v1688 = vunpack.c.h.b16 %v1376
    %v1689 = vunpack.c.l.b16 %v1377
    %v1690 = vunpack.c.h.b16 %v1377
    %v1691 = vunpack.c.l.b16 %v1378
    %v1692 = vunpack.c.h.b16 %v1378
    %v1693 = vunpack.c.l.b16 %v1379
    %v1694 = vunpack.c.h.b16 %v1379
    %v1695 = vunpack.c.l.b16 %v1380
    %v1696 = vunpack.c.h.b16 %v1380
    %v1697 = vunpack.c.l.b16 %v1381
    %v1698 = vunpack.c.h.b16 %v1381
    %v1699 = vunpack.c.l.b16 %v1382
    %v1700 = vunpack.c.h.b16 %v1382
    %v1701 = vunpack.c.l.b16 %v1383
    %v1702 = vunpack.c.h.b16 %v1383
    %v1703 = vunpack.c.l.b16 %v1384
    %v1704 = vunpack.c.h.b16 %v1384
    %v1705 = vunpack.c.l.b16 %v1385
    %v1706 = vunpack.c.h.b16 %v1385
    %v1707 = vunpack.c.l.b16 %v1386
    %v1708 = vunpack.c.h.b16 %v1386
    %v1709 = vunpack.c.l.b16 %v1387
    %v1710 = vunpack.c.h.b16 %v1387
    %v1711 = vunpack.c.l.b16 %v1388
    %v1712 = vunpack.c.h.b16 %v1388
    %v1713 = vunpack.c.l.b16 %v1389
    %v1714 = vunpack.c.h.b16 %v1389
    %v1715 = vunpack.c.l.b16 %v1390
    %v1716 = vunpack.c.h.b16 %v1390
    %v1717 = vunpack.c.l.b16 %v1391
    %v1718 = vunpack.c.h.b16 %v1391
    %v1719 = vunpack.c.l.b16 %v1392
    %v1720 = vunpack.c.h.b16 %v1392
    %v1721 = vunpack.c.l.b16 %v1393
    %v1722 = vunpack.c.h.b16 %v1393
    %v1723 = vunpack.c.l.b16 %v1394
    %v1724 = vunpack.c.h.b16 %v1394
    %v1725 = vunpack.c.l.b16 %v1395
    %v1726 = vunpack.c.h.b16 %v1395
    %v1727 = vunpack.c.l.b16 %v1396
    %v1728 = vunpack.c.h.b16 %v1396
    %v1729 = vunpack.c.l.b16 %v1397
    %v1730 = vunpack.c.h.b16 %v1397
    %v1731 = vunpack.c.l.b16 %v1398
    %v1732 = vunpack.c.h.b16 %v1398
    %v1733 = vunpack.c.l.b16 %v1399
    %v1734 = vunpack.c.h.b16 %v1399
    %v1735 = vunpack.c.l.b16 %v1400
    %v1736 = vunpack.c.h.b16 %v1400
    %v1737 = vunpack.c.l.b16 %v1401
    %v1738 = vunpack.c.h.b16 %v1401
    %v1739 = vunpack.c.l.b16 %v1402
    %v1740 = vunpack.c.h.b16 %v1402
    %v1741 = vunpack.c.l.b16 %v1403
    %v1742 = vunpack.c.h.b16 %v1403
    %v1743 = vunpack.c.l.b16 %v1404
    %v1744 = vunpack.c.h.b16 %v1404
    %v1745 = vunpack.c.l.b16 %v1405
    %v1746 = vunpack.c.h.b16 %v1405
    %v1747 = vunpack.c.l.b16 %v1406
    %v1748 = vunpack.c.h.b16 %v1406
    %v1749 = vunpack.c.l.b16 %v1407
    %v1750 = vunpack.c.h.b16 %v1407
    %v1751 = vunpack.c.l.b16 %v1408
    %v1752 = vunpack.c.h.b16 %v1408
    %v1753 = vunpack.c.l.b16 %v1409
    %v1754 = vunpack.c.h.b16 %v1409
    %v1755 = vunpack.c.l.b16 %v1410
    %v1756 = vunpack.c.h.b16 %v1410
    %v1757 = vunpack.c.l.b16 %v1411
    %v1758 = vunpack.c.h.b16 %v1411
    %v1759 = vunpack.c.l.b16 %v1412
    %v1760 = vunpack.c.h.b16 %v1412
    %v1761 = vunpack.c.l.b16 %v1413
    %v1762 = vunpack.c.h.b16 %v1413
    %v1763 = vunpack.c.l.b16 %v1414
    %v1764 = vunpack.c.h.b16 %v1414
    %v1765 = vunpack.c.l.b16 %v1415
    %v1766 = vunpack.c.h.b16 %v1415
    %v1767 = vunpack.c.l.b16 %v1416
    %v1768 = vunpack.c.h.b16 %v1416
    %v1769 = vunpack.c.l.b16 %v1417
    %v1770 = vunpack.c.h.b16 %v1417
    %v1771 = vunpack.c.l.b16 %v1418
    %v1772 = vunpack.c.h.b16 %v1418
    %v1773 = vunpack.c.l.b16 %v1419
    %v1774 = vunpack.c.h.b16 %v1419
    %v1775 = vunpack.c.l.b16 %v1420
    %v1776 = vunpack.c.h.b16 %v1420
    %v1777 = vunpack.c.l.b16 %v1421
    %v1778 = vunpack.c.h.b16 %v1421
    %v1779 = vunpack.c.l.b16 %v1422
    %v1780 = vunpack.c.h.b16 %v1422
    %v1781 = vunpack.c.l.b16 %v1423
    %v1782 = vunpack.c.h.b16 %v1423
    %v1783 = vunpack.c.l.b16 %v1424
    %v1784 = vunpack.c.h.b16 %v1424
    %v1785 = vunpack.c.l.b16 %v1425
    %v1786 = vunpack.c.h.b16 %v1425
    %v1787 = vunpack.c.l.b16 %v1426
    %v1788 = vunpack.c.h.b16 %v1426
    %v1789 = vunpack.c.l.b16 %v1427
    %v1790 = vunpack.c.h.b16 %v1427
    %v1791 = vunpack.c.l.b16 %v1428
    %v1792 = vunpack.c.h.b16 %v1428
    %v1793 = vunpack.c.l.b16 %v1429
    %v1794 = vunpack.c.h.b16 %v1429
    %v1795 = vunpack.c.l.b16 %v1430
    %v1796 = vunpack.c.h.b16 %v1430
    %v1797 = vunpack.c.l.b16 %v1431
    %v1798 = vunpack.c.h.b16 %v1431
    %v1799 = vunpack.c.l.b16 %v1432
    %v1800 = vunpack.c.h.b16 %v1432
    %v1801 = vunpack.c.l.b16 %v1433
    %v1802 = vunpack.c.h.b16 %v1433
    %v1803 = vunpack.c.l.b16 %v1434
    %v1804 = vunpack.c.h.b16 %v1434
    %v1805 = vunpack.c.l.b16 %v1435
    %v1806 = vunpack.c.h.b16 %v1435
    %v1807 = vunpack.c.l.b16 %v1436
    %v1808 = vunpack.c.h.b16 %v1436
    %v1809 = vunpack.c.l.b16 %v1437
    %v1810 = vunpack.c.h.b16 %v1437
    %v1811 = vunpack.c.l.b16 %v1438
    %v1812 = vunpack.c.h.b16 %v1438
    %v1813 = vunpack.c.l.b16 %v1439
    %v1814 = vunpack.c.h.b16 %v1439
    %v1815 = vunpack.c.l.b16 %v1440
    %v1816 = vunpack.c.h.b16 %v1440
    %v1817 = vunpack.c.l.b16 %v1441
    %v1818 = vunpack.c.h.b16 %v1441
    %v1819 = vunpack.c.l.b16 %v1442
    %v1820 = vunpack.c.h.b16 %v1442
    %v1821 = vunpack.c.l.b16 %v1443
    %v1822 = vunpack.c.h.b16 %v1443
    %v1823 = vunpack.c.l.b16 %v1444
    %v1824 = vunpack.c.h.b16 %v1444
    %v1825 = vunpack.c.l.b16 %v1445
    %v1826 = vunpack.c.h.b16 %v1445
    %v1827 = vunpack.c.l.b16 %v1446
    %v1828 = vunpack.c.h.b16 %v1446
    %v1829 = vunpack.c.l.b16 %v1447
    %v1830 = vunpack.c.h.b16 %v1447
    %v1831 = vunpack.c.l.b16 %v1448
    %v1832 = vunpack.c.h.b16 %v1448
    %v1833 = vpack.c.b16 %v1585, %v1577
    %v1834 = vpack.c.b16 %v1586, %v1578
    %v1835 = vpack.c.b16 %v1587, %v1579
    %v1836 = vpack.c.b16 %v1588, %v1580
    %v1837 = vpack.c.b16 %v1589, %v1581
    %v1838 = vpack.c.b16 %v1590, %v1582
    %v1839 = vpack.c.b16 %v1591, %v1583
    %v1840 = vpack.c.b16 %v1592, %v1584
    %v1841 = vpack.c.b16 %v1601, %v1593
    %v1842 = vpack.c.b16 %v1602, %v1594
    %v1843 = vpack.c.b16 %v1603, %v1595
    %v1844 = vpack.c.b16 %v1604, %v1596
    %v1845 = vpack.c.b16 %v1605, %v1597
    %v1846 = vpack.c.b16 %v1606, %v1598
    %v1847 = vpack.c.b16 %v1607, %v1599
    %v1848 = vpack.c.b16 %v1608, %v1600
    %v1849 = vpack.c.b16 %v1617, %v1609
    %v1850 = vpack.c.b16 %v1618, %v1610
    %v1851 = vpack.c.b16 %v1619, %v1611
    %v1852 = vpack.c.b16 %v1620, %v1612
    %v1853 = vpack.c.b16 %v1621, %v1613
    %v1854 = vpack.c.b16 %v1622, %v1614
    %v1855 = vpack.c.b16 %v1623, %v1615
    %v1856 = vpack.c.b16 %v1624, %v1616
    %v1857 = vpack.c.b16 %v1633, %v1625
    %v1858 = vpack.c.b16 %v1634, %v1626
    %v1859 = vpack.c.b16 %v1635, %v1627
    %v1860 = vpack.c.b16 %v1636, %v1628
    %v1861 = vpack.c.b16 %v1637, %v1629
    %v1862 = vpack.c.b16 %v1638, %v1630
    %v1863 = vpack.c.b16 %v1639, %v1631
    %v1864 = vpack.c.b16 %v1640, %v1632
    %v1865 = vpack.c.b16 %v1649, %v1641
    %v1866 = vpack.c.b16 %v1650, %v1642
    %v1867 = vpack.c.b16 %v1651, %v1643
    %v1868 = vpack.c.b16 %v1652, %v1644
    %v1869 = vpack.c.b16 %v1653, %v1645
    %v1870 = vpack.c.b16 %v1654, %v1646
    %v1871 = vpack.c.b16 %v1655, %v1647
    %v1872 = vpack.c.b16 %v1656, %v1648
    %v1873 = vpack.c.b16 %v1665, %v1657
    %v1874 = vpack.c.b16 %v1666, %v1658
    %v1875 = vpack.c.b16 %v1667, %v1659
    %v1876 = vpack.c.b16 %v1668, %v1660
    %v1877 = vpack.c.b16 %v1669, %v1661
    %v1878 = vpack.c.b16 %v1670, %v1662
    %v1879 = vpack.c.b16 %v1671, %v1663
    %v1880 = vpack.c.b16 %v1672, %v1664
    %v1881 = vpack.c.b16 %v1681, %v1673
    %v1882 = vpack.c.b16 %v1682, %v1674
    %v1883 = vpack.c.b16 %v1683, %v1675
    %v1884 = vpack.c.b16 %v1684, %v1676
    %v1885 = vpack.c.b16 %v1685, %v1677
    %v1886 = vpack.c.b16 %v1686, %v1678
    %v1887 = vpack.c.b16 %v1687, %v1679
    %v1888 = vpack.c.b16 %v1688, %v1680
    %v1889 = vpack.c.b16 %v1697, %v1689
    %v1890 = vpack.c.b16 %v1698, %v1690
    %v1891 = vpack.c.b16 %v1699, %v1691
    %v1892 = vpack.c.b16 %v1700, %v1692
    %v1893 = vpack.c.b16 %v1701, %v1693
    %v1894 = vpack.c.b16 %v1702, %v1694
    %v1895 = vpack.c.b16 %v1703, %v1695
    %v1896 = vpack.c.b16 %v1704, %v1696
    %v1897 = vpack.c.b16 %v1713, %v1705
    %v1898 = vpack.c.b16 %v1714, %v1706
    %v1899 = vpack.c.b16 %v1715, %v1707
    %v1900 = vpack.c.b16 %v1716, %v1708
    %v1901 = vpack.c.b16 %v1717, %v1709
    %v1902 = vpack.c.b16 %v1718, %v1710
    %v1903 = vpack.c.b16 %v1719, %v1711
    %v1904 = vpack.c.b16 %v1720, %v1712
    %v1905 = vpack.c.b16 %v1729, %v1721
    %v1906 = vpack.c.b16 %v1730, %v1722
    %v1907 = vpack.c.b16 %v1731, %v1723
    %v1908 = vpack.c.b16 %v1732, %v1724
    %v1909 = vpack.c.b16 %v1733, %v1725
    %v1910 = vpack.c.b16 %v1734, %v1726
    %v1911 = vpack.c.b16 %v1735, %v1727
    %v1912 = vpack.c.b16 %v1736, %v1728
    %v1913 = vpack.c.b16 %v1745, %v1737
    %v1914 = vpack.c.b16 %v1746, %v1738
    %v1915 = vpack.c.b16 %v1747, %v1739
    %v1916 = vpack.c.b16 %v1748, %v1740
    %v1917 = vpack.c.b16 %v1749, %v1741
    %v1918 = vpack.c.b16 %v1750, %v1742
    %v1919 = vpack.c.b16 %v1751, %v1743
    %v1920 = vpack.c.b16 %v1752, %v1744
    %v1921 = vpack.c.b16 %v1761, %v1753
    %v1922 = vpack.c.b16 %v1762, %v1754
    %v1923 = vpack.c.b16 %v1763, %v1755
    %v1924 = vpack.c.b16 %v1764, %v1756
    %v1925 = vpack.c.b16 %v1765, %v1757
    %v1926 = vpack.c.b16 %v1766, %v1758
    %v1927 = vpack.c.b16 %v1767, %v1759
    %v1928 = vpack.c.b16 %v1768, %v1760
    %v1929 = vpack.c.b16 %v1777, %v1769
    %v1930 = vpack.c.b16 %v1778, %v1770
    %v1931 = vpack.c.b16 %v1779, %v1771
    %v1932 = vpack.c.b16 %v1780, %v1772
    %v1933 = vpack.c.b16 %v1781, %v1773
    %v1934 = vpack.c.b16 %v1782, %v1774
    %v1935 = vpack.c.b16 %v1783, %v1775
    %v1936 = vpack.c.b16 %v1784, %v1776
    %v1937 = vpack.c.b16 %v1793, %v1785
    %v1938 = vpack.c.b16 %v1794, %v1786
    %v1939 = vpack.c.b16 %v1795, %v1787
    %v1940 = vpack.c.b16 %v1796, %v1788
    %v1941 = vpack.c.b16 %v1797, %v1789
    %v1942 = vpack.c.b16 %v1798, %v1790
    %v1943 = vpack.c.b16 %v1799, %v1791
    %v1944 = vpack.c.b16 %v1800, %v1792
    %v1945 = vpack.c.b16 %v1809, %v1801
    %v1946 = vpack.c.b16 %v1810, %v1802
    %v1947 = vpack.c.b16 %v1811, %v1803
    %v1948 = vpack.c.b16 %v1812, %v1804
    %v1949 = vpack.c.b16 %v1813, %v1805
    %v1950 = vpack.c.b16 %v1814, %v1806
    %v1951 = vpack.c.b16 %v1815, %v1807
    %v1952 = vpack.c.b16 %v1816, %v1808
    %v1953 = vpack.c.b16 %v1825, %v1817
    %v1954 = vpack.c.b16 %v1826, %v1818
    %v1955 = vpack.c.b16 %v1827, %v1819
    %v1956 = vpack.c.b16 %v1828, %v1820
    %v1957 = vpack.c.b16 %v1829, %v1821
    %v1958 = vpack.c.b16 %v1830, %v1822
    %v1959 = vpack.c.b16 %v1831, %v1823
    %v1960 = vpack.c.b16 %v1832, %v1824
    %2089 = vmatpush.bf16.msra.mxu0 %v1889
    %2090 = vmatpush.bf16.msra.mxu0 %v1881
    %2091 = vmatpush.bf16.msra.mxu0 %v1873
    %2092 = vmatpush.bf16.msra.mxu0 %v1865
    %2093 = vmatpush.bf16.msra.mxu0 %v1857
    %2094 = vmatpush.bf16.msra.mxu0 %v1849
    %2095 = vmatpush.bf16.msra.mxu0 %v1841
    %2096 = vmatpush.bf16.msra.mxu0 %v1833
    %2097 = vmatmul.bf16.gmra.mxu0 0
    %v2098 = vpop.f32.mrf.mxu0
    %v2099 = vadd.f32 0.0, %v2098
    %v2100 = vpop.f32.mrf.mxu0
    %2101 = vdwg.mxu0
    %2102 = vmatpush.bf16.msra.mxu0 %v1953
    %2103 = vmatpush.bf16.msra.mxu0 %v1945
    %2104 = vmatpush.bf16.msra.mxu0 %v1937
    %2105 = vmatpush.bf16.msra.mxu0 %v1929
    %2106 = vmatpush.bf16.msra.mxu0 %v1921
    %2107 = vmatpush.bf16.msra.mxu0 %v1913
    %2108 = vmatpush.bf16.msra.mxu0 %v1905
    %2109 = vmatpush.bf16.msra.mxu0 %v1897
    %2110 = vmatmul.bf16.gmra.mxu0 0
    %v2111 = vpop.f32.mrf.mxu0
    %v2112 = vadd.f32 %v2099, %v2111
    %v2113 = vpop.f32.mrf.mxu0
    %2114 = vdwg.mxu0
    %2115 = vmatpush.bf16.msra.mxu0 %v1890
    %2116 = vmatpush.bf16.msra.mxu0 %v1882
    %2117 = vmatpush.bf16.msra.mxu0 %v1874
    %2118 = vmatpush.bf16.msra.mxu0 %v1866
    %2119 = vmatpush.bf16.msra.mxu0 %v1858
    %2120 = vmatpush.bf16.msra.mxu0 %v1850
    %2121 = vmatpush.bf16.msra.mxu0 %v1842
    %2122 = vmatpush.bf16.msra.mxu0 %v1834
    %2123 = vmatmul.bf16.gmra.mxu0 0
    %v2124 = vpop.f32.mrf.mxu0
    %v2125 = vadd.f32 0.0, %v2124
    %v2126 = vpop.f32.mrf.mxu0
    %2127 = vdwg.mxu0
    %2128 = vmatpush.bf16.msra.mxu0 %v1954
    %2129 = vmatpush.bf16.msra.mxu0 %v1946
    %2130 = vmatpush.bf16.msra.mxu0 %v1938
    %2131 = vmatpush.bf16.msra.mxu0 %v1930
    %2132 = vmatpush.bf16.msra.mxu0 %v1922
    %2133 = vmatpush.bf16.msra.mxu0 %v1914
    %2134 = vmatpush.bf16.msra.mxu0 %v1906
    %2135 = vmatpush.bf16.msra.mxu0 %v1898
    %2136 = vmatmul.bf16.gmra.mxu0 0
    %v2137 = vpop.f32.mrf.mxu0
    %v2138 = vadd.f32 %v2125, %v2137
    %v2139 = vpop.f32.mrf.mxu0
    %2140 = vdwg.mxu0
    %2141 = vmatpush.bf16.msra.mxu0 %v1891
    %2142 = vmatpush.bf16.msra.mxu0 %v1883
    %2143 = vmatpush.bf16.msra.mxu0 %v1875
    %2144 = vmatpush.bf16.msra.mxu0 %v1867
    %2145 = vmatpush.bf16.msra.mxu0 %v1859
    %2146 = vmatpush.bf16.msra.mxu0 %v1851
    %2147 = vmatpush.bf16.msra.mxu0 %v1843
    %2148 = vmatpush.bf16.msra.mxu0 %v1835
    %2149 = vmatmul.bf16.gmra.mxu0 0
    %v2150 = vpop.f32.mrf.mxu0
    %v2151 = vadd.f32 0.0, %v2150
    %v2152 = vpop.f32.mrf.mxu0
    %2153 = vdwg.mxu0
    %2154 = vmatpush.bf16.msra.mxu0 %v1955
    %2155 = vmatpush.bf16.msra.mxu0 %v1947
    %2156 = vmatpush.bf16.msra.mxu0 %v1939
    %2157 = vmatpush.bf16.msra.mxu0 %v1931
    %2158 = vmatpush.bf16.msra.mxu0 %v1923
    %2159 = vmatpush.bf16.msra.mxu0 %v1915
    %2160 = vmatpush.bf16.msra.mxu0 %v1907
    %2161 = vmatpush.bf16.msra.mxu0 %v1899
    %2162 = vmatmul.bf16.gmra.mxu0 0
    %v2163 = vpop.f32.mrf.mxu0
    %v2164 = vadd.f32 %v2151, %v2163
    %v2165 = vpop.f32.mrf.mxu0
    %2166 = vdwg.mxu0
    %2167 = vmatpush.bf16.msra.mxu0 %v1892
    %2168 = vmatpush.bf16.msra.mxu0 %v1884
    %2169 = vmatpush.bf16.msra.mxu0 %v1876
    %2170 = vmatpush.bf16.msra.mxu0 %v1868
    %2171 = vmatpush.bf16.msra.mxu0 %v1860
    %2172 = vmatpush.bf16.msra.mxu0 %v1852
    %2173 = vmatpush.bf16.msra.mxu0 %v1844
    %2174 = vmatpush.bf16.msra.mxu0 %v1836
    %2175 = vmatmul.bf16.gmra.mxu0 0
    %v2176 = vpop.f32.mrf.mxu0
    %v2177 = vadd.f32 0.0, %v2176
    %v2178 = vpop.f32.mrf.mxu0
    %2179 = vdwg.mxu0
    %2180 = vmatpush.bf16.msra.mxu0 %v1956
    %2181 = vmatpush.bf16.msra.mxu0 %v1948
    %2182 = vmatpush.bf16.msra.mxu0 %v1940
    %2183 = vmatpush.bf16.msra.mxu0 %v1932
    %2184 = vmatpush.bf16.msra.mxu0 %v1924
    %2185 = vmatpush.bf16.msra.mxu0 %v1916
    %2186 = vmatpush.bf16.msra.mxu0 %v1908
    %2187 = vmatpush.bf16.msra.mxu0 %v1900
    %2188 = vmatmul.bf16.gmra.mxu0 0
    %v2189 = vpop.f32.mrf.mxu0
    %v2190 = vadd.f32 %v2177, %v2189
    %v2191 = vpop.f32.mrf.mxu0
    %2192 = vdwg.mxu0
    %2193 = vmatpush.bf16.msra.mxu0 %v1893
    %2194 = vmatpush.bf16.msra.mxu0 %v1885
    %2195 = vmatpush.bf16.msra.mxu0 %v1877
    %2196 = vmatpush.bf16.msra.mxu0 %v1869
    %2197 = vmatpush.bf16.msra.mxu0 %v1861
    %2198 = vmatpush.bf16.msra.mxu0 %v1853
    %2199 = vmatpush.bf16.msra.mxu0 %v1845
    %2200 = vmatpush.bf16.msra.mxu0 %v1837
    %2201 = vmatmul.bf16.gmra.mxu0 0
    %v2202 = vpop.f32.mrf.mxu0
    %v2203 = vadd.f32 0.0, %v2202
    %v2204 = vpop.f32.mrf.mxu0
    %2205 = vdwg.mxu0
    %2206 = vmatpush.bf16.msra.mxu0 %v1957
    %2207 = vmatpush.bf16.msra.mxu0 %v1949
    %2208 = vmatpush.bf16.msra.mxu0 %v1941
    %2209 = vmatpush.bf16.msra.mxu0 %v1933
    %2210 = vmatpush.bf16.msra.mxu0 %v1925
    %2211 = vmatpush.bf16.msra.mxu0 %v1917
    %2212 = vmatpush.bf16.msra.mxu0 %v1909
    %2213 = vmatpush.bf16.msra.mxu0 %v1901
    %2214 = vmatmul.bf16.gmra.mxu0 0
    %v2215 = vpop.f32.mrf.mxu0
    %v2216 = vadd.f32 %v2203, %v2215
    %v2217 = vpop.f32.mrf.mxu0
    %2218 = vdwg.mxu0
    %2219 = vmatpush.bf16.msra.mxu0 %v1894
    %2220 = vmatpush.bf16.msra.mxu0 %v1886
    %2221 = vmatpush.bf16.msra.mxu0 %v1878
    %2222 = vmatpush.bf16.msra.mxu0 %v1870
    %2223 = vmatpush.bf16.msra.mxu0 %v1862
    %2224 = vmatpush.bf16.msra.mxu0 %v1854
    %2225 = vmatpush.bf16.msra.mxu0 %v1846
    %2226 = vmatpush.bf16.msra.mxu0 %v1838
    %2227 = vmatmul.bf16.gmra.mxu0 0
    %v2228 = vpop.f32.mrf.mxu0
    %v2229 = vadd.f32 0.0, %v2228
    %v2230 = vpop.f32.mrf.mxu0
    %2231 = vdwg.mxu0
    %2232 = vmatpush.bf16.msra.mxu0 %v1958
    %2233 = vmatpush.bf16.msra.mxu0 %v1950
    %2234 = vmatpush.bf16.msra.mxu0 %v1942
    %2235 = vmatpush.bf16.msra.mxu0 %v1934
    %2236 = vmatpush.bf16.msra.mxu0 %v1926
    %2237 = vmatpush.bf16.msra.mxu0 %v1918
    %2238 = vmatpush.bf16.msra.mxu0 %v1910
    %2239 = vmatpush.bf16.msra.mxu0 %v1902
    %2240 = vmatmul.bf16.gmra.mxu0 0
    %v2241 = vpop.f32.mrf.mxu0
    %v2242 = vadd.f32 %v2229, %v2241
    %v2243 = vpop.f32.mrf.mxu0
    %2244 = vdwg.mxu0
    %2245 = vmatpush.bf16.msra.mxu0 %v1895
    %2246 = vmatpush.bf16.msra.mxu0 %v1887
    %2247 = vmatpush.bf16.msra.mxu0 %v1879
    %2248 = vmatpush.bf16.msra.mxu0 %v1871
    %2249 = vmatpush.bf16.msra.mxu0 %v1863
    %2250 = vmatpush.bf16.msra.mxu0 %v1855
    %2251 = vmatpush.bf16.msra.mxu0 %v1847
    %2252 = vmatpush.bf16.msra.mxu0 %v1839
    %2253 = vmatmul.bf16.gmra.mxu0 0
    %v2254 = vpop.f32.mrf.mxu0
    %v2255 = vadd.f32 0.0, %v2254
    %v2256 = vpop.f32.mrf.mxu0
    %2257 = vdwg.mxu0
    %2258 = vmatpush.bf16.msra.mxu0 %v1959
    %2259 = vmatpush.bf16.msra.mxu0 %v1951
    %2260 = vmatpush.bf16.msra.mxu0 %v1943
    %2261 = vmatpush.bf16.msra.mxu0 %v1935
    %2262 = vmatpush.bf16.msra.mxu0 %v1927
    %2263 = vmatpush.bf16.msra.mxu0 %v1919
    %2264 = vmatpush.bf16.msra.mxu0 %v1911
    %2265 = vmatpush.bf16.msra.mxu0 %v1903
    %2266 = vmatmul.bf16.gmra.mxu0 0
    %v2267 = vpop.f32.mrf.mxu0
    %v2268 = vadd.f32 %v2255, %v2267
    %v2269 = vpop.f32.mrf.mxu0
    %2270 = vdwg.mxu0
    %2271 = vmatpush.bf16.msra.mxu0 %v1896
    %2272 = vmatpush.bf16.msra.mxu0 %v1888
    %2273 = vmatpush.bf16.msra.mxu0 %v1880
    %2274 = vmatpush.bf16.msra.mxu0 %v1872
    %2275 = vmatpush.bf16.msra.mxu0 %v1864
    %2276 = vmatpush.bf16.msra.mxu0 %v1856
    %2277 = vmatpush.bf16.msra.mxu0 %v1848
    %2278 = vmatpush.bf16.msra.mxu0 %v1840
    %2279 = vmatmul.bf16.gmra.mxu0 0
    %v2280 = vpop.f32.mrf.mxu0
    %v2281 = vadd.f32 0.0, %v2280
    %v2282 = vpop.f32.mrf.mxu0
    %2283 = vdwg.mxu0
    %2284 = vmatpush.bf16.msra.mxu0 %v1960
    %2285 = vmatpush.bf16.msra.mxu0 %v1952
    %2286 = vmatpush.bf16.msra.mxu0 %v1944
    %2287 = vmatpush.bf16.msra.mxu0 %v1936
    %2288 = vmatpush.bf16.msra.mxu0 %v1928
    %2289 = vmatpush.bf16.msra.mxu0 %v1920
    %2290 = vmatpush.bf16.msra.mxu0 %v1912
    %2291 = vmatpush.bf16.msra.mxu0 %v1904
    %2292 = vmatmul.bf16.gmra.mxu0 0
    %v2293 = vpop.f32.mrf.mxu0
    %v2294 = vadd.f32 %v2281, %v2293
    %v2295 = vpop.f32.mrf.mxu0
    %2296 = vdwg.mxu0
    %v2297 = vadd.f32 %v1313, %v2112
    %v2298 = vadd.f32 %v1314, %v2138
    %v2299 = vadd.f32 %v1315, %v2164
    %v2300 = vadd.f32 %v1316, %v2190
    %v2301 = vadd.f32 %v1317, %v2216
    %v2302 = vadd.f32 %v1318, %v2242
    %v2303 = vadd.f32 %v1319, %v2268
    %v2304 = vadd.f32 %v1320, %v2294
    %v2305 = vxor.u32 %v2297, 2147483648
    %v2306 = vxor.u32 %v2298, 2147483648
    %v2307 = vxor.u32 %v2299, 2147483648
    %v2308 = vxor.u32 %v2300, 2147483648
    %v2309 = vxor.u32 %v2301, 2147483648
    %v2310 = vxor.u32 %v2302, 2147483648
    %v2311 = vmul.f32 %v2305, 1.442695
    %v2312 = vpow.pop %v2311
    %v2313 = vmul.f32 %v2306, 1.442695
    %v2314 = vpow.pop %v2313
    %v2315 = vmul.f32 %v2307, 1.442695
    %v2316 = vpow.pop %v2315
    %v2317 = vmul.f32 %v2308, 1.442695
    %v2318 = vpow.pop %v2317
    %v2319 = vmul.f32 %v2309, 1.442695
    %v2320 = vpow.pop %v2319
    %v2321 = vmul.f32 %v2310, 1.442695
    %v2322 = vpow.pop %v2321
    %v2323 = vadd.f32 %v2312, 1.0
    %v2324 = vadd.f32 %v2314, 1.0
    %v2325 = vadd.f32 %v2316, 1.0
    %v2326 = vadd.f32 %v2318, 1.0
    %v2327 = vadd.f32 %v2320, 1.0
    %v2328 = vadd.f32 %v2322, 1.0
    %v2329 = vrcp.pop %v2323
    %v2330 = vmul.f32 %v2323, %v2329
    %v2331 = vsub.f32 1.0, %v2330
    %v2332 = vmul.f32 %v2329, %v2331
    %v2333 = vadd.f32 %v2329, %v2332
    %vm2334 = vweird.f32 %v2323
    %vm2335 = vweird.f32 %v2329
    %vm2336 = vmor %vm2334, %vm2335
    %v2337 = vsel %vm2336, %v2329, %v2333
    %v2338 = vand.u32 2147483647, %v2323
    %vm2339 = vcmp.eq.f32.partialorder %v2338, 8.507059e+37
    %v2340 = vand.u32 %v2323, 2147483648
    %v2341 = vor.u32 1.1754944e-38, %v2340
    %v2342 = vsel %vm2339, %v2341, %v2337
    %v2343 = vmul.f32 1.0, %v2342
    %v2344 = vrcp.pop %v2324
    %v2345 = vmul.f32 %v2324, %v2344
    %v2346 = vsub.f32 1.0, %v2345
    %v2347 = vmul.f32 %v2344, %v2346
    %v2348 = vadd.f32 %v2344, %v2347
    %vm2349 = vweird.f32 %v2324
    %vm2350 = vweird.f32 %v2344
    %vm2351 = vmor %vm2349, %vm2350
    %v2352 = vsel %vm2351, %v2344, %v2348
    %v2353 = vand.u32 2147483647, %v2324
    %vm2354 = vcmp.eq.f32.partialorder %v2353, 8.507059e+37
    %v2355 = vand.u32 %v2324, 2147483648
    %v2356 = vor.u32 1.1754944e-38, %v2355
    %v2357 = vsel %vm2354, %v2356, %v2352
    %v2358 = vmul.f32 1.0, %v2357
    %v2359 = vrcp.pop %v2325
    %v2360 = vmul.f32 %v2325, %v2359
    %v2361 = vsub.f32 1.0, %v2360
    %v2362 = vmul.f32 %v2359, %v2361
    %v2363 = vadd.f32 %v2359, %v2362
    %vm2364 = vweird.f32 %v2325
    %vm2365 = vweird.f32 %v2359
    %vm2366 = vmor %vm2364, %vm2365
    %v2367 = vsel %vm2366, %v2359, %v2363
    %v2368 = vand.u32 2147483647, %v2325
    %vm2369 = vcmp.eq.f32.partialorder %v2368, 8.507059e+37
    %v2370 = vand.u32 %v2325, 2147483648
    %v2371 = vor.u32 1.1754944e-38, %v2370
    %v2372 = vsel %vm2369, %v2371, %v2367
    %v2373 = vmul.f32 1.0, %v2372
    %v2374 = vrcp.pop %v2326
    %v2375 = vmul.f32 %v2326, %v2374
    %v2376 = vsub.f32 1.0, %v2375
    %v2377 = vmul.f32 %v2374, %v2376
    %v2378 = vadd.f32 %v2374, %v2377
    %vm2379 = vweird.f32 %v2326
    %vm2380 = vweird.f32 %v2374
    %vm2381 = vmor %vm2379, %vm2380
    %v2382 = vsel %vm2381, %v2374, %v2378
    %v2383 = vand.u32 2147483647, %v2326
    %vm2384 = vcmp.eq.f32.partialorder %v2383, 8.507059e+37
    %v2385 = vand.u32 %v2326, 2147483648
    %v2386 = vor.u32 1.1754944e-38, %v2385
    %v2387 = vsel %vm2384, %v2386, %v2382
    %v2388 = vmul.f32 1.0, %v2387
    %v2389 = vrcp.pop %v2327
    %v2390 = vmul.f32 %v2327, %v2389
    %v2391 = vsub.f32 1.0, %v2390
    %v2392 = vmul.f32 %v2389, %v2391
    %v2393 = vadd.f32 %v2389, %v2392
    %vm2394 = vweird.f32 %v2327
    %vm2395 = vweird.f32 %v2389
    %vm2396 = vmor %vm2394, %vm2395
    %v2397 = vsel %vm2396, %v2389, %v2393
    %v2398 = vand.u32 2147483647, %v2327
    %vm2399 = vcmp.eq.f32.partialorder %v2398, 8.507059e+37
    %v2400 = vand.u32 %v2327, 2147483648
    %v2401 = vor.u32 1.1754944e-38, %v2400
    %v2402 = vsel %vm2399, %v2401, %v2397
    %v2403 = vmul.f32 1.0, %v2402
    %v2404 = vrcp.pop %v2328
    %v2405 = vmul.f32 %v2328, %v2404
    %v2406 = vsub.f32 1.0, %v2405
    %v2407 = vmul.f32 %v2404, %v2406
    %v2408 = vadd.f32 %v2404, %v2407
    %vm2409 = vweird.f32 %v2328
    %vm2410 = vweird.f32 %v2404
    %vm2411 = vmor %vm2409, %vm2410
    %v2412 = vsel %vm2411, %v2404, %v2408
    %v2413 = vand.u32 2147483647, %v2328
    %vm2414 = vcmp.eq.f32.partialorder %v2413, 8.507059e+37
    %v2415 = vand.u32 %v2328, 2147483648
    %v2416 = vor.u32 1.1754944e-38, %v2415
    %v2417 = vsel %vm2414, %v2416, %v2412
    %v2418 = vmul.f32 1.0, %v2417
    %v2419 = vtanh.pop %v2303
    %v2420 = vtanh.pop %v2304
    %v2421 = vmul.f32 %v2373, 0.0
    %v2422 = vmul.f32 %v2388, 0.0
    %v2423 = vmul.f32 %v2343, %v2419
    %v2424 = vmul.f32 %v2358, %v2420
    %v2425 = vadd.f32 %v2421, %v2423
    %v2426 = vadd.f32 %v2422, %v2424
    %v2427 = vtanh.pop %v2425
    %v2428 = vtanh.pop %v2426
    %v2429 = vmul.f32 %v2403, %v2427
    %v2430 = vmul.f32 %v2418, %v2428
    %s2431 = smul.u32 1, 8
    %s2432 = smul.addr %s2431, 8
    %s2433 = scalar_lea.vmem [#allocation2], %s2432
    %v2434 = vld [vmem:[%s2433] sm:$0xff]
    %v2435 = vld [vmem:[%s2433 + $0x8] sm:$0xff]
    %v2436 = vld [vmem:[%s2433 + $0x10] sm:$0xff]
    %v2437 = vld [vmem:[%s2433 + $0x18] sm:$0xff]
    %v2438 = vld [vmem:[%s2433 + $0x20] sm:$0xff]
    %v2439 = vld [vmem:[%s2433 + $0x28] sm:$0xff]
    %v2440 = vld [vmem:[%s2433 + $0x30] sm:$0xff]
    %v2441 = vld [vmem:[%s2433 + $0x38] sm:$0xff]
    %v2442 = vpack.c.bf16 %v2429, %v2429
    %v2443 = vpack.c.bf16 %v2430, %v2430
    %2444 = vmatpush.bf16.msra.mxu0 %v1889
    %2445 = vmatpush.bf16.msra.mxu0 %v1881
    %2446 = vmatpush.bf16.msra.mxu0 %v1873
    %2447 = vmatpush.bf16.msra.mxu0 %v1865
    %2448 = vmatpush.bf16.msra.mxu0 %v1857
    %2449 = vmatpush.bf16.msra.mxu0 %v1849
    %2450 = vmatpush.bf16.msra.mxu0 %v1841
    %2451 = vmatpush.bf16.msra.mxu0 %v1833
    %2452 = vmatmul.bf16.gmra.mxu0 %v2442
    %v2453 = vpop.f32.mrf.mxu0
    %v2454 = vadd.f32 0.0, %v2453
    %v2455 = vpop.f32.mrf.mxu0
    %2456 = vdwg.mxu0
    %2457 = vmatpush.bf16.msra.mxu0 %v1953
    %2458 = vmatpush.bf16.msra.mxu0 %v1945
    %2459 = vmatpush.bf16.msra.mxu0 %v1937
    %2460 = vmatpush.bf16.msra.mxu0 %v1929
    %2461 = vmatpush.bf16.msra.mxu0 %v1921
    %2462 = vmatpush.bf16.msra.mxu0 %v1913
    %2463 = vmatpush.bf16.msra.mxu0 %v1905
    %2464 = vmatpush.bf16.msra.mxu0 %v1897
    %2465 = vmatmul.bf16.gmra.mxu0 %v2443
    %v2466 = vpop.f32.mrf.mxu0
    %v2467 = vadd.f32 %v2454, %v2466
    %v2468 = vpop.f32.mrf.mxu0
    %2469 = vdwg.mxu0
    %2470 = vmatpush.bf16.msra.mxu0 %v1890
    %2471 = vmatpush.bf16.msra.mxu0 %v1882
    %2472 = vmatpush.bf16.msra.mxu0 %v1874
    %2473 = vmatpush.bf16.msra.mxu0 %v1866
    %2474 = vmatpush.bf16.msra.mxu0 %v1858
    %2475 = vmatpush.bf16.msra.mxu0 %v1850
    %2476 = vmatpush.bf16.msra.mxu0 %v1842
    %2477 = vmatpush.bf16.msra.mxu0 %v1834
    %2478 = vmatmul.bf16.gmra.mxu0 %v2442
    %v2479 = vpop.f32.mrf.mxu0
    %v2480 = vadd.f32 0.0, %v2479
    %v2481 = vpop.f32.mrf.mxu0
    %2482 = vdwg.mxu0
    %2483 = vmatpush.bf16.msra.mxu0 %v1954
    %2484 = vmatpush.bf16.msra.mxu0 %v1946
    %2485 = vmatpush.bf16.msra.mxu0 %v1938
    %2486 = vmatpush.bf16.msra.mxu0 %v1930
    %2487 = vmatpush.bf16.msra.mxu0 %v1922
    %2488 = vmatpush.bf16.msra.mxu0 %v1914
    %2489 = vmatpush.bf16.msra.mxu0 %v1906
    %2490 = vmatpush.bf16.msra.mxu0 %v1898
    %2491 = vmatmul.bf16.gmra.mxu0 %v2443
    %v2492 = vpop.f32.mrf.mxu0
    %v2493 = vadd.f32 %v2480, %v2492
    %v2494 = vpop.f32.mrf.mxu0
    %2495 = vdwg.mxu0
    %2496 = vmatpush.bf16.msra.mxu0 %v1891
    %2497 = vmatpush.bf16.msra.mxu0 %v1883
    %2498 = vmatpush.bf16.msra.mxu0 %v1875
    %2499 = vmatpush.bf16.msra.mxu0 %v1867
    %2500 = vmatpush.bf16.msra.mxu0 %v1859
    %2501 = vmatpush.bf16.msra.mxu0 %v1851
    %2502 = vmatpush.bf16.msra.mxu0 %v1843
    %2503 = vmatpush.bf16.msra.mxu0 %v1835
    %2504 = vmatmul.bf16.gmra.mxu0 %v2442
    %v2505 = vpop.f32.mrf.mxu0
    %v2506 = vadd.f32 0.0, %v2505
    %v2507 = vpop.f32.mrf.mxu0
    %2508 = vdwg.mxu0
    %2509 = vmatpush.bf16.msra.mxu0 %v1955
    %2510 = vmatpush.bf16.msra.mxu0 %v1947
    %2511 = vmatpush.bf16.msra.mxu0 %v1939
    %2512 = vmatpush.bf16.msra.mxu0 %v1931
    %2513 = vmatpush.bf16.msra.mxu0 %v1923
    %2514 = vmatpush.bf16.msra.mxu0 %v1915
    %2515 = vmatpush.bf16.msra.mxu0 %v1907
    %2516 = vmatpush.bf16.msra.mxu0 %v1899
    %2517 = vmatmul.bf16.gmra.mxu0 %v2443
    %v2518 = vpop.f32.mrf.mxu0
    %v2519 = vadd.f32 %v2506, %v2518
    %v2520 = vpop.f32.mrf.mxu0
    %2521 = vdwg.mxu0
    %2522 = vmatpush.bf16.msra.mxu0 %v1892
    %2523 = vmatpush.bf16.msra.mxu0 %v1884
    %2524 = vmatpush.bf16.msra.mxu0 %v1876
    %2525 = vmatpush.bf16.msra.mxu0 %v1868
    %2526 = vmatpush.bf16.msra.mxu0 %v1860
    %2527 = vmatpush.bf16.msra.mxu0 %v1852
    %2528 = vmatpush.bf16.msra.mxu0 %v1844
    %2529 = vmatpush.bf16.msra.mxu0 %v1836
    %2530 = vmatmul.bf16.gmra.mxu0 %v2442
    %v2531 = vpop.f32.mrf.mxu0
    %v2532 = vadd.f32 0.0, %v2531
    %v2533 = vpop.f32.mrf.mxu0
    %2534 = vdwg.mxu0
    %2535 = vmatpush.bf16.msra.mxu0 %v1956
    %2536 = vmatpush.bf16.msra.mxu0 %v1948
    %2537 = vmatpush.bf16.msra.mxu0 %v1940
    %2538 = vmatpush.bf16.msra.mxu0 %v1932
    %2539 = vmatpush.bf16.msra.mxu0 %v1924
    %2540 = vmatpush.bf16.msra.mxu0 %v1916
    %2541 = vmatpush.bf16.msra.mxu0 %v1908
    %2542 = vmatpush.bf16.msra.mxu0 %v1900
    %2543 = vmatmul.bf16.gmra.mxu0 %v2443
    %v2544 = vpop.f32.mrf.mxu0
    %v2545 = vadd.f32 %v2532, %v2544
    %v2546 = vpop.f32.mrf.mxu0
    %2547 = vdwg.mxu0
    %2548 = vmatpush.bf16.msra.mxu0 %v1893
    %2549 = vmatpush.bf16.msra.mxu0 %v1885
    %2550 = vmatpush.bf16.msra.mxu0 %v1877
    %2551 = vmatpush.bf16.msra.mxu0 %v1869
    %2552 = vmatpush.bf16.msra.mxu0 %v1861
    %2553 = vmatpush.bf16.msra.mxu0 %v1853
    %2554 = vmatpush.bf16.msra.mxu0 %v1845
    %2555 = vmatpush.bf16.msra.mxu0 %v1837
    %2556 = vmatmul.bf16.gmra.mxu0 %v2442
    %v2557 = vpop.f32.mrf.mxu0
    %v2558 = vadd.f32 0.0, %v2557
    %v2559 = vpop.f32.mrf.mxu0
    %2560 = vdwg.mxu0
    %2561 = vmatpush.bf16.msra.mxu0 %v1957
    %2562 = vmatpush.bf16.msra.mxu0 %v1949
    %2563 = vmatpush.bf16.msra.mxu0 %v1941
    %2564 = vmatpush.bf16.msra.mxu0 %v1933
    %2565 = vmatpush.bf16.msra.mxu0 %v1925
    %2566 = vmatpush.bf16.msra.mxu0 %v1917
    %2567 = vmatpush.bf16.msra.mxu0 %v1909
    %2568 = vmatpush.bf16.msra.mxu0 %v1901
    %2569 = vmatmul.bf16.gmra.mxu0 %v2443
    %v2570 = vpop.f32.mrf.mxu0
    %v2571 = vadd.f32 %v2558, %v2570
    %v2572 = vpop.f32.mrf.mxu0
    %2573 = vdwg.mxu0
    %2574 = vmatpush.bf16.msra.mxu0 %v1894
    %2575 = vmatpush.bf16.msra.mxu0 %v1886
    %2576 = vmatpush.bf16.msra.mxu0 %v1878
    %2577 = vmatpush.bf16.msra.mxu0 %v1870
    %2578 = vmatpush.bf16.msra.mxu0 %v1862
    %2579 = vmatpush.bf16.msra.mxu0 %v1854
    %2580 = vmatpush.bf16.msra.mxu0 %v1846
    %2581 = vmatpush.bf16.msra.mxu0 %v1838
    %2582 = vmatmul.bf16.gmra.mxu0 %v2442
    %v2583 = vpop.f32.mrf.mxu0
    %v2584 = vadd.f32 0.0, %v2583
    %v2585 = vpop.f32.mrf.mxu0
    %2586 = vdwg.mxu0
    %2587 = vmatpush.bf16.msra.mxu0 %v1958
    %2588 = vmatpush.bf16.msra.mxu0 %v1950
    %2589 = vmatpush.bf16.msra.mxu0 %v1942
    %2590 = vmatpush.bf16.msra.mxu0 %v1934
    %2591 = vmatpush.bf16.msra.mxu0 %v1926
    %2592 = vmatpush.bf16.msra.mxu0 %v1918
    %2593 = vmatpush.bf16.msra.mxu0 %v1910
    %2594 = vmatpush.bf16.msra.mxu0 %v1902
    %2595 = vmatmul.bf16.gmra.mxu0 %v2443
    %v2596 = vpop.f32.mrf.mxu0
    %v2597 = vadd.f32 %v2584, %v2596
    %v2598 = vpop.f32.mrf.mxu0
    %2599 = vdwg.mxu0
    %2600 = vmatpush.bf16.msra.mxu0 %v1895
    %2601 = vmatpush.bf16.msra.mxu0 %v1887
    %2602 = vmatpush.bf16.msra.mxu0 %v1879
    %2603 = vmatpush.bf16.msra.mxu0 %v1871
    %2604 = vmatpush.bf16.msra.mxu0 %v1863
    %2605 = vmatpush.bf16.msra.mxu0 %v1855
    %2606 = vmatpush.bf16.msra.mxu0 %v1847
    %2607 = vmatpush.bf16.msra.mxu0 %v1839
    %2608 = vmatmul.bf16.gmra.mxu0 %v2442
    %v2609 = vpop.f32.mrf.mxu0
    %v2610 = vadd.f32 0.0, %v2609
    %v2611 = vpop.f32.mrf.mxu0
    %2612 = vdwg.mxu0
    %2613 = vmatpush.bf16.msra.mxu0 %v1959
    %2614 = vmatpush.bf16.msra.mxu0 %v1951
    %2615 = vmatpush.bf16.msra.mxu0 %v1943
    %2616 = vmatpush.bf16.msra.mxu0 %v1935
    %2617 = vmatpush.bf16.msra.mxu0 %v1927
    %2618 = vmatpush.bf16.msra.mxu0 %v1919
    %2619 = vmatpush.bf16.msra.mxu0 %v1911
    %2620 = vmatpush.bf16.msra.mxu0 %v1903
    %2621 = vmatmul.bf16.gmra.mxu0 %v2443
    %v2622 = vpop.f32.mrf.mxu0
    %v2623 = vadd.f32 %v2610, %v2622
    %v2624 = vpop.f32.mrf.mxu0
    %2625 = vdwg.mxu0
    %2626 = vmatpush.bf16.msra.mxu0 %v1896
    %2627 = vmatpush.bf16.msra.mxu0 %v1888
    %2628 = vmatpush.bf16.msra.mxu0 %v1880
    %2629 = vmatpush.bf16.msra.mxu0 %v1872
    %2630 = vmatpush.bf16.msra.mxu0 %v1864
    %2631 = vmatpush.bf16.msra.mxu0 %v1856
    %2632 = vmatpush.bf16.msra.mxu0 %v1848
    %2633 = vmatpush.bf16.msra.mxu0 %v1840
    %2634 = vmatmul.bf16.gmra.mxu0 %v2442
    %v2635 = vpop.f32.mrf.mxu0
    %v2636 = vadd.f32 0.0, %v2635
    %v2637 = vpop.f32.mrf.mxu0
    %2638 = vdwg.mxu0
    %2639 = vmatpush.bf16.msra.mxu0 %v1960
    %2640 = vmatpush.bf16.msra.mxu0 %v1952
    %2641 = vmatpush.bf16.msra.mxu0 %v1944
    %2642 = vmatpush.bf16.msra.mxu0 %v1936
    %2643 = vmatpush.bf16.msra.mxu0 %v1928
    %2644 = vmatpush.bf16.msra.mxu0 %v1920
    %2645 = vmatpush.bf16.msra.mxu0 %v1912
    %2646 = vmatpush.bf16.msra.mxu0 %v1904
    %2647 = vmatmul.bf16.gmra.mxu0 %v2443
    %v2648 = vpop.f32.mrf.mxu0
    %v2649 = vadd.f32 %v2636, %v2648
    %v2650 = vpop.f32.mrf.mxu0
    %2651 = vdwg.mxu0
    %v2652 = vadd.f32 %v2434, %v2467
    %v2653 = vadd.f32 %v2435, %v2493
    %v2654 = vadd.f32 %v2436, %v2519
    %v2655 = vadd.f32 %v2437, %v2545
    %v2656 = vadd.f32 %v2438, %v2571
    %v2657 = vadd.f32 %v2439, %v2597
    %v2658 = vadd.f32 %v2440, %v2623
    %v2659 = vadd.f32 %v2441, %v2649
    %v2660 = vxor.u32 %v2652, 2147483648
    %v2661 = vxor.u32 %v2653, 2147483648
    %v2662 = vxor.u32 %v2654, 2147483648
    %v2663 = vxor.u32 %v2655, 2147483648
    %v2664 = vxor.u32 %v2656, 2147483648
    %v2665 = vxor.u32 %v2657, 2147483648
    %v2666 = vmul.f32 %v2660, 1.442695
    %v2667 = vpow.pop %v2666
    %v2668 = vmul.f32 %v2661, 1.442695
    %v2669 = vpow.pop %v2668
    %v2670 = vmul.f32 %v2662, 1.442695
    %v2671 = vpow.pop %v2670
    %v2672 = vmul.f32 %v2663, 1.442695
    %v2673 = vpow.pop %v2672
    %v2674 = vmul.f32 %v2664, 1.442695
    %v2675 = vpow.pop %v2674
    %v2676 = vmul.f32 %v2665, 1.442695
    %v2677 = vpow.pop %v2676
    %v2678 = vadd.f32 %v2667, 1.0
    %v2679 = vadd.f32 %v2669, 1.0
    %v2680 = vadd.f32 %v2671, 1.0
    %v2681 = vadd.f32 %v2673, 1.0
    %v2682 = vadd.f32 %v2675, 1.0
    %v2683 = vadd.f32 %v2677, 1.0
    %v2684 = vrcp.pop %v2678
    %v2685 = vmul.f32 %v2678, %v2684
    %v2686 = vsub.f32 1.0, %v2685
    %v2687 = vmul.f32 %v2684, %v2686
    %v2688 = vadd.f32 %v2684, %v2687
    %vm2689 = vweird.f32 %v2678
    %vm2690 = vweird.f32 %v2684
    %vm2691 = vmor %vm2689, %vm2690
    %v2692 = vsel %vm2691, %v2684, %v2688
    %v2693 = vand.u32 2147483647, %v2678
    %vm2694 = vcmp.eq.f32.partialorder %v2693, 8.507059e+37
    %v2695 = vand.u32 %v2678, 2147483648
    %v2696 = vor.u32 1.1754944e-38, %v2695
    %v2697 = vsel %vm2694, %v2696, %v2692
    %v2698 = vmul.f32 1.0, %v2697
    %v2699 = vrcp.pop %v2679
    %v2700 = vmul.f32 %v2679, %v2699
    %v2701 = vsub.f32 1.0, %v2700
    %v2702 = vmul.f32 %v2699, %v2701
    %v2703 = vadd.f32 %v2699, %v2702
    %vm2704 = vweird.f32 %v2679
    %vm2705 = vweird.f32 %v2699
    %vm2706 = vmor %vm2704, %vm2705
    %v2707 = vsel %vm2706, %v2699, %v2703
    %v2708 = vand.u32 2147483647, %v2679
    %vm2709 = vcmp.eq.f32.partialorder %v2708, 8.507059e+37
    %v2710 = vand.u32 %v2679, 2147483648
    %v2711 = vor.u32 1.1754944e-38, %v2710
    %v2712 = vsel %vm2709, %v2711, %v2707
    %v2713 = vmul.f32 1.0, %v2712
    %v2714 = vrcp.pop %v2680
    %v2715 = vmul.f32 %v2680, %v2714
    %v2716 = vsub.f32 1.0, %v2715
    %v2717 = vmul.f32 %v2714, %v2716
    %v2718 = vadd.f32 %v2714, %v2717
    %vm2719 = vweird.f32 %v2680
    %vm2720 = vweird.f32 %v2714
    %vm2721 = vmor %vm2719, %vm2720
    %v2722 = vsel %vm2721, %v2714, %v2718
    %v2723 = vand.u32 2147483647, %v2680
    %vm2724 = vcmp.eq.f32.partialorder %v2723, 8.507059e+37
    %v2725 = vand.u32 %v2680, 2147483648
    %v2726 = vor.u32 1.1754944e-38, %v2725
    %v2727 = vsel %vm2724, %v2726, %v2722
    %v2728 = vmul.f32 1.0, %v2727
    %v2729 = vrcp.pop %v2681
    %v2730 = vmul.f32 %v2681, %v2729
    %v2731 = vsub.f32 1.0, %v2730
    %v2732 = vmul.f32 %v2729, %v2731
    %v2733 = vadd.f32 %v2729, %v2732
    %vm2734 = vweird.f32 %v2681
    %vm2735 = vweird.f32 %v2729
    %vm2736 = vmor %vm2734, %vm2735
    %v2737 = vsel %vm2736, %v2729, %v2733
    %v2738 = vand.u32 2147483647, %v2681
    %vm2739 = vcmp.eq.f32.partialorder %v2738, 8.507059e+37
    %v2740 = vand.u32 %v2681, 2147483648
    %v2741 = vor.u32 1.1754944e-38, %v2740
    %v2742 = vsel %vm2739, %v2741, %v2737
    %v2743 = vmul.f32 1.0, %v2742
    %v2744 = vrcp.pop %v2682
    %v2745 = vmul.f32 %v2682, %v2744
    %v2746 = vsub.f32 1.0, %v2745
    %v2747 = vmul.f32 %v2744, %v2746
    %v2748 = vadd.f32 %v2744, %v2747
    %vm2749 = vweird.f32 %v2682
    %vm2750 = vweird.f32 %v2744
    %vm2751 = vmor %vm2749, %vm2750
    %v2752 = vsel %vm2751, %v2744, %v2748
    %v2753 = vand.u32 2147483647, %v2682
    %vm2754 = vcmp.eq.f32.partialorder %v2753, 8.507059e+37
    %v2755 = vand.u32 %v2682, 2147483648
    %v2756 = vor.u32 1.1754944e-38, %v2755
    %v2757 = vsel %vm2754, %v2756, %v2752
    %v2758 = vmul.f32 1.0, %v2757
    %v2759 = vrcp.pop %v2683
    %v2760 = vmul.f32 %v2683, %v2759
    %v2761 = vsub.f32 1.0, %v2760
    %v2762 = vmul.f32 %v2759, %v2761
    %v2763 = vadd.f32 %v2759, %v2762
    %vm2764 = vweird.f32 %v2683
    %vm2765 = vweird.f32 %v2759
    %vm2766 = vmor %vm2764, %vm2765
    %v2767 = vsel %vm2766, %v2759, %v2763
    %v2768 = vand.u32 2147483647, %v2683
    %vm2769 = vcmp.eq.f32.partialorder %v2768, 8.507059e+37
    %v2770 = vand.u32 %v2683, 2147483648
    %v2771 = vor.u32 1.1754944e-38, %v2770
    %v2772 = vsel %vm2769, %v2771, %v2767
    %v2773 = vmul.f32 1.0, %v2772
    %v2774 = vtanh.pop %v2658
    %v2775 = vtanh.pop %v2659
    %v2776 = vmul.f32 %v2728, %v2425
    %v2777 = vmul.f32 %v2743, %v2426
    %v2778 = vmul.f32 %v2698, %v2774
    %v2779 = vmul.f32 %v2713, %v2775
    %v2780 = vadd.f32 %v2776, %v2778
    %v2781 = vadd.f32 %v2777, %v2779
    %v2782 = vtanh.pop %v2780
    %v2783 = vtanh.pop %v2781
    %v2784 = vmul.f32 %v2758, %v2782
    %v2785 = vmul.f32 %v2773, %v2783
    %s2786 = smul.u32 2, 8
    %s2787 = smul.addr %s2786, 8
    %s2788 = scalar_lea.vmem [#allocation2], %s2787
    %v2789 = vld [vmem:[%s2788] sm:$0xff]
    %v2790 = vld [vmem:[%s2788 + $0x8] sm:$0xff]
    %v2791 = vld [vmem:[%s2788 + $0x10] sm:$0xff]
    %v2792 = vld [vmem:[%s2788 + $0x18] sm:$0xff]
    %v2793 = vld [vmem:[%s2788 + $0x20] sm:$0xff]
    %v2794 = vld [vmem:[%s2788 + $0x28] sm:$0xff]
    %v2795 = vld [vmem:[%s2788 + $0x30] sm:$0xff]
    %v2796 = vld [vmem:[%s2788 + $0x38] sm:$0xff]
    %v2797 = vpack.c.bf16 %v2784, %v2784
    %v2798 = vpack.c.bf16 %v2785, %v2785
    %2799 = vmatpush.bf16.msra.mxu0 %v1889
    %2800 = vmatpush.bf16.msra.mxu0 %v1881
    %2801 = vmatpush.bf16.msra.mxu0 %v1873
    %2802 = vmatpush.bf16.msra.mxu0 %v1865
    %2803 = vmatpush.bf16.msra.mxu0 %v1857
    %2804 = vmatpush.bf16.msra.mxu0 %v1849
    %2805 = vmatpush.bf16.msra.mxu0 %v1841
    %2806 = vmatpush.bf16.msra.mxu0 %v1833
    %2807 = vmatmul.bf16.gmra.mxu0 %v2797
    %v2808 = vpop.f32.mrf.mxu0
    %v2809 = vadd.f32 0.0, %v2808
    %v2810 = vpop.f32.mrf.mxu0
    %2811 = vdwg.mxu0
    %2812 = vmatpush.bf16.msra.mxu0 %v1953
    %2813 = vmatpush.bf16.msra.mxu0 %v1945
    %2814 = vmatpush.bf16.msra.mxu0 %v1937
    %2815 = vmatpush.bf16.msra.mxu0 %v1929
    %2816 = vmatpush.bf16.msra.mxu0 %v1921
    %2817 = vmatpush.bf16.msra.mxu0 %v1913
    %2818 = vmatpush.bf16.msra.mxu0 %v1905
    %2819 = vmatpush.bf16.msra.mxu0 %v1897
    %2820 = vmatmul.bf16.gmra.mxu0 %v2798
    %v2821 = vpop.f32.mrf.mxu0
    %v2822 = vadd.f32 %v2809, %v2821
    %v2823 = vpop.f32.mrf.mxu0
    %2824 = vdwg.mxu0
    %2825 = vmatpush.bf16.msra.mxu0 %v1890
    %2826 = vmatpush.bf16.msra.mxu0 %v1882
    %2827 = vmatpush.bf16.msra.mxu0 %v1874
    %2828 = vmatpush.bf16.msra.mxu0 %v1866
    %2829 = vmatpush.bf16.msra.mxu0 %v1858
    %2830 = vmatpush.bf16.msra.mxu0 %v1850
    %2831 = vmatpush.bf16.msra.mxu0 %v1842
    %2832 = vmatpush.bf16.msra.mxu0 %v1834
    %2833 = vmatmul.bf16.gmra.mxu0 %v2797
    %v2834 = vpop.f32.mrf.mxu0
    %v2835 = vadd.f32 0.0, %v2834
    %v2836 = vpop.f32.mrf.mxu0
    %2837 = vdwg.mxu0
    %2838 = vmatpush.bf16.msra.mxu0 %v1954
    %2839 = vmatpush.bf16.msra.mxu0 %v1946
    %2840 = vmatpush.bf16.msra.mxu0 %v1938
    %2841 = vmatpush.bf16.msra.mxu0 %v1930
    %2842 = vmatpush.bf16.msra.mxu0 %v1922
    %2843 = vmatpush.bf16.msra.mxu0 %v1914
    %2844 = vmatpush.bf16.msra.mxu0 %v1906
    %2845 = vmatpush.bf16.msra.mxu0 %v1898
    %2846 = vmatmul.bf16.gmra.mxu0 %v2798
    %v2847 = vpop.f32.mrf.mxu0
    %v2848 = vadd.f32 %v2835, %v2847
    %v2849 = vpop.f32.mrf.mxu0
    %2850 = vdwg.mxu0
    %2851 = vmatpush.bf16.msra.mxu0 %v1891
    %2852 = vmatpush.bf16.msra.mxu0 %v1883
    %2853 = vmatpush.bf16.msra.mxu0 %v1875
    %2854 = vmatpush.bf16.msra.mxu0 %v1867
    %2855 = vmatpush.bf16.msra.mxu0 %v1859
    %2856 = vmatpush.bf16.msra.mxu0 %v1851
    %2857 = vmatpush.bf16.msra.mxu0 %v1843
    %2858 = vmatpush.bf16.msra.mxu0 %v1835
    %2859 = vmatmul.bf16.gmra.mxu0 %v2797
    %v2860 = vpop.f32.mrf.mxu0
    %v2861 = vadd.f32 0.0, %v2860
    %v2862 = vpop.f32.mrf.mxu0
    %2863 = vdwg.mxu0
    %2864 = vmatpush.bf16.msra.mxu0 %v1955
    %2865 = vmatpush.bf16.msra.mxu0 %v1947
    %2866 = vmatpush.bf16.msra.mxu0 %v1939
    %2867 = vmatpush.bf16.msra.mxu0 %v1931
    %2868 = vmatpush.bf16.msra.mxu0 %v1923
    %2869 = vmatpush.bf16.msra.mxu0 %v1915
    %2870 = vmatpush.bf16.msra.mxu0 %v1907
    %2871 = vmatpush.bf16.msra.mxu0 %v1899
    %2872 = vmatmul.bf16.gmra.mxu0 %v2798
    %v2873 = vpop.f32.mrf.mxu0
    %v2874 = vadd.f32 %v2861, %v2873
    %v2875 = vpop.f32.mrf.mxu0
    %2876 = vdwg.mxu0
    %2877 = vmatpush.bf16.msra.mxu0 %v1892
    %2878 = vmatpush.bf16.msra.mxu0 %v1884
    %2879 = vmatpush.bf16.msra.mxu0 %v1876
    %2880 = vmatpush.bf16.msra.mxu0 %v1868
    %2881 = vmatpush.bf16.msra.mxu0 %v1860
    %2882 = vmatpush.bf16.msra.mxu0 %v1852
    %2883 = vmatpush.bf16.msra.mxu0 %v1844
    %2884 = vmatpush.bf16.msra.mxu0 %v1836
    %2885 = vmatmul.bf16.gmra.mxu0 %v2797
    %v2886 = vpop.f32.mrf.mxu0
    %v2887 = vadd.f32 0.0, %v2886
    %v2888 = vpop.f32.mrf.mxu0
    %2889 = vdwg.mxu0
    %2890 = vmatpush.bf16.msra.mxu0 %v1956
    %2891 = vmatpush.bf16.msra.mxu0 %v1948
    %2892 = vmatpush.bf16.msra.mxu0 %v1940
    %2893 = vmatpush.bf16.msra.mxu0 %v1932
    %2894 = vmatpush.bf16.msra.mxu0 %v1924
    %2895 = vmatpush.bf16.msra.mxu0 %v1916
    %2896 = vmatpush.bf16.msra.mxu0 %v1908
    %2897 = vmatpush.bf16.msra.mxu0 %v1900
    %2898 = vmatmul.bf16.gmra.mxu0 %v2798
    %v2899 = vpop.f32.mrf.mxu0
    %v2900 = vadd.f32 %v2887, %v2899
    %v2901 = vpop.f32.mrf.mxu0
    %2902 = vdwg.mxu0
    %2903 = vmatpush.bf16.msra.mxu0 %v1893
    %2904 = vmatpush.bf16.msra.mxu0 %v1885
    %2905 = vmatpush.bf16.msra.mxu0 %v1877
    %2906 = vmatpush.bf16.msra.mxu0 %v1869
    %2907 = vmatpush.bf16.msra.mxu0 %v1861
    %2908 = vmatpush.bf16.msra.mxu0 %v1853
    %2909 = vmatpush.bf16.msra.mxu0 %v1845
    %2910 = vmatpush.bf16.msra.mxu0 %v1837
    %2911 = vmatmul.bf16.gmra.mxu0 %v2797
    %v2912 = vpop.f32.mrf.mxu0
    %v2913 = vadd.f32 0.0, %v2912
    %v2914 = vpop.f32.mrf.mxu0
    %2915 = vdwg.mxu0
    %2916 = vmatpush.bf16.msra.mxu0 %v1957
    %2917 = vmatpush.bf16.msra.mxu0 %v1949
    %2918 = vmatpush.bf16.msra.mxu0 %v1941
    %2919 = vmatpush.bf16.msra.mxu0 %v1933
    %2920 = vmatpush.bf16.msra.mxu0 %v1925
    %2921 = vmatpush.bf16.msra.mxu0 %v1917
    %2922 = vmatpush.bf16.msra.mxu0 %v1909
    %2923 = vmatpush.bf16.msra.mxu0 %v1901
    %2924 = vmatmul.bf16.gmra.mxu0 %v2798
    %v2925 = vpop.f32.mrf.mxu0
    %v2926 = vadd.f32 %v2913, %v2925
    %v2927 = vpop.f32.mrf.mxu0
    %2928 = vdwg.mxu0
    %2929 = vmatpush.bf16.msra.mxu0 %v1894
    %2930 = vmatpush.bf16.msra.mxu0 %v1886
    %2931 = vmatpush.bf16.msra.mxu0 %v1878
    %2932 = vmatpush.bf16.msra.mxu0 %v1870
    %2933 = vmatpush.bf16.msra.mxu0 %v1862
    %2934 = vmatpush.bf16.msra.mxu0 %v1854
    %2935 = vmatpush.bf16.msra.mxu0 %v1846
    %2936 = vmatpush.bf16.msra.mxu0 %v1838
    %2937 = vmatmul.bf16.gmra.mxu0 %v2797
    %v2938 = vpop.f32.mrf.mxu0
    %v2939 = vadd.f32 0.0, %v2938
    %v2940 = vpop.f32.mrf.mxu0
    %2941 = vdwg.mxu0
    %2942 = vmatpush.bf16.msra.mxu0 %v1958
    %2943 = vmatpush.bf16.msra.mxu0 %v1950
    %2944 = vmatpush.bf16.msra.mxu0 %v1942
    %2945 = vmatpush.bf16.msra.mxu0 %v1934
    %2946 = vmatpush.bf16.msra.mxu0 %v1926
    %2947 = vmatpush.bf16.msra.mxu0 %v1918
    %2948 = vmatpush.bf16.msra.mxu0 %v1910
    %2949 = vmatpush.bf16.msra.mxu0 %v1902
    %2950 = vmatmul.bf16.gmra.mxu0 %v2798
    %v2951 = vpop.f32.mrf.mxu0
    %v2952 = vadd.f32 %v2939, %v2951
    %v2953 = vpop.f32.mrf.mxu0
    %2954 = vdwg.mxu0
    %2955 = vmatpush.bf16.msra.mxu0 %v1895
    %2956 = vmatpush.bf16.msra.mxu0 %v1887
    %2957 = vmatpush.bf16.msra.mxu0 %v1879
    %2958 = vmatpush.bf16.msra.mxu0 %v1871
    %2959 = vmatpush.bf16.msra.mxu0 %v1863
    %2960 = vmatpush.bf16.msra.mxu0 %v1855
    %2961 = vmatpush.bf16.msra.mxu0 %v1847
    %2962 = vmatpush.bf16.msra.mxu0 %v1839
    %2963 = vmatmul.bf16.gmra.mxu0 %v2797
    %v2964 = vpop.f32.mrf.mxu0
    %v2965 = vadd.f32 0.0, %v2964
    %v2966 = vpop.f32.mrf.mxu0
    %2967 = vdwg.mxu0
    %2968 = vmatpush.bf16.msra.mxu0 %v1959
    %2969 = vmatpush.bf16.msra.mxu0 %v1951
    %2970 = vmatpush.bf16.msra.mxu0 %v1943
    %2971 = vmatpush.bf16.msra.mxu0 %v1935
    %2972 = vmatpush.bf16.msra.mxu0 %v1927
    %2973 = vmatpush.bf16.msra.mxu0 %v1919
    %2974 = vmatpush.bf16.msra.mxu0 %v1911
    %2975 = vmatpush.bf16.msra.mxu0 %v1903
    %2976 = vmatmul.bf16.gmra.mxu0 %v2798
    %v2977 = vpop.f32.mrf.mxu0
    %v2978 = vadd.f32 %v2965, %v2977
    %v2979 = vpop.f32.mrf.mxu0
    %2980 = vdwg.mxu0
    %2981 = vmatpush.bf16.msra.mxu0 %v1896
    %2982 = vmatpush.bf16.msra.mxu0 %v1888
    %2983 = vmatpush.bf16.msra.mxu0 %v1880
    %2984 = vmatpush.bf16.msra.mxu0 %v1872
    %2985 = vmatpush.bf16.msra.mxu0 %v1864
    %2986 = vmatpush.bf16.msra.mxu0 %v1856
    %2987 = vmatpush.bf16.msra.mxu0 %v1848
    %2988 = vmatpush.bf16.msra.mxu0 %v1840
    %2989 = vmatmul.bf16.gmra.mxu0 %v2797
    %v2990 = vpop.f32.mrf.mxu0
    %v2991 = vadd.f32 0.0, %v2990
    %v2992 = vpop.f32.mrf.mxu0
    %2993 = vdwg.mxu0
    %2994 = vmatpush.bf16.msra.mxu0 %v1960
    %2995 = vmatpush.bf16.msra.mxu0 %v1952
    %2996 = vmatpush.bf16.msra.mxu0 %v1944
    %2997 = vmatpush.bf16.msra.mxu0 %v1936
    %2998 = vmatpush.bf16.msra.mxu0 %v1928
    %2999 = vmatpush.bf16.msra.mxu0 %v1920
    %3000 = vmatpush.bf16.msra.mxu0 %v1912
    %3001 = vmatpush.bf16.msra.mxu0 %v1904
    %3002 = vmatmul.bf16.gmra.mxu0 %v2798
    %v3003 = vpop.f32.mrf.mxu0
    %v3004 = vadd.f32 %v2991, %v3003
    %v3005 = vpop.f32.mrf.mxu0
    %3006 = vdwg.mxu0
    %v3007 = vadd.f32 %v2789, %v2822
    %v3008 = vadd.f32 %v2790, %v2848
    %v3009 = vadd.f32 %v2791, %v2874
    %v3010 = vadd.f32 %v2792, %v2900
    %v3011 = vadd.f32 %v2793, %v2926
    %v3012 = vadd.f32 %v2794, %v2952
    %v3013 = vadd.f32 %v2795, %v2978
    %v3014 = vadd.f32 %v2796, %v3004
    %v3015 = vxor.u32 %v3007, 2147483648
    %v3016 = vxor.u32 %v3008, 2147483648
    %v3017 = vxor.u32 %v3009, 2147483648
    %v3018 = vxor.u32 %v3010, 2147483648
    %v3019 = vxor.u32 %v3011, 2147483648
    %v3020 = vxor.u32 %v3012, 2147483648
    %v3021 = vmul.f32 %v3015, 1.442695
    %v3022 = vpow.pop %v3021
    %v3023 = vmul.f32 %v3016, 1.442695
    %v3024 = vpow.pop %v3023
    %v3025 = vmul.f32 %v3017, 1.442695
    %v3026 = vpow.pop %v3025
    %v3027 = vmul.f32 %v3018, 1.442695
    %v3028 = vpow.pop %v3027
    %v3029 = vmul.f32 %v3019, 1.442695
    %v3030 = vpow.pop %v3029
    %v3031 = vmul.f32 %v3020, 1.442695
    %v3032 = vpow.pop %v3031
    %v3033 = vadd.f32 %v3022, 1.0
    %v3034 = vadd.f32 %v3024, 1.0
    %v3035 = vadd.f32 %v3026, 1.0
    %v3036 = vadd.f32 %v3028, 1.0
    %v3037 = vadd.f32 %v3030, 1.0
    %v3038 = vadd.f32 %v3032, 1.0
    %v3039 = vrcp.pop %v3033
    %v3040 = vmul.f32 %v3033, %v3039
    %v3041 = vsub.f32 1.0, %v3040
    %v3042 = vmul.f32 %v3039, %v3041
    %v3043 = vadd.f32 %v3039, %v3042
    %vm3044 = vweird.f32 %v3033
    %vm3045 = vweird.f32 %v3039
    %vm3046 = vmor %vm3044, %vm3045
    %v3047 = vsel %vm3046, %v3039, %v3043
    %v3048 = vand.u32 2147483647, %v3033
    %vm3049 = vcmp.eq.f32.partialorder %v3048, 8.507059e+37
    %v3050 = vand.u32 %v3033, 2147483648
    %v3051 = vor.u32 1.1754944e-38, %v3050
    %v3052 = vsel %vm3049, %v3051, %v3047
    %v3053 = vmul.f32 1.0, %v3052
    %v3054 = vrcp.pop %v3034
    %v3055 = vmul.f32 %v3034, %v3054
    %v3056 = vsub.f32 1.0, %v3055
    %v3057 = vmul.f32 %v3054, %v3056
    %v3058 = vadd.f32 %v3054, %v3057
    %vm3059 = vweird.f32 %v3034
    %vm3060 = vweird.f32 %v3054
    %vm3061 = vmor %vm3059, %vm3060
    %v3062 = vsel %vm3061, %v3054, %v3058
    %v3063 = vand.u32 2147483647, %v3034
    %vm3064 = vcmp.eq.f32.partialorder %v3063, 8.507059e+37
    %v3065 = vand.u32 %v3034, 2147483648
    %v3066 = vor.u32 1.1754944e-38, %v3065
    %v3067 = vsel %vm3064, %v3066, %v3062
    %v3068 = vmul.f32 1.0, %v3067
    %v3069 = vrcp.pop %v3035
    %v3070 = vmul.f32 %v3035, %v3069
    %v3071 = vsub.f32 1.0, %v3070
    %v3072 = vmul.f32 %v3069, %v3071
    %v3073 = vadd.f32 %v3069, %v3072
    %vm3074 = vweird.f32 %v3035
    %vm3075 = vweird.f32 %v3069
    %vm3076 = vmor %vm3074, %vm3075
    %v3077 = vsel %vm3076, %v3069, %v3073
    %v3078 = vand.u32 2147483647, %v3035
    %vm3079 = vcmp.eq.f32.partialorder %v3078, 8.507059e+37
    %v3080 = vand.u32 %v3035, 2147483648
    %v3081 = vor.u32 1.1754944e-38, %v3080
    %v3082 = vsel %vm3079, %v3081, %v3077
    %v3083 = vmul.f32 1.0, %v3082
    %v3084 = vrcp.pop %v3036
    %v3085 = vmul.f32 %v3036, %v3084
    %v3086 = vsub.f32 1.0, %v3085
    %v3087 = vmul.f32 %v3084, %v3086
    %v3088 = vadd.f32 %v3084, %v3087
    %vm3089 = vweird.f32 %v3036
    %vm3090 = vweird.f32 %v3084
    %vm3091 = vmor %vm3089, %vm3090
    %v3092 = vsel %vm3091, %v3084, %v3088
    %v3093 = vand.u32 2147483647, %v3036
    %vm3094 = vcmp.eq.f32.partialorder %v3093, 8.507059e+37
    %v3095 = vand.u32 %v3036, 2147483648
    %v3096 = vor.u32 1.1754944e-38, %v3095
    %v3097 = vsel %vm3094, %v3096, %v3092
    %v3098 = vmul.f32 1.0, %v3097
    %v3099 = vrcp.pop %v3037
    %v3100 = vmul.f32 %v3037, %v3099
    %v3101 = vsub.f32 1.0, %v3100
    %v3102 = vmul.f32 %v3099, %v3101
    %v3103 = vadd.f32 %v3099, %v3102
    %vm3104 = vweird.f32 %v3037
    %vm3105 = vweird.f32 %v3099
    %vm3106 = vmor %vm3104, %vm3105
    %v3107 = vsel %vm3106, %v3099, %v3103
    %v3108 = vand.u32 2147483647, %v3037
    %vm3109 = vcmp.eq.f32.partialorder %v3108, 8.507059e+37
    %v3110 = vand.u32 %v3037, 2147483648
    %v3111 = vor.u32 1.1754944e-38, %v3110
    %v3112 = vsel %vm3109, %v3111, %v3107
    %v3113 = vmul.f32 1.0, %v3112
    %v3114 = vrcp.pop %v3038
    %v3115 = vmul.f32 %v3038, %v3114
    %v3116 = vsub.f32 1.0, %v3115
    %v3117 = vmul.f32 %v3114, %v3116
    %v3118 = vadd.f32 %v3114, %v3117
    %vm3119 = vweird.f32 %v3038
    %vm3120 = vweird.f32 %v3114
    %vm3121 = vmor %vm3119, %vm3120
    %v3122 = vsel %vm3121, %v3114, %v3118
    %v3123 = vand.u32 2147483647, %v3038
    %vm3124 = vcmp.eq.f32.partialorder %v3123, 8.507059e+37
    %v3125 = vand.u32 %v3038, 2147483648
    %v3126 = vor.u32 1.1754944e-38, %v3125
    %v3127 = vsel %vm3124, %v3126, %v3122
    %v3128 = vmul.f32 1.0, %v3127
    %v3129 = vtanh.pop %v3013
    %v3130 = vtanh.pop %v3014
    %v3131 = vmul.f32 %v3083, %v2780
    %v3132 = vmul.f32 %v3098, %v2781
    %v3133 = vmul.f32 %v3053, %v3129
    %v3134 = vmul.f32 %v3068, %v3130
    %v3135 = vadd.f32 %v3131, %v3133
    %v3136 = vadd.f32 %v3132, %v3134
    %v3137 = vtanh.pop %v3135
    %v3138 = vtanh.pop %v3136
    %v3139 = vmul.f32 %v3113, %v3137
    %v3140 = vmul.f32 %v3128, %v3138
    %s3141 = smul.u32 3, 8
    %s3142 = smul.addr %s3141, 8
    %s3143 = scalar_lea.vmem [#allocation2], %s3142
    %v3144 = vld [vmem:[%s3143] sm:$0xff]
    %v3145 = vld [vmem:[%s3143 + $0x8] sm:$0xff]
    %v3146 = vld [vmem:[%s3143 + $0x10] sm:$0xff]
    %v3147 = vld [vmem:[%s3143 + $0x18] sm:$0xff]
    %v3148 = vld [vmem:[%s3143 + $0x20] sm:$0xff]
    %v3149 = vld [vmem:[%s3143 + $0x28] sm:$0xff]
    %v3150 = vld [vmem:[%s3143 + $0x30] sm:$0xff]
    %v3151 = vld [vmem:[%s3143 + $0x38] sm:$0xff]
    %v3152 = vpack.c.bf16 %v3139, %v3139
    %v3153 = vpack.c.bf16 %v3140, %v3140
    %3154 = vmatpush.bf16.msra.mxu0 %v1889
    %3155 = vmatpush.bf16.msra.mxu0 %v1881
    %3156 = vmatpush.bf16.msra.mxu0 %v1873
    %3157 = vmatpush.bf16.msra.mxu0 %v1865
    %3158 = vmatpush.bf16.msra.mxu0 %v1857
    %3159 = vmatpush.bf16.msra.mxu0 %v1849
    %3160 = vmatpush.bf16.msra.mxu0 %v1841
    %3161 = vmatpush.bf16.msra.mxu0 %v1833
    %3162 = vmatmul.bf16.gmra.mxu0 %v3152
    %v3163 = vpop.f32.mrf.mxu0
    %v3164 = vadd.f32 0.0, %v3163
    %v3165 = vpop.f32.mrf.mxu0
    %3166 = vdwg.mxu0
    %3167 = vmatpush.bf16.msra.mxu0 %v1953
    %3168 = vmatpush.bf16.msra.mxu0 %v1945
    %3169 = vmatpush.bf16.msra.mxu0 %v1937
    %3170 = vmatpush.bf16.msra.mxu0 %v1929
    %3171 = vmatpush.bf16.msra.mxu0 %v1921
    %3172 = vmatpush.bf16.msra.mxu0 %v1913
    %3173 = vmatpush.bf16.msra.mxu0 %v1905
    %3174 = vmatpush.bf16.msra.mxu0 %v1897
    %3175 = vmatmul.bf16.gmra.mxu0 %v3153
    %v3176 = vpop.f32.mrf.mxu0
    %v3177 = vadd.f32 %v3164, %v3176
    %v3178 = vpop.f32.mrf.mxu0
    %3179 = vdwg.mxu0
    %3180 = vmatpush.bf16.msra.mxu0 %v1890
    %3181 = vmatpush.bf16.msra.mxu0 %v1882
    %3182 = vmatpush.bf16.msra.mxu0 %v1874
    %3183 = vmatpush.bf16.msra.mxu0 %v1866
    %3184 = vmatpush.bf16.msra.mxu0 %v1858
    %3185 = vmatpush.bf16.msra.mxu0 %v1850
    %3186 = vmatpush.bf16.msra.mxu0 %v1842
    %3187 = vmatpush.bf16.msra.mxu0 %v1834
    %3188 = vmatmul.bf16.gmra.mxu0 %v3152
    %v3189 = vpop.f32.mrf.mxu0
    %v3190 = vadd.f32 0.0, %v3189
    %v3191 = vpop.f32.mrf.mxu0
    %3192 = vdwg.mxu0
    %3193 = vmatpush.bf16.msra.mxu0 %v1954
    %3194 = vmatpush.bf16.msra.mxu0 %v1946
    %3195 = vmatpush.bf16.msra.mxu0 %v1938
    %3196 = vmatpush.bf16.msra.mxu0 %v1930
    %3197 = vmatpush.bf16.msra.mxu0 %v1922
    %3198 = vmatpush.bf16.msra.mxu0 %v1914
    %3199 = vmatpush.bf16.msra.mxu0 %v1906
    %3200 = vmatpush.bf16.msra.mxu0 %v1898
    %3201 = vmatmul.bf16.gmra.mxu0 %v3153
    %v3202 = vpop.f32.mrf.mxu0
    %v3203 = vadd.f32 %v3190, %v3202
    %v3204 = vpop.f32.mrf.mxu0
    %3205 = vdwg.mxu0
    %3206 = vmatpush.bf16.msra.mxu0 %v1891
    %3207 = vmatpush.bf16.msra.mxu0 %v1883
    %3208 = vmatpush.bf16.msra.mxu0 %v1875
    %3209 = vmatpush.bf16.msra.mxu0 %v1867
    %3210 = vmatpush.bf16.msra.mxu0 %v1859
    %3211 = vmatpush.bf16.msra.mxu0 %v1851
    %3212 = vmatpush.bf16.msra.mxu0 %v1843
    %3213 = vmatpush.bf16.msra.mxu0 %v1835
    %3214 = vmatmul.bf16.gmra.mxu0 %v3152
    %v3215 = vpop.f32.mrf.mxu0
    %v3216 = vadd.f32 0.0, %v3215
    %v3217 = vpop.f32.mrf.mxu0
    %3218 = vdwg.mxu0
    %3219 = vmatpush.bf16.msra.mxu0 %v1955
    %3220 = vmatpush.bf16.msra.mxu0 %v1947
    %3221 = vmatpush.bf16.msra.mxu0 %v1939
    %3222 = vmatpush.bf16.msra.mxu0 %v1931
    %3223 = vmatpush.bf16.msra.mxu0 %v1923
    %3224 = vmatpush.bf16.msra.mxu0 %v1915
    %3225 = vmatpush.bf16.msra.mxu0 %v1907
    %3226 = vmatpush.bf16.msra.mxu0 %v1899
    %3227 = vmatmul.bf16.gmra.mxu0 %v3153
    %v3228 = vpop.f32.mrf.mxu0
    %v3229 = vadd.f32 %v3216, %v3228
    %v3230 = vpop.f32.mrf.mxu0
    %3231 = vdwg.mxu0
    %3232 = vmatpush.bf16.msra.mxu0 %v1892
    %3233 = vmatpush.bf16.msra.mxu0 %v1884
    %3234 = vmatpush.bf16.msra.mxu0 %v1876
    %3235 = vmatpush.bf16.msra.mxu0 %v1868
    %3236 = vmatpush.bf16.msra.mxu0 %v1860
    %3237 = vmatpush.bf16.msra.mxu0 %v1852
    %3238 = vmatpush.bf16.msra.mxu0 %v1844
    %3239 = vmatpush.bf16.msra.mxu0 %v1836
    %3240 = vmatmul.bf16.gmra.mxu0 %v3152
    %v3241 = vpop.f32.mrf.mxu0
    %v3242 = vadd.f32 0.0, %v3241
    %v3243 = vpop.f32.mrf.mxu0
    %3244 = vdwg.mxu0
    %3245 = vmatpush.bf16.msra.mxu0 %v1956
    %3246 = vmatpush.bf16.msra.mxu0 %v1948
    %3247 = vmatpush.bf16.msra.mxu0 %v1940
    %3248 = vmatpush.bf16.msra.mxu0 %v1932
    %3249 = vmatpush.bf16.msra.mxu0 %v1924
    %3250 = vmatpush.bf16.msra.mxu0 %v1916
    %3251 = vmatpush.bf16.msra.mxu0 %v1908
    %3252 = vmatpush.bf16.msra.mxu0 %v1900
    %3253 = vmatmul.bf16.gmra.mxu0 %v3153
    %v3254 = vpop.f32.mrf.mxu0
    %v3255 = vadd.f32 %v3242, %v3254
    %v3256 = vpop.f32.mrf.mxu0
    %3257 = vdwg.mxu0
    %3258 = vmatpush.bf16.msra.mxu0 %v1893
    %3259 = vmatpush.bf16.msra.mxu0 %v1885
    %3260 = vmatpush.bf16.msra.mxu0 %v1877
    %3261 = vmatpush.bf16.msra.mxu0 %v1869
    %3262 = vmatpush.bf16.msra.mxu0 %v1861
    %3263 = vmatpush.bf16.msra.mxu0 %v1853
    %3264 = vmatpush.bf16.msra.mxu0 %v1845
    %3265 = vmatpush.bf16.msra.mxu0 %v1837
    %3266 = vmatmul.bf16.gmra.mxu0 %v3152
    %v3267 = vpop.f32.mrf.mxu0
    %v3268 = vadd.f32 0.0, %v3267
    %v3269 = vpop.f32.mrf.mxu0
    %3270 = vdwg.mxu0
    %3271 = vmatpush.bf16.msra.mxu0 %v1957
    %3272 = vmatpush.bf16.msra.mxu0 %v1949
    %3273 = vmatpush.bf16.msra.mxu0 %v1941
    %3274 = vmatpush.bf16.msra.mxu0 %v1933
    %3275 = vmatpush.bf16.msra.mxu0 %v1925
    %3276 = vmatpush.bf16.msra.mxu0 %v1917
    %3277 = vmatpush.bf16.msra.mxu0 %v1909
    %3278 = vmatpush.bf16.msra.mxu0 %v1901
    %3279 = vmatmul.bf16.gmra.mxu0 %v3153
    %v3280 = vpop.f32.mrf.mxu0
    %v3281 = vadd.f32 %v3268, %v3280
    %v3282 = vpop.f32.mrf.mxu0
    %3283 = vdwg.mxu0
    %3284 = vmatpush.bf16.msra.mxu0 %v1894
    %3285 = vmatpush.bf16.msra.mxu0 %v1886
    %3286 = vmatpush.bf16.msra.mxu0 %v1878
    %3287 = vmatpush.bf16.msra.mxu0 %v1870
    %3288 = vmatpush.bf16.msra.mxu0 %v1862
    %3289 = vmatpush.bf16.msra.mxu0 %v1854
    %3290 = vmatpush.bf16.msra.mxu0 %v1846
    %3291 = vmatpush.bf16.msra.mxu0 %v1838
    %3292 = vmatmul.bf16.gmra.mxu0 %v3152
    %v3293 = vpop.f32.mrf.mxu0
    %v3294 = vadd.f32 0.0, %v3293
    %v3295 = vpop.f32.mrf.mxu0
    %3296 = vdwg.mxu0
    %3297 = vmatpush.bf16.msra.mxu0 %v1958
    %3298 = vmatpush.bf16.msra.mxu0 %v1950
    %3299 = vmatpush.bf16.msra.mxu0 %v1942
    %3300 = vmatpush.bf16.msra.mxu0 %v1934
    %3301 = vmatpush.bf16.msra.mxu0 %v1926
    %3302 = vmatpush.bf16.msra.mxu0 %v1918
    %3303 = vmatpush.bf16.msra.mxu0 %v1910
    %3304 = vmatpush.bf16.msra.mxu0 %v1902
    %3305 = vmatmul.bf16.gmra.mxu0 %v3153
    %v3306 = vpop.f32.mrf.mxu0
    %v3307 = vadd.f32 %v3294, %v3306
    %v3308 = vpop.f32.mrf.mxu0
    %3309 = vdwg.mxu0
    %3310 = vmatpush.bf16.msra.mxu0 %v1895
    %3311 = vmatpush.bf16.msra.mxu0 %v1887
    %3312 = vmatpush.bf16.msra.mxu0 %v1879
    %3313 = vmatpush.bf16.msra.mxu0 %v1871
    %3314 = vmatpush.bf16.msra.mxu0 %v1863
    %3315 = vmatpush.bf16.msra.mxu0 %v1855
    %3316 = vmatpush.bf16.msra.mxu0 %v1847
    %3317 = vmatpush.bf16.msra.mxu0 %v1839
    %3318 = vmatmul.bf16.gmra.mxu0 %v3152
    %v3319 = vpop.f32.mrf.mxu0
    %v3320 = vadd.f32 0.0, %v3319
    %v3321 = vpop.f32.mrf.mxu0
    %3322 = vdwg.mxu0
    %3323 = vmatpush.bf16.msra.mxu0 %v1959
    %3324 = vmatpush.bf16.msra.mxu0 %v1951
    %3325 = vmatpush.bf16.msra.mxu0 %v1943
    %3326 = vmatpush.bf16.msra.mxu0 %v1935
    %3327 = vmatpush.bf16.msra.mxu0 %v1927
    %3328 = vmatpush.bf16.msra.mxu0 %v1919
    %3329 = vmatpush.bf16.msra.mxu0 %v1911
    %3330 = vmatpush.bf16.msra.mxu0 %v1903
    %3331 = vmatmul.bf16.gmra.mxu0 %v3153
    %v3332 = vpop.f32.mrf.mxu0
    %v3333 = vadd.f32 %v3320, %v3332
    %v3334 = vpop.f32.mrf.mxu0
    %3335 = vdwg.mxu0
    %3336 = vmatpush.bf16.msra.mxu0 %v1896
    %3337 = vmatpush.bf16.msra.mxu0 %v1888
    %3338 = vmatpush.bf16.msra.mxu0 %v1880
    %3339 = vmatpush.bf16.msra.mxu0 %v1872
    %3340 = vmatpush.bf16.msra.mxu0 %v1864
    %3341 = vmatpush.bf16.msra.mxu0 %v1856
    %3342 = vmatpush.bf16.msra.mxu0 %v1848
    %3343 = vmatpush.bf16.msra.mxu0 %v1840
    %3344 = vmatmul.bf16.gmra.mxu0 %v3152
    %v3345 = vpop.f32.mrf.mxu0
    %v3346 = vadd.f32 0.0, %v3345
    %v3347 = vpop.f32.mrf.mxu0
    %3348 = vdwg.mxu0
    %3349 = vmatpush.bf16.msra.mxu0 %v1960
    %3350 = vmatpush.bf16.msra.mxu0 %v1952
    %3351 = vmatpush.bf16.msra.mxu0 %v1944
    %3352 = vmatpush.bf16.msra.mxu0 %v1936
    %3353 = vmatpush.bf16.msra.mxu0 %v1928
    %3354 = vmatpush.bf16.msra.mxu0 %v1920
    %3355 = vmatpush.bf16.msra.mxu0 %v1912
    %3356 = vmatpush.bf16.msra.mxu0 %v1904
    %3357 = vmatmul.bf16.gmra.mxu0 %v3153
    %v3358 = vpop.f32.mrf.mxu0
    %v3359 = vadd.f32 %v3346, %v3358
    %v3360 = vpop.f32.mrf.mxu0
    %3361 = vdwg.mxu0
    %v3362 = vadd.f32 %v3144, %v3177
    %v3363 = vadd.f32 %v3145, %v3203
    %v3364 = vadd.f32 %v3146, %v3229
    %v3365 = vadd.f32 %v3147, %v3255
    %v3366 = vadd.f32 %v3148, %v3281
    %v3367 = vadd.f32 %v3149, %v3307
    %v3368 = vadd.f32 %v3150, %v3333
    %v3369 = vadd.f32 %v3151, %v3359
    %v3370 = vxor.u32 %v3362, 2147483648
    %v3371 = vxor.u32 %v3363, 2147483648
    %v3372 = vxor.u32 %v3364, 2147483648
    %v3373 = vxor.u32 %v3365, 2147483648
    %v3374 = vxor.u32 %v3366, 2147483648
    %v3375 = vxor.u32 %v3367, 2147483648
    %v3376 = vmul.f32 %v3370, 1.442695
    %v3377 = vpow.pop %v3376
    %v3378 = vmul.f32 %v3371, 1.442695
    %v3379 = vpow.pop %v3378
    %v3380 = vmul.f32 %v3372, 1.442695
    %v3381 = vpow.pop %v3380
    %v3382 = vmul.f32 %v3373, 1.442695
    %v3383 = vpow.pop %v3382
    %v3384 = vmul.f32 %v3374, 1.442695
    %v3385 = vpow.pop %v3384
    %v3386 = vmul.f32 %v3375, 1.442695
    %v3387 = vpow.pop %v3386
    %v3388 = vadd.f32 %v3377, 1.0
    %v3389 = vadd.f32 %v3379, 1.0
    %v3390 = vadd.f32 %v3381, 1.0
    %v3391 = vadd.f32 %v3383, 1.0
    %v3392 = vadd.f32 %v3385, 1.0
    %v3393 = vadd.f32 %v3387, 1.0
    %v3394 = vrcp.pop %v3388
    %v3395 = vmul.f32 %v3388, %v3394
    %v3396 = vsub.f32 1.0, %v3395
    %v3397 = vmul.f32 %v3394, %v3396
    %v3398 = vadd.f32 %v3394, %v3397
    %vm3399 = vweird.f32 %v3388
    %vm3400 = vweird.f32 %v3394
    %vm3401 = vmor %vm3399, %vm3400
    %v3402 = vsel %vm3401, %v3394, %v3398
    %v3403 = vand.u32 2147483647, %v3388
    %vm3404 = vcmp.eq.f32.partialorder %v3403, 8.507059e+37
    %v3405 = vand.u32 %v3388, 2147483648
    %v3406 = vor.u32 1.1754944e-38, %v3405
    %v3407 = vsel %vm3404, %v3406, %v3402
    %v3408 = vmul.f32 1.0, %v3407
    %v3409 = vrcp.pop %v3389
    %v3410 = vmul.f32 %v3389, %v3409
    %v3411 = vsub.f32 1.0, %v3410
    %v3412 = vmul.f32 %v3409, %v3411
    %v3413 = vadd.f32 %v3409, %v3412
    %vm3414 = vweird.f32 %v3389
    %vm3415 = vweird.f32 %v3409
    %vm3416 = vmor %vm3414, %vm3415
    %v3417 = vsel %vm3416, %v3409, %v3413
    %v3418 = vand.u32 2147483647, %v3389
    %vm3419 = vcmp.eq.f32.partialorder %v3418, 8.507059e+37
    %v3420 = vand.u32 %v3389, 2147483648
    %v3421 = vor.u32 1.1754944e-38, %v3420
    %v3422 = vsel %vm3419, %v3421, %v3417
    %v3423 = vmul.f32 1.0, %v3422
    %v3424 = vrcp.pop %v3390
    %v3425 = vmul.f32 %v3390, %v3424
    %v3426 = vsub.f32 1.0, %v3425
    %v3427 = vmul.f32 %v3424, %v3426
    %v3428 = vadd.f32 %v3424, %v3427
    %vm3429 = vweird.f32 %v3390
    %vm3430 = vweird.f32 %v3424
    %vm3431 = vmor %vm3429, %vm3430
    %v3432 = vsel %vm3431, %v3424, %v3428
    %v3433 = vand.u32 2147483647, %v3390
    %vm3434 = vcmp.eq.f32.partialorder %v3433, 8.507059e+37
    %v3435 = vand.u32 %v3390, 2147483648
    %v3436 = vor.u32 1.1754944e-38, %v3435
    %v3437 = vsel %vm3434, %v3436, %v3432
    %v3438 = vmul.f32 1.0, %v3437
    %v3439 = vrcp.pop %v3391
    %v3440 = vmul.f32 %v3391, %v3439
    %v3441 = vsub.f32 1.0, %v3440
    %v3442 = vmul.f32 %v3439, %v3441
    %v3443 = vadd.f32 %v3439, %v3442
    %vm3444 = vweird.f32 %v3391
    %vm3445 = vweird.f32 %v3439
    %vm3446 = vmor %vm3444, %vm3445
    %v3447 = vsel %vm3446, %v3439, %v3443
    %v3448 = vand.u32 2147483647, %v3391
    %vm3449 = vcmp.eq.f32.partialorder %v3448, 8.507059e+37
    %v3450 = vand.u32 %v3391, 2147483648
    %v3451 = vor.u32 1.1754944e-38, %v3450
    %v3452 = vsel %vm3449, %v3451, %v3447
    %v3453 = vmul.f32 1.0, %v3452
    %v3454 = vrcp.pop %v3392
    %v3455 = vmul.f32 %v3392, %v3454
    %v3456 = vsub.f32 1.0, %v3455
    %v3457 = vmul.f32 %v3454, %v3456
    %v3458 = vadd.f32 %v3454, %v3457
    %vm3459 = vweird.f32 %v3392
    %vm3460 = vweird.f32 %v3454
    %vm3461 = vmor %vm3459, %vm3460
    %v3462 = vsel %vm3461, %v3454, %v3458
    %v3463 = vand.u32 2147483647, %v3392
    %vm3464 = vcmp.eq.f32.partialorder %v3463, 8.507059e+37
    %v3465 = vand.u32 %v3392, 2147483648
    %v3466 = vor.u32 1.1754944e-38, %v3465
    %v3467 = vsel %vm3464, %v3466, %v3462
    %v3468 = vmul.f32 1.0, %v3467
    %v3469 = vrcp.pop %v3393
    %v3470 = vmul.f32 %v3393, %v3469
    %v3471 = vsub.f32 1.0, %v3470
    %v3472 = vmul.f32 %v3469, %v3471
    %v3473 = vadd.f32 %v3469, %v3472
    %vm3474 = vweird.f32 %v3393
    %vm3475 = vweird.f32 %v3469
    %vm3476 = vmor %vm3474, %vm3475
    %v3477 = vsel %vm3476, %v3469, %v3473
    %v3478 = vand.u32 2147483647, %v3393
    %vm3479 = vcmp.eq.f32.partialorder %v3478, 8.507059e+37
    %v3480 = vand.u32 %v3393, 2147483648
    %v3481 = vor.u32 1.1754944e-38, %v3480
    %v3482 = vsel %vm3479, %v3481, %v3477
    %v3483 = vmul.f32 1.0, %v3482
    %v3484 = vtanh.pop %v3368
    %v3485 = vtanh.pop %v3369
    %v3486 = vmul.f32 %v3438, %v3135
    %v3487 = vmul.f32 %v3453, %v3136
    %v3488 = vmul.f32 %v3408, %v3484
    %v3489 = vmul.f32 %v3423, %v3485
    %v3490 = vadd.f32 %v3486, %v3488
    %v3491 = vadd.f32 %v3487, %v3489
    %v3492 = vtanh.pop %v3490
    %v3493 = vtanh.pop %v3491
    %v3494 = vmul.f32 %v3468, %v3492
    %v3495 = vmul.f32 %v3483, %v3493
    %s3496 = smul.u32 4, 8
    %s3497 = smul.addr %s3496, 8
    %s3498 = scalar_lea.vmem [#allocation2], %s3497
    %v3499 = vld [vmem:[%s3498] sm:$0xff]
    %v3500 = vld [vmem:[%s3498 + $0x8] sm:$0xff]
    %v3501 = vld [vmem:[%s3498 + $0x10] sm:$0xff]
    %v3502 = vld [vmem:[%s3498 + $0x18] sm:$0xff]
    %v3503 = vld [vmem:[%s3498 + $0x20] sm:$0xff]
    %v3504 = vld [vmem:[%s3498 + $0x28] sm:$0xff]
    %v3505 = vld [vmem:[%s3498 + $0x30] sm:$0xff]
    %v3506 = vld [vmem:[%s3498 + $0x38] sm:$0xff]
    %v3507 = vpack.c.bf16 %v3494, %v3494
    %v3508 = vpack.c.bf16 %v3495, %v3495
    %3509 = vmatpush.bf16.msra.mxu0 %v1889
    %3510 = vmatpush.bf16.msra.mxu0 %v1881
    %3511 = vmatpush.bf16.msra.mxu0 %v1873
    %3512 = vmatpush.bf16.msra.mxu0 %v1865
    %3513 = vmatpush.bf16.msra.mxu0 %v1857
    %3514 = vmatpush.bf16.msra.mxu0 %v1849
    %3515 = vmatpush.bf16.msra.mxu0 %v1841
    %3516 = vmatpush.bf16.msra.mxu0 %v1833
    %3517 = vmatmul.bf16.gmra.mxu0 %v3507
    %v3518 = vpop.f32.mrf.mxu0
    %v3519 = vadd.f32 0.0, %v3518
    %v3520 = vpop.f32.mrf.mxu0
    %3521 = vdwg.mxu0
    %3522 = vmatpush.bf16.msra.mxu0 %v1953
    %3523 = vmatpush.bf16.msra.mxu0 %v1945
    %3524 = vmatpush.bf16.msra.mxu0 %v1937
    %3525 = vmatpush.bf16.msra.mxu0 %v1929
    %3526 = vmatpush.bf16.msra.mxu0 %v1921
    %3527 = vmatpush.bf16.msra.mxu0 %v1913
    %3528 = vmatpush.bf16.msra.mxu0 %v1905
    %3529 = vmatpush.bf16.msra.mxu0 %v1897
    %3530 = vmatmul.bf16.gmra.mxu0 %v3508
    %v3531 = vpop.f32.mrf.mxu0
    %v3532 = vadd.f32 %v3519, %v3531
    %v3533 = vpop.f32.mrf.mxu0
    %3534 = vdwg.mxu0
    %3535 = vmatpush.bf16.msra.mxu0 %v1890
    %3536 = vmatpush.bf16.msra.mxu0 %v1882
    %3537 = vmatpush.bf16.msra.mxu0 %v1874
    %3538 = vmatpush.bf16.msra.mxu0 %v1866
    %3539 = vmatpush.bf16.msra.mxu0 %v1858
    %3540 = vmatpush.bf16.msra.mxu0 %v1850
    %3541 = vmatpush.bf16.msra.mxu0 %v1842
    %3542 = vmatpush.bf16.msra.mxu0 %v1834
    %3543 = vmatmul.bf16.gmra.mxu0 %v3507
    %v3544 = vpop.f32.mrf.mxu0
    %v3545 = vadd.f32 0.0, %v3544
    %v3546 = vpop.f32.mrf.mxu0
    %3547 = vdwg.mxu0
    %3548 = vmatpush.bf16.msra.mxu0 %v1954
    %3549 = vmatpush.bf16.msra.mxu0 %v1946
    %3550 = vmatpush.bf16.msra.mxu0 %v1938
    %3551 = vmatpush.bf16.msra.mxu0 %v1930
    %3552 = vmatpush.bf16.msra.mxu0 %v1922
    %3553 = vmatpush.bf16.msra.mxu0 %v1914
    %3554 = vmatpush.bf16.msra.mxu0 %v1906
    %3555 = vmatpush.bf16.msra.mxu0 %v1898
    %3556 = vmatmul.bf16.gmra.mxu0 %v3508
    %v3557 = vpop.f32.mrf.mxu0
    %v3558 = vadd.f32 %v3545, %v3557
    %v3559 = vpop.f32.mrf.mxu0
    %3560 = vdwg.mxu0
    %3561 = vmatpush.bf16.msra.mxu0 %v1891
    %3562 = vmatpush.bf16.msra.mxu0 %v1883
    %3563 = vmatpush.bf16.msra.mxu0 %v1875
    %3564 = vmatpush.bf16.msra.mxu0 %v1867
    %3565 = vmatpush.bf16.msra.mxu0 %v1859
    %3566 = vmatpush.bf16.msra.mxu0 %v1851
    %3567 = vmatpush.bf16.msra.mxu0 %v1843
    %3568 = vmatpush.bf16.msra.mxu0 %v1835
    %3569 = vmatmul.bf16.gmra.mxu0 %v3507
    %v3570 = vpop.f32.mrf.mxu0
    %v3571 = vadd.f32 0.0, %v3570
    %v3572 = vpop.f32.mrf.mxu0
    %3573 = vdwg.mxu0
    %3574 = vmatpush.bf16.msra.mxu0 %v1955
    %3575 = vmatpush.bf16.msra.mxu0 %v1947
    %3576 = vmatpush.bf16.msra.mxu0 %v1939
    %3577 = vmatpush.bf16.msra.mxu0 %v1931
    %3578 = vmatpush.bf16.msra.mxu0 %v1923
    %3579 = vmatpush.bf16.msra.mxu0 %v1915
    %3580 = vmatpush.bf16.msra.mxu0 %v1907
    %3581 = vmatpush.bf16.msra.mxu0 %v1899
    %3582 = vmatmul.bf16.gmra.mxu0 %v3508
    %v3583 = vpop.f32.mrf.mxu0
    %v3584 = vadd.f32 %v3571, %v3583
    %v3585 = vpop.f32.mrf.mxu0
    %3586 = vdwg.mxu0
    %3587 = vmatpush.bf16.msra.mxu0 %v1892
    %3588 = vmatpush.bf16.msra.mxu0 %v1884
    %3589 = vmatpush.bf16.msra.mxu0 %v1876
    %3590 = vmatpush.bf16.msra.mxu0 %v1868
    %3591 = vmatpush.bf16.msra.mxu0 %v1860
    %3592 = vmatpush.bf16.msra.mxu0 %v1852
    %3593 = vmatpush.bf16.msra.mxu0 %v1844
    %3594 = vmatpush.bf16.msra.mxu0 %v1836
    %3595 = vmatmul.bf16.gmra.mxu0 %v3507
    %v3596 = vpop.f32.mrf.mxu0
    %v3597 = vadd.f32 0.0, %v3596
    %v3598 = vpop.f32.mrf.mxu0
    %3599 = vdwg.mxu0
    %3600 = vmatpush.bf16.msra.mxu0 %v1956
    %3601 = vmatpush.bf16.msra.mxu0 %v1948
    %3602 = vmatpush.bf16.msra.mxu0 %v1940
    %3603 = vmatpush.bf16.msra.mxu0 %v1932
    %3604 = vmatpush.bf16.msra.mxu0 %v1924
    %3605 = vmatpush.bf16.msra.mxu0 %v1916
    %3606 = vmatpush.bf16.msra.mxu0 %v1908
    %3607 = vmatpush.bf16.msra.mxu0 %v1900
    %3608 = vmatmul.bf16.gmra.mxu0 %v3508
    %v3609 = vpop.f32.mrf.mxu0
    %v3610 = vadd.f32 %v3597, %v3609
    %v3611 = vpop.f32.mrf.mxu0
    %3612 = vdwg.mxu0
    %3613 = vmatpush.bf16.msra.mxu0 %v1893
    %3614 = vmatpush.bf16.msra.mxu0 %v1885
    %3615 = vmatpush.bf16.msra.mxu0 %v1877
    %3616 = vmatpush.bf16.msra.mxu0 %v1869
    %3617 = vmatpush.bf16.msra.mxu0 %v1861
    %3618 = vmatpush.bf16.msra.mxu0 %v1853
    %3619 = vmatpush.bf16.msra.mxu0 %v1845
    %3620 = vmatpush.bf16.msra.mxu0 %v1837
    %3621 = vmatmul.bf16.gmra.mxu0 %v3507
    %v3622 = vpop.f32.mrf.mxu0
    %v3623 = vadd.f32 0.0, %v3622
    %v3624 = vpop.f32.mrf.mxu0
    %3625 = vdwg.mxu0
    %3626 = vmatpush.bf16.msra.mxu0 %v1957
    %3627 = vmatpush.bf16.msra.mxu0 %v1949
    %3628 = vmatpush.bf16.msra.mxu0 %v1941
    %3629 = vmatpush.bf16.msra.mxu0 %v1933
    %3630 = vmatpush.bf16.msra.mxu0 %v1925
    %3631 = vmatpush.bf16.msra.mxu0 %v1917
    %3632 = vmatpush.bf16.msra.mxu0 %v1909
    %3633 = vmatpush.bf16.msra.mxu0 %v1901
    %3634 = vmatmul.bf16.gmra.mxu0 %v3508
    %v3635 = vpop.f32.mrf.mxu0
    %v3636 = vadd.f32 %v3623, %v3635
    %v3637 = vpop.f32.mrf.mxu0
    %3638 = vdwg.mxu0
    %3639 = vmatpush.bf16.msra.mxu0 %v1894
    %3640 = vmatpush.bf16.msra.mxu0 %v1886
    %3641 = vmatpush.bf16.msra.mxu0 %v1878
    %3642 = vmatpush.bf16.msra.mxu0 %v1870
    %3643 = vmatpush.bf16.msra.mxu0 %v1862
    %3644 = vmatpush.bf16.msra.mxu0 %v1854
    %3645 = vmatpush.bf16.msra.mxu0 %v1846
    %3646 = vmatpush.bf16.msra.mxu0 %v1838
    %3647 = vmatmul.bf16.gmra.mxu0 %v3507
    %v3648 = vpop.f32.mrf.mxu0
    %v3649 = vadd.f32 0.0, %v3648
    %v3650 = vpop.f32.mrf.mxu0
    %3651 = vdwg.mxu0
    %3652 = vmatpush.bf16.msra.mxu0 %v1958
    %3653 = vmatpush.bf16.msra.mxu0 %v1950
    %3654 = vmatpush.bf16.msra.mxu0 %v1942
    %3655 = vmatpush.bf16.msra.mxu0 %v1934
    %3656 = vmatpush.bf16.msra.mxu0 %v1926
    %3657 = vmatpush.bf16.msra.mxu0 %v1918
    %3658 = vmatpush.bf16.msra.mxu0 %v1910
    %3659 = vmatpush.bf16.msra.mxu0 %v1902
    %3660 = vmatmul.bf16.gmra.mxu0 %v3508
    %v3661 = vpop.f32.mrf.mxu0
    %v3662 = vadd.f32 %v3649, %v3661
    %v3663 = vpop.f32.mrf.mxu0
    %3664 = vdwg.mxu0
    %3665 = vmatpush.bf16.msra.mxu0 %v1895
    %3666 = vmatpush.bf16.msra.mxu0 %v1887
    %3667 = vmatpush.bf16.msra.mxu0 %v1879
    %3668 = vmatpush.bf16.msra.mxu0 %v1871
    %3669 = vmatpush.bf16.msra.mxu0 %v1863
    %3670 = vmatpush.bf16.msra.mxu0 %v1855
    %3671 = vmatpush.bf16.msra.mxu0 %v1847
    %3672 = vmatpush.bf16.msra.mxu0 %v1839
    %3673 = vmatmul.bf16.gmra.mxu0 %v3507
    %v3674 = vpop.f32.mrf.mxu0
    %v3675 = vadd.f32 0.0, %v3674
    %v3676 = vpop.f32.mrf.mxu0
    %3677 = vdwg.mxu0
    %3678 = vmatpush.bf16.msra.mxu0 %v1959
    %3679 = vmatpush.bf16.msra.mxu0 %v1951
    %3680 = vmatpush.bf16.msra.mxu0 %v1943
    %3681 = vmatpush.bf16.msra.mxu0 %v1935
    %3682 = vmatpush.bf16.msra.mxu0 %v1927
    %3683 = vmatpush.bf16.msra.mxu0 %v1919
    %3684 = vmatpush.bf16.msra.mxu0 %v1911
    %3685 = vmatpush.bf16.msra.mxu0 %v1903
    %3686 = vmatmul.bf16.gmra.mxu0 %v3508
    %v3687 = vpop.f32.mrf.mxu0
    %v3688 = vadd.f32 %v3675, %v3687
    %v3689 = vpop.f32.mrf.mxu0
    %3690 = vdwg.mxu0
    %3691 = vmatpush.bf16.msra.mxu0 %v1896
    %3692 = vmatpush.bf16.msra.mxu0 %v1888
    %3693 = vmatpush.bf16.msra.mxu0 %v1880
    %3694 = vmatpush.bf16.msra.mxu0 %v1872
    %3695 = vmatpush.bf16.msra.mxu0 %v1864
    %3696 = vmatpush.bf16.msra.mxu0 %v1856
    %3697 = vmatpush.bf16.msra.mxu0 %v1848
    %3698 = vmatpush.bf16.msra.mxu0 %v1840
    %3699 = vmatmul.bf16.gmra.mxu0 %v3507
    %v3700 = vpop.f32.mrf.mxu0
    %v3701 = vadd.f32 0.0, %v3700
    %v3702 = vpop.f32.mrf.mxu0
    %3703 = vdwg.mxu0
    %3704 = vmatpush.bf16.msra.mxu0 %v1960
    %3705 = vmatpush.bf16.msra.mxu0 %v1952
    %3706 = vmatpush.bf16.msra.mxu0 %v1944
    %3707 = vmatpush.bf16.msra.mxu0 %v1936
    %3708 = vmatpush.bf16.msra.mxu0 %v1928
    %3709 = vmatpush.bf16.msra.mxu0 %v1920
    %3710 = vmatpush.bf16.msra.mxu0 %v1912
    %3711 = vmatpush.bf16.msra.mxu0 %v1904
    %3712 = vmatmul.bf16.gmra.mxu0 %v3508
    %v3713 = vpop.f32.mrf.mxu0
    %v3714 = vadd.f32 %v3701, %v3713
    %v3715 = vpop.f32.mrf.mxu0
    %3716 = vdwg.mxu0
    %v3717 = vadd.f32 %v3499, %v3532
    %v3718 = vadd.f32 %v3500, %v3558
    %v3719 = vadd.f32 %v3501, %v3584
    %v3720 = vadd.f32 %v3502, %v3610
    %v3721 = vadd.f32 %v3503, %v3636
    %v3722 = vadd.f32 %v3504, %v3662
    %v3723 = vadd.f32 %v3505, %v3688
    %v3724 = vadd.f32 %v3506, %v3714
    %v3725 = vxor.u32 %v3717, 2147483648
    %v3726 = vxor.u32 %v3718, 2147483648
    %v3727 = vxor.u32 %v3719, 2147483648
    %v3728 = vxor.u32 %v3720, 2147483648
    %v3729 = vxor.u32 %v3721, 2147483648
    %v3730 = vxor.u32 %v3722, 2147483648
    %v3731 = vmul.f32 %v3725, 1.442695
    %v3732 = vpow.pop %v3731
    %v3733 = vmul.f32 %v3726, 1.442695
    %v3734 = vpow.pop %v3733
    %v3735 = vmul.f32 %v3727, 1.442695
    %v3736 = vpow.pop %v3735
    %v3737 = vmul.f32 %v3728, 1.442695
    %v3738 = vpow.pop %v3737
    %v3739 = vmul.f32 %v3729, 1.442695
    %v3740 = vpow.pop %v3739
    %v3741 = vmul.f32 %v3730, 1.442695
    %v3742 = vpow.pop %v3741
    %v3743 = vadd.f32 %v3732, 1.0
    %v3744 = vadd.f32 %v3734, 1.0
    %v3745 = vadd.f32 %v3736, 1.0
    %v3746 = vadd.f32 %v3738, 1.0
    %v3747 = vadd.f32 %v3740, 1.0
    %v3748 = vadd.f32 %v3742, 1.0
    %v3749 = vrcp.pop %v3743
    %v3750 = vmul.f32 %v3743, %v3749
    %v3751 = vsub.f32 1.0, %v3750
    %v3752 = vmul.f32 %v3749, %v3751
    %v3753 = vadd.f32 %v3749, %v3752
    %vm3754 = vweird.f32 %v3743
    %vm3755 = vweird.f32 %v3749
    %vm3756 = vmor %vm3754, %vm3755
    %v3757 = vsel %vm3756, %v3749, %v3753
    %v3758 = vand.u32 2147483647, %v3743
    %vm3759 = vcmp.eq.f32.partialorder %v3758, 8.507059e+37
    %v3760 = vand.u32 %v3743, 2147483648
    %v3761 = vor.u32 1.1754944e-38, %v3760
    %v3762 = vsel %vm3759, %v3761, %v3757
    %v3763 = vmul.f32 1.0, %v3762
    %v3764 = vrcp.pop %v3744
    %v3765 = vmul.f32 %v3744, %v3764
    %v3766 = vsub.f32 1.0, %v3765
    %v3767 = vmul.f32 %v3764, %v3766
    %v3768 = vadd.f32 %v3764, %v3767
    %vm3769 = vweird.f32 %v3744
    %vm3770 = vweird.f32 %v3764
    %vm3771 = vmor %vm3769, %vm3770
    %v3772 = vsel %vm3771, %v3764, %v3768
    %v3773 = vand.u32 2147483647, %v3744
    %vm3774 = vcmp.eq.f32.partialorder %v3773, 8.507059e+37
    %v3775 = vand.u32 %v3744, 2147483648
    %v3776 = vor.u32 1.1754944e-38, %v3775
    %v3777 = vsel %vm3774, %v3776, %v3772
    %v3778 = vmul.f32 1.0, %v3777
    %v3779 = vrcp.pop %v3745
    %v3780 = vmul.f32 %v3745, %v3779
    %v3781 = vsub.f32 1.0, %v3780
    %v3782 = vmul.f32 %v3779, %v3781
    %v3783 = vadd.f32 %v3779, %v3782
    %vm3784 = vweird.f32 %v3745
    %vm3785 = vweird.f32 %v3779
    %vm3786 = vmor %vm3784, %vm3785
    %v3787 = vsel %vm3786, %v3779, %v3783
    %v3788 = vand.u32 2147483647, %v3745
    %vm3789 = vcmp.eq.f32.partialorder %v3788, 8.507059e+37
    %v3790 = vand.u32 %v3745, 2147483648
    %v3791 = vor.u32 1.1754944e-38, %v3790
    %v3792 = vsel %vm3789, %v3791, %v3787
    %v3793 = vmul.f32 1.0, %v3792
    %v3794 = vrcp.pop %v3746
    %v3795 = vmul.f32 %v3746, %v3794
    %v3796 = vsub.f32 1.0, %v3795
    %v3797 = vmul.f32 %v3794, %v3796
    %v3798 = vadd.f32 %v3794, %v3797
    %vm3799 = vweird.f32 %v3746
    %vm3800 = vweird.f32 %v3794
    %vm3801 = vmor %vm3799, %vm3800
    %v3802 = vsel %vm3801, %v3794, %v3798
    %v3803 = vand.u32 2147483647, %v3746
    %vm3804 = vcmp.eq.f32.partialorder %v3803, 8.507059e+37
    %v3805 = vand.u32 %v3746, 2147483648
    %v3806 = vor.u32 1.1754944e-38, %v3805
    %v3807 = vsel %vm3804, %v3806, %v3802
    %v3808 = vmul.f32 1.0, %v3807
    %v3809 = vrcp.pop %v3747
    %v3810 = vmul.f32 %v3747, %v3809
    %v3811 = vsub.f32 1.0, %v3810
    %v3812 = vmul.f32 %v3809, %v3811
    %v3813 = vadd.f32 %v3809, %v3812
    %vm3814 = vweird.f32 %v3747
    %vm3815 = vweird.f32 %v3809
    %vm3816 = vmor %vm3814, %vm3815
    %v3817 = vsel %vm3816, %v3809, %v3813
    %v3818 = vand.u32 2147483647, %v3747
    %vm3819 = vcmp.eq.f32.partialorder %v3818, 8.507059e+37
    %v3820 = vand.u32 %v3747, 2147483648
    %v3821 = vor.u32 1.1754944e-38, %v3820
    %v3822 = vsel %vm3819, %v3821, %v3817
    %v3823 = vmul.f32 1.0, %v3822
    %v3824 = vrcp.pop %v3748
    %v3825 = vmul.f32 %v3748, %v3824
    %v3826 = vsub.f32 1.0, %v3825
    %v3827 = vmul.f32 %v3824, %v3826
    %v3828 = vadd.f32 %v3824, %v3827
    %vm3829 = vweird.f32 %v3748
    %vm3830 = vweird.f32 %v3824
    %vm3831 = vmor %vm3829, %vm3830
    %v3832 = vsel %vm3831, %v3824, %v3828
    %v3833 = vand.u32 2147483647, %v3748
    %vm3834 = vcmp.eq.f32.partialorder %v3833, 8.507059e+37
    %v3835 = vand.u32 %v3748, 2147483648
    %v3836 = vor.u32 1.1754944e-38, %v3835
    %v3837 = vsel %vm3834, %v3836, %v3832
    %v3838 = vmul.f32 1.0, %v3837
    %v3839 = vtanh.pop %v3723
    %v3840 = vtanh.pop %v3724
    %v3841 = vmul.f32 %v3793, %v3490
    %v3842 = vmul.f32 %v3808, %v3491
    %v3843 = vmul.f32 %v3763, %v3839
    %v3844 = vmul.f32 %v3778, %v3840
    %v3845 = vadd.f32 %v3841, %v3843
    %v3846 = vadd.f32 %v3842, %v3844
    %v3847 = vtanh.pop %v3845
    %v3848 = vtanh.pop %v3846
    %v3849 = vmul.f32 %v3823, %v3847
    %v3850 = vmul.f32 %v3838, %v3848
    %s3851 = smul.u32 5, 8
    %s3852 = smul.addr %s3851, 8
    %s3853 = scalar_lea.vmem [#allocation2], %s3852
    %v3854 = vld [vmem:[%s3853] sm:$0xff]
    %v3855 = vld [vmem:[%s3853 + $0x8] sm:$0xff]
    %v3856 = vld [vmem:[%s3853 + $0x10] sm:$0xff]
    %v3857 = vld [vmem:[%s3853 + $0x18] sm:$0xff]
    %v3858 = vld [vmem:[%s3853 + $0x20] sm:$0xff]
    %v3859 = vld [vmem:[%s3853 + $0x28] sm:$0xff]
    %v3860 = vld [vmem:[%s3853 + $0x30] sm:$0xff]
    %v3861 = vld [vmem:[%s3853 + $0x38] sm:$0xff]
    %v3862 = vpack.c.bf16 %v3849, %v3849
    %v3863 = vpack.c.bf16 %v3850, %v3850
    %3864 = vmatpush.bf16.msra.mxu0 %v1889
    %3865 = vmatpush.bf16.msra.mxu0 %v1881
    %3866 = vmatpush.bf16.msra.mxu0 %v1873
    %3867 = vmatpush.bf16.msra.mxu0 %v1865
    %3868 = vmatpush.bf16.msra.mxu0 %v1857
    %3869 = vmatpush.bf16.msra.mxu0 %v1849
    %3870 = vmatpush.bf16.msra.mxu0 %v1841
    %3871 = vmatpush.bf16.msra.mxu0 %v1833
    %3872 = vmatmul.bf16.gmra.mxu0 %v3862
    %v3873 = vpop.f32.mrf.mxu0
    %v3874 = vadd.f32 0.0, %v3873
    %v3875 = vpop.f32.mrf.mxu0
    %3876 = vdwg.mxu0
    %3877 = vmatpush.bf16.msra.mxu0 %v1953
    %3878 = vmatpush.bf16.msra.mxu0 %v1945
    %3879 = vmatpush.bf16.msra.mxu0 %v1937
    %3880 = vmatpush.bf16.msra.mxu0 %v1929
    %3881 = vmatpush.bf16.msra.mxu0 %v1921
    %3882 = vmatpush.bf16.msra.mxu0 %v1913
    %3883 = vmatpush.bf16.msra.mxu0 %v1905
    %3884 = vmatpush.bf16.msra.mxu0 %v1897
    %3885 = vmatmul.bf16.gmra.mxu0 %v3863
    %v3886 = vpop.f32.mrf.mxu0
    %v3887 = vadd.f32 %v3874, %v3886
    %v3888 = vpop.f32.mrf.mxu0
    %3889 = vdwg.mxu0
    %3890 = vmatpush.bf16.msra.mxu0 %v1890
    %3891 = vmatpush.bf16.msra.mxu0 %v1882
    %3892 = vmatpush.bf16.msra.mxu0 %v1874
    %3893 = vmatpush.bf16.msra.mxu0 %v1866
    %3894 = vmatpush.bf16.msra.mxu0 %v1858
    %3895 = vmatpush.bf16.msra.mxu0 %v1850
    %3896 = vmatpush.bf16.msra.mxu0 %v1842
    %3897 = vmatpush.bf16.msra.mxu0 %v1834
    %3898 = vmatmul.bf16.gmra.mxu0 %v3862
    %v3899 = vpop.f32.mrf.mxu0
    %v3900 = vadd.f32 0.0, %v3899
    %v3901 = vpop.f32.mrf.mxu0
    %3902 = vdwg.mxu0
    %3903 = vmatpush.bf16.msra.mxu0 %v1954
    %3904 = vmatpush.bf16.msra.mxu0 %v1946
    %3905 = vmatpush.bf16.msra.mxu0 %v1938
    %3906 = vmatpush.bf16.msra.mxu0 %v1930
    %3907 = vmatpush.bf16.msra.mxu0 %v1922
    %3908 = vmatpush.bf16.msra.mxu0 %v1914
    %3909 = vmatpush.bf16.msra.mxu0 %v1906
    %3910 = vmatpush.bf16.msra.mxu0 %v1898
    %3911 = vmatmul.bf16.gmra.mxu0 %v3863
    %v3912 = vpop.f32.mrf.mxu0
    %v3913 = vadd.f32 %v3900, %v3912
    %v3914 = vpop.f32.mrf.mxu0
    %3915 = vdwg.mxu0
    %3916 = vmatpush.bf16.msra.mxu0 %v1891
    %3917 = vmatpush.bf16.msra.mxu0 %v1883
    %3918 = vmatpush.bf16.msra.mxu0 %v1875
    %3919 = vmatpush.bf16.msra.mxu0 %v1867
    %3920 = vmatpush.bf16.msra.mxu0 %v1859
    %3921 = vmatpush.bf16.msra.mxu0 %v1851
    %3922 = vmatpush.bf16.msra.mxu0 %v1843
    %3923 = vmatpush.bf16.msra.mxu0 %v1835
    %3924 = vmatmul.bf16.gmra.mxu0 %v3862
    %v3925 = vpop.f32.mrf.mxu0
    %v3926 = vadd.f32 0.0, %v3925
    %v3927 = vpop.f32.mrf.mxu0
    %3928 = vdwg.mxu0
    %3929 = vmatpush.bf16.msra.mxu0 %v1955
    %3930 = vmatpush.bf16.msra.mxu0 %v1947
    %3931 = vmatpush.bf16.msra.mxu0 %v1939
    %3932 = vmatpush.bf16.msra.mxu0 %v1931
    %3933 = vmatpush.bf16.msra.mxu0 %v1923
    %3934 = vmatpush.bf16.msra.mxu0 %v1915
    %3935 = vmatpush.bf16.msra.mxu0 %v1907
    %3936 = vmatpush.bf16.msra.mxu0 %v1899
    %3937 = vmatmul.bf16.gmra.mxu0 %v3863
    %v3938 = vpop.f32.mrf.mxu0
    %v3939 = vadd.f32 %v3926, %v3938
    %v3940 = vpop.f32.mrf.mxu0
    %3941 = vdwg.mxu0
    %3942 = vmatpush.bf16.msra.mxu0 %v1892
    %3943 = vmatpush.bf16.msra.mxu0 %v1884
    %3944 = vmatpush.bf16.msra.mxu0 %v1876
    %3945 = vmatpush.bf16.msra.mxu0 %v1868
    %3946 = vmatpush.bf16.msra.mxu0 %v1860
    %3947 = vmatpush.bf16.msra.mxu0 %v1852
    %3948 = vmatpush.bf16.msra.mxu0 %v1844
    %3949 = vmatpush.bf16.msra.mxu0 %v1836
    %3950 = vmatmul.bf16.gmra.mxu0 %v3862
    %v3951 = vpop.f32.mrf.mxu0
    %v3952 = vadd.f32 0.0, %v3951
    %v3953 = vpop.f32.mrf.mxu0
    %3954 = vdwg.mxu0
    %3955 = vmatpush.bf16.msra.mxu0 %v1956
    %3956 = vmatpush.bf16.msra.mxu0 %v1948
    %3957 = vmatpush.bf16.msra.mxu0 %v1940
    %3958 = vmatpush.bf16.msra.mxu0 %v1932
    %3959 = vmatpush.bf16.msra.mxu0 %v1924
    %3960 = vmatpush.bf16.msra.mxu0 %v1916
    %3961 = vmatpush.bf16.msra.mxu0 %v1908
    %3962 = vmatpush.bf16.msra.mxu0 %v1900
    %3963 = vmatmul.bf16.gmra.mxu0 %v3863
    %v3964 = vpop.f32.mrf.mxu0
    %v3965 = vadd.f32 %v3952, %v3964
    %v3966 = vpop.f32.mrf.mxu0
    %3967 = vdwg.mxu0
    %3968 = vmatpush.bf16.msra.mxu0 %v1893
    %3969 = vmatpush.bf16.msra.mxu0 %v1885
    %3970 = vmatpush.bf16.msra.mxu0 %v1877
    %3971 = vmatpush.bf16.msra.mxu0 %v1869
    %3972 = vmatpush.bf16.msra.mxu0 %v1861
    %3973 = vmatpush.bf16.msra.mxu0 %v1853
    %3974 = vmatpush.bf16.msra.mxu0 %v1845
    %3975 = vmatpush.bf16.msra.mxu0 %v1837
    %3976 = vmatmul.bf16.gmra.mxu0 %v3862
    %v3977 = vpop.f32.mrf.mxu0
    %v3978 = vadd.f32 0.0, %v3977
    %v3979 = vpop.f32.mrf.mxu0
    %3980 = vdwg.mxu0
    %3981 = vmatpush.bf16.msra.mxu0 %v1957
    %3982 = vmatpush.bf16.msra.mxu0 %v1949
    %3983 = vmatpush.bf16.msra.mxu0 %v1941
    %3984 = vmatpush.bf16.msra.mxu0 %v1933
    %3985 = vmatpush.bf16.msra.mxu0 %v1925
    %3986 = vmatpush.bf16.msra.mxu0 %v1917
    %3987 = vmatpush.bf16.msra.mxu0 %v1909
    %3988 = vmatpush.bf16.msra.mxu0 %v1901
    %3989 = vmatmul.bf16.gmra.mxu0 %v3863
    %v3990 = vpop.f32.mrf.mxu0
    %v3991 = vadd.f32 %v3978, %v3990
    %v3992 = vpop.f32.mrf.mxu0
    %3993 = vdwg.mxu0
    %3994 = vmatpush.bf16.msra.mxu0 %v1894
    %3995 = vmatpush.bf16.msra.mxu0 %v1886
    %3996 = vmatpush.bf16.msra.mxu0 %v1878
    %3997 = vmatpush.bf16.msra.mxu0 %v1870
    %3998 = vmatpush.bf16.msra.mxu0 %v1862
    %3999 = vmatpush.bf16.msra.mxu0 %v1854
    %4000 = vmatpush.bf16.msra.mxu0 %v1846
    %4001 = vmatpush.bf16.msra.mxu0 %v1838
    %4002 = vmatmul.bf16.gmra.mxu0 %v3862
    %v4003 = vpop.f32.mrf.mxu0
    %v4004 = vadd.f32 0.0, %v4003
    %v4005 = vpop.f32.mrf.mxu0
    %4006 = vdwg.mxu0
    %4007 = vmatpush.bf16.msra.mxu0 %v1958
    %4008 = vmatpush.bf16.msra.mxu0 %v1950
    %4009 = vmatpush.bf16.msra.mxu0 %v1942
    %4010 = vmatpush.bf16.msra.mxu0 %v1934
    %4011 = vmatpush.bf16.msra.mxu0 %v1926
    %4012 = vmatpush.bf16.msra.mxu0 %v1918
    %4013 = vmatpush.bf16.msra.mxu0 %v1910
    %4014 = vmatpush.bf16.msra.mxu0 %v1902
    %4015 = vmatmul.bf16.gmra.mxu0 %v3863
    %v4016 = vpop.f32.mrf.mxu0
    %v4017 = vadd.f32 %v4004, %v4016
    %v4018 = vpop.f32.mrf.mxu0
    %4019 = vdwg.mxu0
    %4020 = vmatpush.bf16.msra.mxu0 %v1895
    %4021 = vmatpush.bf16.msra.mxu0 %v1887
    %4022 = vmatpush.bf16.msra.mxu0 %v1879
    %4023 = vmatpush.bf16.msra.mxu0 %v1871
    %4024 = vmatpush.bf16.msra.mxu0 %v1863
    %4025 = vmatpush.bf16.msra.mxu0 %v1855
    %4026 = vmatpush.bf16.msra.mxu0 %v1847
    %4027 = vmatpush.bf16.msra.mxu0 %v1839
    %4028 = vmatmul.bf16.gmra.mxu0 %v3862
    %v4029 = vpop.f32.mrf.mxu0
    %v4030 = vadd.f32 0.0, %v4029
    %v4031 = vpop.f32.mrf.mxu0
    %4032 = vdwg.mxu0
    %4033 = vmatpush.bf16.msra.mxu0 %v1959
    %4034 = vmatpush.bf16.msra.mxu0 %v1951
    %4035 = vmatpush.bf16.msra.mxu0 %v1943
    %4036 = vmatpush.bf16.msra.mxu0 %v1935
    %4037 = vmatpush.bf16.msra.mxu0 %v1927
    %4038 = vmatpush.bf16.msra.mxu0 %v1919
    %4039 = vmatpush.bf16.msra.mxu0 %v1911
    %4040 = vmatpush.bf16.msra.mxu0 %v1903
    %4041 = vmatmul.bf16.gmra.mxu0 %v3863
    %v4042 = vpop.f32.mrf.mxu0
    %v4043 = vadd.f32 %v4030, %v4042
    %v4044 = vpop.f32.mrf.mxu0
    %4045 = vdwg.mxu0
    %4046 = vmatpush.bf16.msra.mxu0 %v1896
    %4047 = vmatpush.bf16.msra.mxu0 %v1888
    %4048 = vmatpush.bf16.msra.mxu0 %v1880
    %4049 = vmatpush.bf16.msra.mxu0 %v1872
    %4050 = vmatpush.bf16.msra.mxu0 %v1864
    %4051 = vmatpush.bf16.msra.mxu0 %v1856
    %4052 = vmatpush.bf16.msra.mxu0 %v1848
    %4053 = vmatpush.bf16.msra.mxu0 %v1840
    %4054 = vmatmul.bf16.gmra.mxu0 %v3862
    %v4055 = vpop.f32.mrf.mxu0
    %v4056 = vadd.f32 0.0, %v4055
    %v4057 = vpop.f32.mrf.mxu0
    %4058 = vdwg.mxu0
    %4059 = vmatpush.bf16.msra.mxu0 %v1960
    %4060 = vmatpush.bf16.msra.mxu0 %v1952
    %4061 = vmatpush.bf16.msra.mxu0 %v1944
    %4062 = vmatpush.bf16.msra.mxu0 %v1936
    %4063 = vmatpush.bf16.msra.mxu0 %v1928
    %4064 = vmatpush.bf16.msra.mxu0 %v1920
    %4065 = vmatpush.bf16.msra.mxu0 %v1912
    %4066 = vmatpush.bf16.msra.mxu0 %v1904
    %4067 = vmatmul.bf16.gmra.mxu0 %v3863
    %v4068 = vpop.f32.mrf.mxu0
    %v4069 = vadd.f32 %v4056, %v4068
    %v4070 = vpop.f32.mrf.mxu0
    %4071 = vdwg.mxu0
    %v4072 = vadd.f32 %v3854, %v3887
    %v4073 = vadd.f32 %v3855, %v3913
    %v4074 = vadd.f32 %v3856, %v3939
    %v4075 = vadd.f32 %v3857, %v3965
    %v4076 = vadd.f32 %v3858, %v3991
    %v4077 = vadd.f32 %v3859, %v4017
    %v4078 = vadd.f32 %v3860, %v4043
    %v4079 = vadd.f32 %v3861, %v4069
    %v4080 = vxor.u32 %v4072, 2147483648
    %v4081 = vxor.u32 %v4073, 2147483648
    %v4082 = vxor.u32 %v4074, 2147483648
    %v4083 = vxor.u32 %v4075, 2147483648
    %v4084 = vxor.u32 %v4076, 2147483648
    %v4085 = vxor.u32 %v4077, 2147483648
    %v4086 = vmul.f32 %v4080, 1.442695
    %v4087 = vpow.pop %v4086
    %v4088 = vmul.f32 %v4081, 1.442695
    %v4089 = vpow.pop %v4088
    %v4090 = vmul.f32 %v4082, 1.442695
    %v4091 = vpow.pop %v4090
    %v4092 = vmul.f32 %v4083, 1.442695
    %v4093 = vpow.pop %v4092
    %v4094 = vmul.f32 %v4084, 1.442695
    %v4095 = vpow.pop %v4094
    %v4096 = vmul.f32 %v4085, 1.442695
    %v4097 = vpow.pop %v4096
    %v4098 = vadd.f32 %v4087, 1.0
    %v4099 = vadd.f32 %v4089, 1.0
    %v4100 = vadd.f32 %v4091, 1.0
    %v4101 = vadd.f32 %v4093, 1.0
    %v4102 = vadd.f32 %v4095, 1.0
    %v4103 = vadd.f32 %v4097, 1.0
    %v4104 = vrcp.pop %v4098
    %v4105 = vmul.f32 %v4098, %v4104
    %v4106 = vsub.f32 1.0, %v4105
    %v4107 = vmul.f32 %v4104, %v4106
    %v4108 = vadd.f32 %v4104, %v4107
    %vm4109 = vweird.f32 %v4098
    %vm4110 = vweird.f32 %v4104
    %vm4111 = vmor %vm4109, %vm4110
    %v4112 = vsel %vm4111, %v4104, %v4108
    %v4113 = vand.u32 2147483647, %v4098
    %vm4114 = vcmp.eq.f32.partialorder %v4113, 8.507059e+37
    %v4115 = vand.u32 %v4098, 2147483648
    %v4116 = vor.u32 1.1754944e-38, %v4115
    %v4117 = vsel %vm4114, %v4116, %v4112
    %v4118 = vmul.f32 1.0, %v4117
    %v4119 = vrcp.pop %v4099
    %v4120 = vmul.f32 %v4099, %v4119
    %v4121 = vsub.f32 1.0, %v4120
    %v4122 = vmul.f32 %v4119, %v4121
    %v4123 = vadd.f32 %v4119, %v4122
    %vm4124 = vweird.f32 %v4099
    %vm4125 = vweird.f32 %v4119
    %vm4126 = vmor %vm4124, %vm4125
    %v4127 = vsel %vm4126, %v4119, %v4123
    %v4128 = vand.u32 2147483647, %v4099
    %vm4129 = vcmp.eq.f32.partialorder %v4128, 8.507059e+37
    %v4130 = vand.u32 %v4099, 2147483648
    %v4131 = vor.u32 1.1754944e-38, %v4130
    %v4132 = vsel %vm4129, %v4131, %v4127
    %v4133 = vmul.f32 1.0, %v4132
    %v4134 = vrcp.pop %v4100
    %v4135 = vmul.f32 %v4100, %v4134
    %v4136 = vsub.f32 1.0, %v4135
    %v4137 = vmul.f32 %v4134, %v4136
    %v4138 = vadd.f32 %v4134, %v4137
    %vm4139 = vweird.f32 %v4100
    %vm4140 = vweird.f32 %v4134
    %vm4141 = vmor %vm4139, %vm4140
    %v4142 = vsel %vm4141, %v4134, %v4138
    %v4143 = vand.u32 2147483647, %v4100
    %vm4144 = vcmp.eq.f32.partialorder %v4143, 8.507059e+37
    %v4145 = vand.u32 %v4100, 2147483648
    %v4146 = vor.u32 1.1754944e-38, %v4145
    %v4147 = vsel %vm4144, %v4146, %v4142
    %v4148 = vmul.f32 1.0, %v4147
    %v4149 = vrcp.pop %v4101
    %v4150 = vmul.f32 %v4101, %v4149
    %v4151 = vsub.f32 1.0, %v4150
    %v4152 = vmul.f32 %v4149, %v4151
    %v4153 = vadd.f32 %v4149, %v4152
    %vm4154 = vweird.f32 %v4101
    %vm4155 = vweird.f32 %v4149
    %vm4156 = vmor %vm4154, %vm4155
    %v4157 = vsel %vm4156, %v4149, %v4153
    %v4158 = vand.u32 2147483647, %v4101
    %vm4159 = vcmp.eq.f32.partialorder %v4158, 8.507059e+37
    %v4160 = vand.u32 %v4101, 2147483648
    %v4161 = vor.u32 1.1754944e-38, %v4160
    %v4162 = vsel %vm4159, %v4161, %v4157
    %v4163 = vmul.f32 1.0, %v4162
    %v4164 = vrcp.pop %v4102
    %v4165 = vmul.f32 %v4102, %v4164
    %v4166 = vsub.f32 1.0, %v4165
    %v4167 = vmul.f32 %v4164, %v4166
    %v4168 = vadd.f32 %v4164, %v4167
    %vm4169 = vweird.f32 %v4102
    %vm4170 = vweird.f32 %v4164
    %vm4171 = vmor %vm4169, %vm4170
    %v4172 = vsel %vm4171, %v4164, %v4168
    %v4173 = vand.u32 2147483647, %v4102
    %vm4174 = vcmp.eq.f32.partialorder %v4173, 8.507059e+37
    %v4175 = vand.u32 %v4102, 2147483648
    %v4176 = vor.u32 1.1754944e-38, %v4175
    %v4177 = vsel %vm4174, %v4176, %v4172
    %v4178 = vmul.f32 1.0, %v4177
    %v4179 = vrcp.pop %v4103
    %v4180 = vmul.f32 %v4103, %v4179
    %v4181 = vsub.f32 1.0, %v4180
    %v4182 = vmul.f32 %v4179, %v4181
    %v4183 = vadd.f32 %v4179, %v4182
    %vm4184 = vweird.f32 %v4103
    %vm4185 = vweird.f32 %v4179
    %vm4186 = vmor %vm4184, %vm4185
    %v4187 = vsel %vm4186, %v4179, %v4183
    %v4188 = vand.u32 2147483647, %v4103
    %vm4189 = vcmp.eq.f32.partialorder %v4188, 8.507059e+37
    %v4190 = vand.u32 %v4103, 2147483648
    %v4191 = vor.u32 1.1754944e-38, %v4190
    %v4192 = vsel %vm4189, %v4191, %v4187
    %v4193 = vmul.f32 1.0, %v4192
    %v4194 = vtanh.pop %v4078
    %v4195 = vtanh.pop %v4079
    %v4196 = vmul.f32 %v4148, %v3845
    %v4197 = vmul.f32 %v4163, %v3846
    %v4198 = vmul.f32 %v4118, %v4194
    %v4199 = vmul.f32 %v4133, %v4195
    %v4200 = vadd.f32 %v4196, %v4198
    %v4201 = vadd.f32 %v4197, %v4199
    %v4202 = vtanh.pop %v4200
    %v4203 = vtanh.pop %v4201
    %v4204 = vmul.f32 %v4178, %v4202
    %v4205 = vmul.f32 %v4193, %v4203
    %v4206 = vpack.c.bf16 %v4204, %v4204
    %v4207 = vpack.c.bf16 %v4205, %v4205
    %v4208 = vld [vmem:[%s4] sm:$0xff]
    %v4209 = vld [vmem:[%s4 + $0x8] sm:$0xff]
    %v4210 = vld [vmem:[%s4 + $0x10] sm:$0xff]
    %v4211 = vld [vmem:[%s4 + $0x18] sm:$0xff]
    %v4212 = vld [vmem:[%s4 + $0x20] sm:$0xff]
    %v4213 = vld [vmem:[%s4 + $0x28] sm:$0xff]
    %v4214 = vld [vmem:[%s4 + $0x30] sm:$0xff]
    %v4215 = vld [vmem:[%s4 + $0x38] sm:$0xff]
    %v4216 = vld [vmem:[%s4 + $0x40] sm:$0xff]
    %v4217 = vld [vmem:[%s4 + $0x48] sm:$0xff]
    %v4218 = vld [vmem:[%s4 + $0x50] sm:$0xff]
    %v4219 = vld [vmem:[%s4 + $0x58] sm:$0xff]
    %v4220 = vld [vmem:[%s4 + $0x60] sm:$0xff]
    %v4221 = vld [vmem:[%s4 + $0x68] sm:$0xff]
    %v4222 = vld [vmem:[%s4 + $0x70] sm:$0xff]
    %v4223 = vld [vmem:[%s4 + $0x78] sm:$0xff]
    %v4224 = vld [vmem:[%s4 + $0x80] sm:$0xff]
    %v4225 = vld [vmem:[%s4 + $0x88] sm:$0xff]
    %v4226 = vld [vmem:[%s4 + $0x90] sm:$0xff]
    %v4227 = vld [vmem:[%s4 + $0x98] sm:$0xff]
    %v4228 = vld [vmem:[%s4 + $0xa0] sm:$0xff]
    %v4229 = vld [vmem:[%s4 + $0xa8] sm:$0xff]
    %v4230 = vld [vmem:[%s4 + $0xb0] sm:$0xff]
    %v4231 = vld [vmem:[%s4 + $0xb8] sm:$0xff]
    %v4232 = vld [vmem:[%s4 + $0xc0] sm:$0xff]
    %v4233 = vld [vmem:[%s4 + $0xc8] sm:$0xff]
    %v4234 = vld [vmem:[%s4 + $0xd0] sm:$0xff]
    %v4235 = vld [vmem:[%s4 + $0xd8] sm:$0xff]
    %v4236 = vld [vmem:[%s4 + $0xe0] sm:$0xff]
    %v4237 = vld [vmem:[%s4 + $0xe8] sm:$0xff]
    %v4238 = vld [vmem:[%s4 + $0xf0] sm:$0xff]
    %v4239 = vld [vmem:[%s4 + $0xf8] sm:$0xff]
    %v4240 = vld [vmem:[%s5] sm:$0x3]
    %v4242 = vperm.slane %v4240, 0
    %v4243 = vperm.slane %v4240, 1
    %v4278 = vunpack.c.l.b16 %v4208
    %v4279 = vunpack.c.h.b16 %v4208
    %v4280 = vunpack.c.l.b16 %v4209
    %v4281 = vunpack.c.h.b16 %v4209
    %v4282 = vunpack.c.l.b16 %v4210
    %v4283 = vunpack.c.h.b16 %v4210
    %v4284 = vunpack.c.l.b16 %v4211
    %v4285 = vunpack.c.h.b16 %v4211
    %v4286 = vunpack.c.l.b16 %v4212
    %v4287 = vunpack.c.h.b16 %v4212
    %v4288 = vunpack.c.l.b16 %v4213
    %v4289 = vunpack.c.h.b16 %v4213
    %v4290 = vunpack.c.l.b16 %v4214
    %v4291 = vunpack.c.h.b16 %v4214
    %v4292 = vunpack.c.l.b16 %v4215
    %v4293 = vunpack.c.h.b16 %v4215
    %v4294 = vunpack.c.l.b16 %v4216
    %v4295 = vunpack.c.h.b16 %v4216
    %v4296 = vunpack.c.l.b16 %v4217
    %v4297 = vunpack.c.h.b16 %v4217
    %v4298 = vunpack.c.l.b16 %v4218
    %v4299 = vunpack.c.h.b16 %v4218
    %v4300 = vunpack.c.l.b16 %v4219
    %v4301 = vunpack.c.h.b16 %v4219
    %v4302 = vunpack.c.l.b16 %v4220
    %v4303 = vunpack.c.h.b16 %v4220
    %v4304 = vunpack.c.l.b16 %v4221
    %v4305 = vunpack.c.h.b16 %v4221
    %v4306 = vunpack.c.l.b16 %v4222
    %v4307 = vunpack.c.h.b16 %v4222
    %v4308 = vunpack.c.l.b16 %v4223
    %v4309 = vunpack.c.h.b16 %v4223
    %v4310 = vunpack.c.l.b16 %v4224
    %v4311 = vunpack.c.h.b16 %v4224
    %v4312 = vunpack.c.l.b16 %v4225
    %v4313 = vunpack.c.h.b16 %v4225
    %v4314 = vunpack.c.l.b16 %v4226
    %v4315 = vunpack.c.h.b16 %v4226
    %v4316 = vunpack.c.l.b16 %v4227
    %v4317 = vunpack.c.h.b16 %v4227
    %v4318 = vunpack.c.l.b16 %v4228
    %v4319 = vunpack.c.h.b16 %v4228
    %v4320 = vunpack.c.l.b16 %v4229
    %v4321 = vunpack.c.h.b16 %v4229
    %v4322 = vunpack.c.l.b16 %v4230
    %v4323 = vunpack.c.h.b16 %v4230
    %v4324 = vunpack.c.l.b16 %v4231
    %v4325 = vunpack.c.h.b16 %v4231
    %v4326 = vunpack.c.l.b16 %v4232
    %v4327 = vunpack.c.h.b16 %v4232
    %v4328 = vunpack.c.l.b16 %v4233
    %v4329 = vunpack.c.h.b16 %v4233
    %v4330 = vunpack.c.l.b16 %v4234
    %v4331 = vunpack.c.h.b16 %v4234
    %v4332 = vunpack.c.l.b16 %v4235
    %v4333 = vunpack.c.h.b16 %v4235
    %v4334 = vunpack.c.l.b16 %v4236
    %v4335 = vunpack.c.h.b16 %v4236
    %v4336 = vunpack.c.l.b16 %v4237
    %v4337 = vunpack.c.h.b16 %v4237
    %v4338 = vunpack.c.l.b16 %v4238
    %v4339 = vunpack.c.h.b16 %v4238
    %v4340 = vunpack.c.l.b16 %v4239
    %v4341 = vunpack.c.h.b16 %v4239
    %v4342 = vpack.c.b16 %v4280, %v4278
    %v4343 = vpack.c.b16 %v4281, %v4279
    %v4344 = vpack.c.b16 %v4284, %v4282
    %v4345 = vpack.c.b16 %v4285, %v4283
    %v4346 = vpack.c.b16 %v4288, %v4286
    %v4347 = vpack.c.b16 %v4289, %v4287
    %v4348 = vpack.c.b16 %v4292, %v4290
    %v4349 = vpack.c.b16 %v4293, %v4291
    %v4350 = vpack.c.b16 %v4296, %v4294
    %v4351 = vpack.c.b16 %v4297, %v4295
    %v4352 = vpack.c.b16 %v4300, %v4298
    %v4353 = vpack.c.b16 %v4301, %v4299
    %v4354 = vpack.c.b16 %v4304, %v4302
    %v4355 = vpack.c.b16 %v4305, %v4303
    %v4356 = vpack.c.b16 %v4308, %v4306
    %v4357 = vpack.c.b16 %v4309, %v4307
    %v4358 = vpack.c.b16 %v4312, %v4310
    %v4359 = vpack.c.b16 %v4313, %v4311
    %v4360 = vpack.c.b16 %v4316, %v4314
    %v4361 = vpack.c.b16 %v4317, %v4315
    %v4362 = vpack.c.b16 %v4320, %v4318
    %v4363 = vpack.c.b16 %v4321, %v4319
    %v4364 = vpack.c.b16 %v4324, %v4322
    %v4365 = vpack.c.b16 %v4325, %v4323
    %v4366 = vpack.c.b16 %v4328, %v4326
    %v4367 = vpack.c.b16 %v4329, %v4327
    %v4368 = vpack.c.b16 %v4332, %v4330
    %v4369 = vpack.c.b16 %v4333, %v4331
    %v4370 = vpack.c.b16 %v4336, %v4334
    %v4371 = vpack.c.b16 %v4337, %v4335
    %v4372 = vpack.c.b16 %v4340, %v4338
    %v4373 = vpack.c.b16 %v4341, %v4339
    %4406 = vmatpush.bf16.msra.mxu0 %v4356
    %4407 = vmatpush.bf16.msra.mxu0 %v4354
    %4408 = vmatpush.bf16.msra.mxu0 %v4352
    %4409 = vmatpush.bf16.msra.mxu0 %v4350
    %4410 = vmatpush.bf16.msra.mxu0 %v4348
    %4411 = vmatpush.bf16.msra.mxu0 %v4346
    %4412 = vmatpush.bf16.msra.mxu0 %v4344
    %4413 = vmatpush.bf16.msra.mxu0 %v4342
    %4414 = vmatmul.bf16.gmra.mxu0 %v4206
    %v4415 = vpop.f32.mrf.mxu0
    %v4416 = vadd.f32 %v4242, %v4415
    %v4417 = vpop.f32.mrf.mxu0
    %4418 = vdwg.mxu0
    %4419 = vmatpush.bf16.msra.mxu0 %v4372
    %4420 = vmatpush.bf16.msra.mxu0 %v4370
    %4421 = vmatpush.bf16.msra.mxu0 %v4368
    %4422 = vmatpush.bf16.msra.mxu0 %v4366
    %4423 = vmatpush.bf16.msra.mxu0 %v4364
    %4424 = vmatpush.bf16.msra.mxu0 %v4362
    %4425 = vmatpush.bf16.msra.mxu0 %v4360
    %4426 = vmatpush.bf16.msra.mxu0 %v4358
    %4427 = vmatmul.bf16.gmra.mxu0 %v4207
    %v4428 = vpop.f32.mrf.mxu0
    %v4429 = vadd.f32 %v4416, %v4428
    %v4430 = vpop.f32.mrf.mxu0
    %4431 = vdwg.mxu0
    %4432 = vmatpush.bf16.msra.mxu0 %v4357
    %4433 = vmatpush.bf16.msra.mxu0 %v4355
    %4434 = vmatpush.bf16.msra.mxu0 %v4353
    %4435 = vmatpush.bf16.msra.mxu0 %v4351
    %4436 = vmatpush.bf16.msra.mxu0 %v4349
    %4437 = vmatpush.bf16.msra.mxu0 %v4347
    %4438 = vmatpush.bf16.msra.mxu0 %v4345
    %4439 = vmatpush.bf16.msra.mxu0 %v4343
    %4440 = vmatmul.bf16.gmra.mxu0 %v4206
    %v4441 = vpop.f32.mrf.mxu0
    %v4442 = vadd.f32 %v4243, %v4441
    %v4443 = vpop.f32.mrf.mxu0
    %4444 = vdwg.mxu0
    %4445 = vmatpush.bf16.msra.mxu0 %v4373
    %4446 = vmatpush.bf16.msra.mxu0 %v4371
    %4447 = vmatpush.bf16.msra.mxu0 %v4369
    %4448 = vmatpush.bf16.msra.mxu0 %v4367
    %4449 = vmatpush.bf16.msra.mxu0 %v4365
    %4450 = vmatpush.bf16.msra.mxu0 %v4363
    %4451 = vmatpush.bf16.msra.mxu0 %v4361
    %4452 = vmatpush.bf16.msra.mxu0 %v4359
    %4453 = vmatmul.bf16.gmra.mxu0 %v4207
    %v4454 = vpop.f32.mrf.mxu0
    %v4455 = vadd.f32 %v4442, %v4454
    %v4456 = vpop.f32.mrf.mxu0
    %4457 = vdwg.mxu0
    %4458 = vst [vmem:[%s6] sm:$0xff] %v4429
    %4459 = vst [vmem:[%s6 + $0x8] sm:$0xff] %v4455
    // Predicated region
    $region34: #{model_temporal_lstm_forward.1} parent=1 // pred_check
      _
    $region35: #{model_temporal_lstm_forward.1} parent=1 // pred_check_branch
      %4461 = sbr.rel (0) target = $region37
    $region36: #{model_temporal_lstm_forward.1} parent=1 // pred_region
      _
    $region37: #{model_temporal_lstm_forward.1} parent=1 // pred_fallthru
      _
    // Predicated region
    $region38: #{model_temporal_lstm_forward.1} parent=1 // pred_check
      _
    $region39: #{model_temporal_lstm_forward.1} parent=1 // pred_check_branch
      %4463 = sbr.rel (0) target = $region41
    $region40: #{model_temporal_lstm_forward.1} parent=1 // pred_region
      _
    $region41: #{model_temporal_lstm_forward.1} parent=1 // pred_fallthru
      _
    %4464 = vsyncpa [#allocation4], 1
    %4465 = vsyncpa [#allocation6], 1

</llo_original>
